<compile_context>
chip_gen: v5e
topology: v5e:2x2
jax: 0.10.0
libtpu: 0.0.40
codegen_flags: <defaults>
</compile_context>

<pallas_src>
import jax
import jax.numpy as jnp
from jax import lax
from jax.experimental import pallas as pl
from jax.experimental.pallas import tpu as pltpu

KSIZE = 7
PAD = KSIZE // 2


def _round_up(v, m):
    return ((v + m - 1) // m) * m


def _make_kernel(C, TC, H, W):
    K = KSIZE

    def kernel(x_ref, t_ref, o_ref, csum_ref, cmax_ref, pad_ref):
        # x_ref : (1, TC, H, W)      one image's channel tile, input dtype
        # t_ref : (2*K, Wp, Wp)      banded Toeplitz conv operands, f32
        # o_ref : (1, H, Wp)         lane-dense output slab
        # csum_ref: (H, W) f32       running channel sum   (persists over k)
        # cmax_ref: (H, W) x.dtype   running channel max   (persists over k)
        # pad_ref : (2, H+2*PAD, Wp) row-padded avg/max planes for the conv
        k = pl.program_id(1)

        # ---- channel reduction over this C-tile: fused sum + max ----------
        # Two independent accumulation chains so issue is not serialized on a
        # single add/max dependency chain; max stays in the input dtype.
        c0 = x_ref[0, 0]
        s0 = c0.astype(jnp.float32)
        m0 = c0
        if TC > 1:
            c1 = x_ref[0, 1]
            s1 = c1.astype(jnp.float32)
            m1 = c1
            for c in range(2, TC - 1, 2):
                ca = x_ref[0, c]
                cb = x_ref[0, c + 1]
                s0 = s0 + ca.astype(jnp.float32)
                m0 = jnp.maximum(m0, ca)
                s1 = s1 + cb.astype(jnp.float32)
                m1 = jnp.maximum(m1, cb)
            if TC % 2:
                ct = x_ref[0, TC - 1]
                s0 = s0 + ct.astype(jnp.float32)
                m0 = jnp.maximum(m0, ct)
            tile_sum = s0 + s1
            tile_max = jnp.maximum(m0, m1)
        else:
            tile_sum = s0
            tile_max = m0

        @pl.when(k == 0)
        def _init():
            csum_ref[...] = tile_sum
            cmax_ref[...] = tile_max

        @pl.when(k > 0)
        def _accumulate():
            csum_ref[...] = csum_ref[...] + tile_sum
            cmax_ref[...] = jnp.maximum(cmax_ref[...], tile_max)

        # ---- last C-tile: 7x7 conv (2 in-ch -> 1 out-ch) + sigmoid ---------
        @pl.when(k == pl.num_programs(1) - 1)
        def _finalize():
            mean = csum_ref[...] * jnp.float32(1.0 / C)   # exact mean in f32
            mx = cmax_ref[...].astype(jnp.float32)        # single cast of max

            # Row-padded feature planes (dy halo only; the dx halo is encoded
            # in the Toeplitz operand).  Zero once, then place the features.
            pad_ref[...] = jnp.zeros_like(pad_ref)
            pad_ref[0, PAD:PAD + H, :W] = mean
            pad_ref[1, PAD:PAD + H, :W] = mx

            # dx taps -> banded-Toeplitz matmuls on the MXU; dy taps -> 7
            # sublane-shifted row slabs per conv input channel.  Two
            # independent accumulator chains, each seeded by its first tap.
            def tap(c, dy):
                return jnp.dot(pad_ref[c, dy:dy + H, :], t_ref[c * K + dy],
                               precision=lax.Precision.HIGHEST,
                               preferred_element_type=jnp.float32)

            acc0 = tap(0, 0)
            acc1 = tap(1, 0)
            for dy in range(1, K):
                acc0 = acc0 + tap(0, dy)
                acc1 = acc1 + tap(1, dy)

            # Full-width lane-dense store; junk columns >= W are sliced off in
            # the wrapper (Toeplitz columns >= W are all-zero, so they never
            # contaminate the valid columns).
            o_ref[0] = jax.nn.sigmoid(acc0 + acc1).astype(o_ref.dtype)

    return kernel


def spatial_attention(x, conv_weight):
    """x: (N, C, H, W) any float dtype. conv_weight: (1, 2, 7, 7), no bias.
    Returns (N, 1, H, W) in x.dtype."""
    N, C, H, W = x.shape
    K = KSIZE
    assert conv_weight.shape == (1, 2, K, K), conv_weight.shape

    Wp = _round_up(W, 128)          # lane-dense conv / output width
    Hh = H + 2 * PAD                # row-padded feature height
    assert Wp >= W and Hh == H + 2 * PAD

    # Channel tile: largest divisor of C whose VMEM block (with (8,128)
    # physical padding) stays within a small per-buffer budget and whose
    # unroll length is bounded -- the C-tile grid axis covers the rest.
    itemsize = jnp.dtype(x.dtype).itemsize
    plane_bytes = _round_up(H, 8) * _round_up(W, 128) * itemsize
    budget = 2 * 1024 * 1024
    cap = max(1, min(64, budget // plane_bytes))
    TC = 1
    for t in range(min(C, cap), 0, -1):
        if C % t == 0:
            TC = t
            break
    KC = C // TC
    assert TC * KC == C

    # Banded Toeplitz operands for the dx taps (built once, tiny).
    #   T[c*K+dy, i, j] = w[c, dy, i - j + PAD] if the tap is in range and
    #   both i (input col) and j (output col) are < W, else 0.  This encodes
    #   the zero padding of the conv along dx, so the kernel needs no dx halo.
    w2 = conv_weight[0].astype(jnp.float32)                 # (2, K, K)
    i = jnp.arange(Wp)[:, None]
    j = jnp.arange(Wp)[None, :]
    dx = i - j + PAD
    band = (dx >= 0) & (dx < K) & (i < W) & (j < W)
    toep = jnp.where(band[None, None], w2[:, :, jnp.clip(dx, 0, K - 1)], 0.0)
    toep = toep.reshape(2 * K, Wp, Wp)                      # (14, Wp, Wp) f32

    # Note (v7x): with N == 1 the single "parallel" step leaves one TensorCore
    # idle; an extra H-tiling parallel axis would recover it.  N >= 2 here.
    # Note (v5e): pipeline_mode=pl.Buffered(3) on the x BlockSpec is a
    # candidate once per-step compute is short; keep default 2 until swept.
    out_packed = pl.pallas_call(
        _make_kernel(C, TC, H, W),
        out_shape=jax.ShapeDtypeStruct((N, H, Wp), x.dtype),
        grid=(N, KC),
        in_specs=[
            pl.BlockSpec((1, TC, H, W), lambda n, k: (n, k, 0, 0)),
            pl.BlockSpec((2 * K, Wp, Wp), lambda n, k: (0, 0, 0)),
        ],
        out_specs=pl.BlockSpec((1, H, Wp), lambda n, k: (n, 0, 0)),
        scratch_shapes=[
            pltpu.VMEM((H, W), jnp.float32),        # running channel sum
            pltpu.VMEM((H, W), x.dtype),            # running channel max
            pltpu.VMEM((2, Hh, Wp), jnp.float32),   # row-padded avg/max planes
        ],
        compiler_params=pltpu.CompilerParams(
            dimension_semantics=("parallel", "arbitrary"),
            vmem_limit_bytes=32 * 1024 * 1024),
    )(x, toep)

    # (N, H, Wp) -> (N, 1, H, W): drop the lane-padding columns.
    return out_packed[:, :, :W][:, None, :, :]


def spatial_attention_ref(x, conv_weight):
    """Pure-JAX reference (mirrors the PyTorch forward)."""
    avg = jnp.mean(x, axis=1, keepdims=True)
    mx = jnp.max(x, axis=1, keepdims=True)
    feat = jnp.concatenate([avg, mx], axis=1)
    out = lax.conv_general_dilated(
        feat, conv_weight, window_strides=(1, 1),
        padding=((PAD, PAD), (PAD, PAD)),
        dimension_numbers=("NCHW", "OIHW", "NCHW"),
        precision=lax.Precision.HIGHEST)
    return jax.nn.sigmoid(out)


if __name__ == "__main__":
    key = jax.random.PRNGKey(0)
    kx, kw = jax.random.split(key)

    N, C, H, W = 2, 4, 16, 16
    x = jax.random.normal(kx, (N, C, H, W), dtype=jnp.float32)

    # Conv2d(2, 1, 7, bias=False) -> weight (1, 2, 7, 7), uniform(-b, b) init.
    fan_in = 2 * KSIZE * KSIZE
    bound = 1.0 / (fan_in ** 0.5)
    conv_weight = jax.random.uniform(
        kw, (1, 2, KSIZE, KSIZE), dtype=jnp.float32, minval=-bound, maxval=bound)

    sa = jax.jit(spatial_attention)
    out = jax.block_until_ready(sa(x, conv_weight))
    ref = jax.block_until_ready(spatial_attention_ref(x, conv_weight))

    assert out.shape == (N, 1, H, W), out.shape
    err = float(jnp.max(jnp.abs(out - ref)))
    assert jnp.allclose(out, ref, atol=1e-5, rtol=1e-5), err

    print("KERNEL_OK")
</pallas_src>

<mosaic_0001>
module attributes {stable_mosaic.version = 11 : i64} {
  func.func @kernel(%arg0: i32, %arg1: i32, %arg2: memref<1x4x16x16xf32, #tpu.memory_space<vmem>>, %arg3: memref<14x128x128xf32, #tpu.memory_space<vmem>>, %arg4: memref<1x16x128xf32, #tpu.memory_space<vmem>>, %arg5: memref<16x16xf32, #tpu.memory_space<vmem>>, %arg6: memref<16x16xf32, #tpu.memory_space<vmem>>, %arg7: memref<2x22x128xf32, #tpu.memory_space<vmem>>) attributes {dimension_semantics = [#tpu.dimension_semantics<parallel>, #tpu.dimension_semantics<arbitrary>], iteration_bounds = array<i64: 2, 1>, scalar_prefetch = 0 : i64, scratch_operands = 3 : i64, tpu.core_type = #tpu.core_type<tc>, window_params = [{transform_indices = @transform_0, window_bounds = array<i64: 1, 4, 16, 16>}, {pipeline_mode = #tpu.pipeline_mode<synchronous>, transform_indices = @transform_1, window_bounds = array<i64: 14, 128, 128>}, {transform_indices = @transform_2, window_bounds = array<i64: 1, 16, 128>}]} {
    %c0 = arith.constant 0 : index
    %c0_0 = arith.constant 0 : index
    %c0_1 = arith.constant 0 : index
    %c0_2 = arith.constant 0 : index
    %0 = vector.load %arg2[%c0, %c0_0, %c0_1, %c0_2] : memref<1x4x16x16xf32, #tpu.memory_space<vmem>>, vector<1x1x16x16xf32>
    %1 = vector.shape_cast %0 : vector<1x1x16x16xf32> to vector<16x16xf32>
    %c0_3 = arith.constant 0 : index
    %c1 = arith.constant 1 : index
    %c0_4 = arith.constant 0 : index
    %c0_5 = arith.constant 0 : index
    %2 = vector.load %arg2[%c0_3, %c1, %c0_4, %c0_5] : memref<1x4x16x16xf32, #tpu.memory_space<vmem>>, vector<1x1x16x16xf32>
    %3 = vector.shape_cast %2 : vector<1x1x16x16xf32> to vector<16x16xf32>
    %c0_6 = arith.constant 0 : index
    %c2 = arith.constant 2 : index
    %c0_7 = arith.constant 0 : index
    %c0_8 = arith.constant 0 : index
    %4 = vector.load %arg2[%c0_6, %c2, %c0_7, %c0_8] : memref<1x4x16x16xf32, #tpu.memory_space<vmem>>, vector<1x1x16x16xf32>
    %5 = vector.shape_cast %4 : vector<1x1x16x16xf32> to vector<16x16xf32>
    %c0_9 = arith.constant 0 : index
    %c3 = arith.constant 3 : index
    %c0_10 = arith.constant 0 : index
    %c0_11 = arith.constant 0 : index
    %6 = vector.load %arg2[%c0_9, %c3, %c0_10, %c0_11] : memref<1x4x16x16xf32, #tpu.memory_space<vmem>>, vector<1x1x16x16xf32>
    %7 = vector.shape_cast %6 : vector<1x1x16x16xf32> to vector<16x16xf32>
    %8 = arith.addf %1, %5 : vector<16x16xf32>
    %9 = arith.maximumf %1, %5 : vector<16x16xf32>
    %10 = arith.addf %3, %7 : vector<16x16xf32>
    %11 = arith.maximumf %3, %7 : vector<16x16xf32>
    %12 = arith.addf %8, %10 : vector<16x16xf32>
    %13 = arith.maximumf %9, %11 : vector<16x16xf32>
    %c0_i32 = arith.constant 0 : i32
    %14 = arith.cmpi eq, %arg1, %c0_i32 : i32
    %15 = arith.extui %14 : i1 to i32
    %c0_i32_12 = arith.constant 0 : i32
    %16 = arith.cmpi ne, %15, %c0_i32_12 : i32
    scf.if %16 {
      %c0_17 = arith.constant 0 : index
      %c0_18 = arith.constant 0 : index
      %23 = vector.load %arg5[%c0_17, %c0_18] : memref<16x16xf32, #tpu.memory_space<vmem>>, vector<16x16xf32>
      tpu.vector_store %arg5[%c0_17, %c0_18], %12 {strides = array<i32>} : memref<16x16xf32, #tpu.memory_space<vmem>>, vector<16x16xf32>,
      %c0_19 = arith.constant 0 : index
      %c0_20 = arith.constant 0 : index
      %24 = vector.load %arg6[%c0_19, %c0_20] : memref<16x16xf32, #tpu.memory_space<vmem>>, vector<16x16xf32>
      tpu.vector_store %arg6[%c0_19, %c0_20], %13 {strides = array<i32>} : memref<16x16xf32, #tpu.memory_space<vmem>>, vector<16x16xf32>,
    } else {
    }
    %c0_i32_13 = arith.constant 0 : i32
    %17 = arith.cmpi sgt, %arg1, %c0_i32_13 : i32
    %18 = arith.extui %17 : i1 to i32
    %c0_i32_14 = arith.constant 0 : i32
    %19 = arith.cmpi ne, %18, %c0_i32_14 : i32
    scf.if %19 {
      %c0_17 = arith.constant 0 : index
      %c0_18 = arith.constant 0 : index
      %23 = vector.load %arg5[%c0_17, %c0_18] : memref<16x16xf32, #tpu.memory_space<vmem>>, vector<16x16xf32>
      %24 = arith.addf %23, %12 : vector<16x16xf32>
      %c0_19 = arith.constant 0 : index
      %c0_20 = arith.constant 0 : index
      %25 = vector.load %arg5[%c0_19, %c0_20] : memref<16x16xf32, #tpu.memory_space<vmem>>, vector<16x16xf32>
      tpu.vector_store %arg5[%c0_19, %c0_20], %24 {strides = array<i32>} : memref<16x16xf32, #tpu.memory_space<vmem>>, vector<16x16xf32>,
      %c0_21 = arith.constant 0 : index
      %c0_22 = arith.constant 0 : index
      %26 = vector.load %arg6[%c0_21, %c0_22] : memref<16x16xf32, #tpu.memory_space<vmem>>, vector<16x16xf32>
      %27 = arith.maximumf %26, %13 : vector<16x16xf32>
      %c0_23 = arith.constant 0 : index
      %c0_24 = arith.constant 0 : index
      %28 = vector.load %arg6[%c0_23, %c0_24] : memref<16x16xf32, #tpu.memory_space<vmem>>, vector<16x16xf32>
      tpu.vector_store %arg6[%c0_23, %c0_24], %27 {strides = array<i32>} : memref<16x16xf32, #tpu.memory_space<vmem>>, vector<16x16xf32>,
    } else {
    }
    %c0_i32_15 = arith.constant 0 : i32
    %20 = arith.cmpi eq, %arg1, %c0_i32_15 : i32
    %21 = arith.extui %20 : i1 to i32
    %c0_i32_16 = arith.constant 0 : i32
    %22 = arith.cmpi ne, %21, %c0_i32_16 : i32
    scf.if %22 {
      %c0_17 = arith.constant 0 : index
      %c0_18 = arith.constant 0 : index
      %23 = vector.load %arg5[%c0_17, %c0_18] : memref<16x16xf32, #tpu.memory_space<vmem>>, vector<16x16xf32>
      %cst = arith.constant 2.500000e-01 : f32
      %24 = vector.broadcast %cst : f32 to vector<16x16xf32>
      %25 = arith.mulf %23, %24 : vector<16x16xf32>
      %c0_19 = arith.constant 0 : index
      %c0_20 = arith.constant 0 : index
      %26 = vector.load %arg6[%c0_19, %c0_20] : memref<16x16xf32, #tpu.memory_space<vmem>>, vector<16x16xf32>
      %cst_21 = arith.constant 0.000000e+00 : f32
      %27 = vector.broadcast %cst_21 : f32 to vector<2x22x128xf32>
      %c0_22 = arith.constant 0 : index
      %c0_23 = arith.constant 0 : index
      %c0_24 = arith.constant 0 : index
      %28 = vector.load %arg7[%c0_22, %c0_23, %c0_24] : memref<2x22x128xf32, #tpu.memory_space<vmem>>, vector<2x22x128xf32>
      tpu.vector_store %arg7[%c0_22, %c0_23, %c0_24], %27 {strides = array<i32>} : memref<2x22x128xf32, #tpu.memory_space<vmem>>, vector<2x22x128xf32>,
      %c0_25 = arith.constant 0 : index
      %c3_26 = arith.constant 3 : index
      %c0_27 = arith.constant 0 : index
      %29 = vector.load %arg7[%c0_25, %c3_26, %c0_27] : memref<2x22x128xf32, #tpu.memory_space<vmem>>, vector<1x16x16xf32>
      %30 = vector.shape_cast %29 : vector<1x16x16xf32> to vector<16x16xf32>
      %31 = vector.shape_cast %25 : vector<16x16xf32> to vector<1x16x16xf32>
      tpu.vector_store %arg7[%c0_25, %c3_26, %c0_27], %31 {strides = array<i32>} : memref<2x22x128xf32, #tpu.memory_space<vmem>>, vector<1x16x16xf32>,
      %c1_28 = arith.constant 1 : index
      %c3_29 = arith.constant 3 : index
      %c0_30 = arith.constant 0 : index
      %32 = vector.load %arg7[%c1_28, %c3_29, %c0_30] : memref<2x22x128xf32, #tpu.memory_space<vmem>>, vector<1x16x16xf32>
      %33 = vector.shape_cast %32 : vector<1x16x16xf32> to vector<16x16xf32>
      %34 = vector.shape_cast %26 : vector<16x16xf32> to vector<1x16x16xf32>
      tpu.vector_store %arg7[%c1_28, %c3_29, %c0_30], %34 {strides = array<i32>} : memref<2x22x128xf32, #tpu.memory_space<vmem>>, vector<1x16x16xf32>,
      %c0_31 = arith.constant 0 : index
      %c0_32 = arith.constant 0 : index
      %c0_33 = arith.constant 0 : index
      %35 = vector.load %arg7[%c0_31, %c0_32, %c0_33] : memref<2x22x128xf32, #tpu.memory_space<vmem>>, vector<1x16x128xf32>
      %36 = vector.shape_cast %35 : vector<1x16x128xf32> to vector<16x128xf32>
      %c0_34 = arith.constant 0 : index
      %c0_35 = arith.constant 0 : index
      %c0_36 = arith.constant 0 : index
      %37 = vector.load %arg3[%c0_34, %c0_35, %c0_36] : memref<14x128x128xf32, #tpu.memory_space<vmem>>, vector<1x128x128xf32>
      %38 = vector.shape_cast %37 : vector<1x128x128xf32> to vector<128x128xf32>
      %cst_37 = arith.constant dense<0.000000e+00> : vector<16x128xf32>
      %39 = tpu.matmul %36, %38, %cst_37 {dimension_numbers = #tpu.dot_dimension_numbers<[1], [0], [0], [1], [0, 0, 1, 1], [], []>, precision = #tpu.contract_precision<fp32>} : vector<16x128xf32>, vector<128x128xf32>, vector<16x128xf32> -> vector<16x128xf32>
      %c1_38 = arith.constant 1 : index
      %c0_39 = arith.constant 0 : index
      %c0_40 = arith.constant 0 : index
      %40 = vector.load %arg7[%c1_38, %c0_39, %c0_40] : memref<2x22x128xf32, #tpu.memory_space<vmem>>, vector<1x16x128xf32>
      %41 = vector.shape_cast %40 : vector<1x16x128xf32> to vector<16x128xf32>
      %c7 = arith.constant 7 : index
      %c0_41 = arith.constant 0 : index
      %c0_42 = arith.constant 0 : index
      %42 = vector.load %arg3[%c7, %c0_41, %c0_42] : memref<14x128x128xf32, #tpu.memory_space<vmem>>, vector<1x128x128xf32>
      %43 = vector.shape_cast %42 : vector<1x128x128xf32> to vector<128x128xf32>
      %cst_43 = arith.constant dense<0.000000e+00> : vector<16x128xf32>
      %44 = tpu.matmul %41, %43, %cst_43 {dimension_numbers = #tpu.dot_dimension_numbers<[1], [0], [0], [1], [0, 0, 1, 1], [], []>, precision = #tpu.contract_precision<fp32>} : vector<16x128xf32>, vector<128x128xf32>, vector<16x128xf32> -> vector<16x128xf32>
      %c0_44 = arith.constant 0 : index
      %c1_45 = arith.constant 1 : index
      %c0_46 = arith.constant 0 : index
      %45 = vector.load %arg7[%c0_44, %c1_45, %c0_46] : memref<2x22x128xf32, #tpu.memory_space<vmem>>, vector<1x16x128xf32>
      %46 = vector.shape_cast %45 : vector<1x16x128xf32> to vector<16x128xf32>
      %c1_47 = arith.constant 1 : index
      %c0_48 = arith.constant 0 : index
      %c0_49 = arith.constant 0 : index
      %47 = vector.load %arg3[%c1_47, %c0_48, %c0_49] : memref<14x128x128xf32, #tpu.memory_space<vmem>>, vector<1x128x128xf32>
      %48 = vector.shape_cast %47 : vector<1x128x128xf32> to vector<128x128xf32>
      %cst_50 = arith.constant dense<0.000000e+00> : vector<16x128xf32>
      %49 = tpu.matmul %46, %48, %cst_50 {dimension_numbers = #tpu.dot_dimension_numbers<[1], [0], [0], [1], [0, 0, 1, 1], [], []>, precision = #tpu.contract_precision<fp32>} : vector<16x128xf32>, vector<128x128xf32>, vector<16x128xf32> -> vector<16x128xf32>
      %50 = arith.addf %39, %49 : vector<16x128xf32>
      %c1_51 = arith.constant 1 : index
      %c1_52 = arith.constant 1 : index
      %c0_53 = arith.constant 0 : index
      %51 = vector.load %arg7[%c1_51, %c1_52, %c0_53] : memref<2x22x128xf32, #tpu.memory_space<vmem>>, vector<1x16x128xf32>
      %52 = vector.shape_cast %51 : vector<1x16x128xf32> to vector<16x128xf32>
      %c8 = arith.constant 8 : index
      %c0_54 = arith.constant 0 : index
      %c0_55 = arith.constant 0 : index
      %53 = vector.load %arg3[%c8, %c0_54, %c0_55] : memref<14x128x128xf32, #tpu.memory_space<vmem>>, vector<1x128x128xf32>
      %54 = vector.shape_cast %53 : vector<1x128x128xf32> to vector<128x128xf32>
      %cst_56 = arith.constant dense<0.000000e+00> : vector<16x128xf32>
      %55 = tpu.matmul %52, %54, %cst_56 {dimension_numbers = #tpu.dot_dimension_numbers<[1], [0], [0], [1], [0, 0, 1, 1], [], []>, precision = #tpu.contract_precision<fp32>} : vector<16x128xf32>, vector<128x128xf32>, vector<16x128xf32> -> vector<16x128xf32>
      %56 = arith.addf %44, %55 : vector<16x128xf32>
      %c0_57 = arith.constant 0 : index
      %c2_58 = arith.constant 2 : index
      %c0_59 = arith.constant 0 : index
      %57 = vector.load %arg7[%c0_57, %c2_58, %c0_59] : memref<2x22x128xf32, #tpu.memory_space<vmem>>, vector<1x16x128xf32>
      %58 = vector.shape_cast %57 : vector<1x16x128xf32> to vector<16x128xf32>
      %c2_60 = arith.constant 2 : index
      %c0_61 = arith.constant 0 : index
      %c0_62 = arith.constant 0 : index
      %59 = vector.load %arg3[%c2_60, %c0_61, %c0_62] : memref<14x128x128xf32, #tpu.memory_space<vmem>>, vector<1x128x128xf32>
      %60 = vector.shape_cast %59 : vector<1x128x128xf32> to vector<128x128xf32>
      %cst_63 = arith.constant dense<0.000000e+00> : vector<16x128xf32>
      %61 = tpu.matmul %58, %60, %cst_63 {dimension_numbers = #tpu.dot_dimension_numbers<[1], [0], [0], [1], [0, 0, 1, 1], [], []>, precision = #tpu.contract_precision<fp32>} : vector<16x128xf32>, vector<128x128xf32>, vector<16x128xf32> -> vector<16x128xf32>
      %62 = arith.addf %50, %61 : vector<16x128xf32>
      %c1_64 = arith.constant 1 : index
      %c2_65 = arith.constant 2 : index
      %c0_66 = arith.constant 0 : index
      %63 = vector.load %arg7[%c1_64, %c2_65, %c0_66] : memref<2x22x128xf32, #tpu.memory_space<vmem>>, vector<1x16x128xf32>
      %64 = vector.shape_cast %63 : vector<1x16x128xf32> to vector<16x128xf32>
      %c9 = arith.constant 9 : index
      %c0_67 = arith.constant 0 : index
      %c0_68 = arith.constant 0 : index
      %65 = vector.load %arg3[%c9, %c0_67, %c0_68] : memref<14x128x128xf32, #tpu.memory_space<vmem>>, vector<1x128x128xf32>
      %66 = vector.shape_cast %65 : vector<1x128x128xf32> to vector<128x128xf32>
      %cst_69 = arith.constant dense<0.000000e+00> : vector<16x128xf32>
      %67 = tpu.matmul %64, %66, %cst_69 {dimension_numbers = #tpu.dot_dimension_numbers<[1], [0], [0], [1], [0, 0, 1, 1], [], []>, precision = #tpu.contract_precision<fp32>} : vector<16x128xf32>, vector<128x128xf32>, vector<16x128xf32> -> vector<16x128xf32>
      %68 = arith.addf %56, %67 : vector<16x128xf32>
      %c0_70 = arith.constant 0 : index
      %c3_71 = arith.constant 3 : index
      %c0_72 = arith.constant 0 : index
      %69 = vector.load %arg7[%c0_70, %c3_71, %c0_72] : memref<2x22x128xf32, #tpu.memory_space<vmem>>, vector<1x16x128xf32>
      %70 = vector.shape_cast %69 : vector<1x16x128xf32> to vector<16x128xf32>
      %c3_73 = arith.constant 3 : index
      %c0_74 = arith.constant 0 : index
      %c0_75 = arith.constant 0 : index
      %71 = vector.load %arg3[%c3_73, %c0_74, %c0_75] : memref<14x128x128xf32, #tpu.memory_space<vmem>>, vector<1x128x128xf32>
      %72 = vector.shape_cast %71 : vector<1x128x128xf32> to vector<128x128xf32>
      %cst_76 = arith.constant dense<0.000000e+00> : vector<16x128xf32>
      %73 = tpu.matmul %70, %72, %cst_76 {dimension_numbers = #tpu.dot_dimension_numbers<[1], [0], [0], [1], [0, 0, 1, 1], [], []>, precision = #tpu.contract_precision<fp32>} : vector<16x128xf32>, vector<128x128xf32>, vector<16x128xf32> -> vector<16x128xf32>
      %74 = arith.addf %62, %73 : vector<16x128xf32>
      %c1_77 = arith.constant 1 : index
      %c3_78 = arith.constant 3 : index
      %c0_79 = arith.constant 0 : index
      %75 = vector.load %arg7[%c1_77, %c3_78, %c0_79] : memref<2x22x128xf32, #tpu.memory_space<vmem>>, vector<1x16x128xf32>
      %76 = vector.shape_cast %75 : vector<1x16x128xf32> to vector<16x128xf32>
      %c10 = arith.constant 10 : index
      %c0_80 = arith.constant 0 : index
      %c0_81 = arith.constant 0 : index
      %77 = vector.load %arg3[%c10, %c0_80, %c0_81] : memref<14x128x128xf32, #tpu.memory_space<vmem>>, vector<1x128x128xf32>
      %78 = vector.shape_cast %77 : vector<1x128x128xf32> to vector<128x128xf32>
      %cst_82 = arith.constant dense<0.000000e+00> : vector<16x128xf32>
      %79 = tpu.matmul %76, %78, %cst_82 {dimension_numbers = #tpu.dot_dimension_numbers<[1], [0], [0], [1], [0, 0, 1, 1], [], []>, precision = #tpu.contract_precision<fp32>} : vector<16x128xf32>, vector<128x128xf32>, vector<16x128xf32> -> vector<16x128xf32>
      %80 = arith.addf %68, %79 : vector<16x128xf32>
      %c0_83 = arith.constant 0 : index
      %c4 = arith.constant 4 : index
      %c0_84 = arith.constant 0 : index
      %81 = vector.load %arg7[%c0_83, %c4, %c0_84] : memref<2x22x128xf32, #tpu.memory_space<vmem>>, vector<1x16x128xf32>
      %82 = vector.shape_cast %81 : vector<1x16x128xf32> to vector<16x128xf32>
      %c4_85 = arith.constant 4 : index
      %c0_86 = arith.constant 0 : index
      %c0_87 = arith.constant 0 : index
      %83 = vector.load %arg3[%c4_85, %c0_86, %c0_87] : memref<14x128x128xf32, #tpu.memory_space<vmem>>, vector<1x128x128xf32>
      %84 = vector.shape_cast %83 : vector<1x128x128xf32> to vector<128x128xf32>
      %cst_88 = arith.constant dense<0.000000e+00> : vector<16x128xf32>
      %85 = tpu.matmul %82, %84, %cst_88 {dimension_numbers = #tpu.dot_dimension_numbers<[1], [0], [0], [1], [0, 0, 1, 1], [], []>, precision = #tpu.contract_precision<fp32>} : vector<16x128xf32>, vector<128x128xf32>, vector<16x128xf32> -> vector<16x128xf32>
      %86 = arith.addf %74, %85 : vector<16x128xf32>
      %c1_89 = arith.constant 1 : index
      %c4_90 = arith.constant 4 : index
      %c0_91 = arith.constant 0 : index
      %87 = vector.load %arg7[%c1_89, %c4_90, %c0_91] : memref<2x22x128xf32, #tpu.memory_space<vmem>>, vector<1x16x128xf32>
      %88 = vector.shape_cast %87 : vector<1x16x128xf32> to vector<16x128xf32>
      %c11 = arith.constant 11 : index
      %c0_92 = arith.constant 0 : index
      %c0_93 = arith.constant 0 : index
      %89 = vector.load %arg3[%c11, %c0_92, %c0_93] : memref<14x128x128xf32, #tpu.memory_space<vmem>>, vector<1x128x128xf32>
      %90 = vector.shape_cast %89 : vector<1x128x128xf32> to vector<128x128xf32>
      %cst_94 = arith.constant dense<0.000000e+00> : vector<16x128xf32>
      %91 = tpu.matmul %88, %90, %cst_94 {dimension_numbers = #tpu.dot_dimension_numbers<[1], [0], [0], [1], [0, 0, 1, 1], [], []>, precision = #tpu.contract_precision<fp32>} : vector<16x128xf32>, vector<128x128xf32>, vector<16x128xf32> -> vector<16x128xf32>
      %92 = arith.addf %80, %91 : vector<16x128xf32>
      %c0_95 = arith.constant 0 : index
      %c5 = arith.constant 5 : index
      %c0_96 = arith.constant 0 : index
      %93 = vector.load %arg7[%c0_95, %c5, %c0_96] : memref<2x22x128xf32, #tpu.memory_space<vmem>>, vector<1x16x128xf32>
      %94 = vector.shape_cast %93 : vector<1x16x128xf32> to vector<16x128xf32>
      %c5_97 = arith.constant 5 : index
      %c0_98 = arith.constant 0 : index
      %c0_99 = arith.constant 0 : index
      %95 = vector.load %arg3[%c5_97, %c0_98, %c0_99] : memref<14x128x128xf32, #tpu.memory_space<vmem>>, vector<1x128x128xf32>
      %96 = vector.shape_cast %95 : vector<1x128x128xf32> to vector<128x128xf32>
      %cst_100 = arith.constant dense<0.000000e+00> : vector<16x128xf32>
      %97 = tpu.matmul %94, %96, %cst_100 {dimension_numbers = #tpu.dot_dimension_numbers<[1], [0], [0], [1], [0, 0, 1, 1], [], []>, precision = #tpu.contract_precision<fp32>} : vector<16x128xf32>, vector<128x128xf32>, vector<16x128xf32> -> vector<16x128xf32>
      %98 = arith.addf %86, %97 : vector<16x128xf32>
      %c1_101 = arith.constant 1 : index
      %c5_102 = arith.constant 5 : index
      %c0_103 = arith.constant 0 : index
      %99 = vector.load %arg7[%c1_101, %c5_102, %c0_103] : memref<2x22x128xf32, #tpu.memory_space<vmem>>, vector<1x16x128xf32>
      %100 = vector.shape_cast %99 : vector<1x16x128xf32> to vector<16x128xf32>
      %c12 = arith.constant 12 : index
      %c0_104 = arith.constant 0 : index
      %c0_105 = arith.constant 0 : index
      %101 = vector.load %arg3[%c12, %c0_104, %c0_105] : memref<14x128x128xf32, #tpu.memory_space<vmem>>, vector<1x128x128xf32>
      %102 = vector.shape_cast %101 : vector<1x128x128xf32> to vector<128x128xf32>
      %cst_106 = arith.constant dense<0.000000e+00> : vector<16x128xf32>
      %103 = tpu.matmul %100, %102, %cst_106 {dimension_numbers = #tpu.dot_dimension_numbers<[1], [0], [0], [1], [0, 0, 1, 1], [], []>, precision = #tpu.contract_precision<fp32>} : vector<16x128xf32>, vector<128x128xf32>, vector<16x128xf32> -> vector<16x128xf32>
      %104 = arith.addf %92, %103 : vector<16x128xf32>
      %c0_107 = arith.constant 0 : index
      %c6 = arith.constant 6 : index
      %c0_108 = arith.constant 0 : index
      %105 = vector.load %arg7[%c0_107, %c6, %c0_108] : memref<2x22x128xf32, #tpu.memory_space<vmem>>, vector<1x16x128xf32>
      %106 = vector.shape_cast %105 : vector<1x16x128xf32> to vector<16x128xf32>
      %c6_109 = arith.constant 6 : index
      %c0_110 = arith.constant 0 : index
      %c0_111 = arith.constant 0 : index
      %107 = vector.load %arg3[%c6_109, %c0_110, %c0_111] : memref<14x128x128xf32, #tpu.memory_space<vmem>>, vector<1x128x128xf32>
      %108 = vector.shape_cast %107 : vector<1x128x128xf32> to vector<128x128xf32>
      %cst_112 = arith.constant dense<0.000000e+00> : vector<16x128xf32>
      %109 = tpu.matmul %106, %108, %cst_112 {dimension_numbers = #tpu.dot_dimension_numbers<[1], [0], [0], [1], [0, 0, 1, 1], [], []>, precision = #tpu.contract_precision<fp32>} : vector<16x128xf32>, vector<128x128xf32>, vector<16x128xf32> -> vector<16x128xf32>
      %110 = arith.addf %98, %109 : vector<16x128xf32>
      %c1_113 = arith.constant 1 : index
      %c6_114 = arith.constant 6 : index
      %c0_115 = arith.constant 0 : index
      %111 = vector.load %arg7[%c1_113, %c6_114, %c0_115] : memref<2x22x128xf32, #tpu.memory_space<vmem>>, vector<1x16x128xf32>
      %112 = vector.shape_cast %111 : vector<1x16x128xf32> to vector<16x128xf32>
      %c13 = arith.constant 13 : index
      %c0_116 = arith.constant 0 : index
      %c0_117 = arith.constant 0 : index
      %113 = vector.load %arg3[%c13, %c0_116, %c0_117] : memref<14x128x128xf32, #tpu.memory_space<vmem>>, vector<1x128x128xf32>
      %114 = vector.shape_cast %113 : vector<1x128x128xf32> to vector<128x128xf32>
      %cst_118 = arith.constant dense<0.000000e+00> : vector<16x128xf32>
      %115 = tpu.matmul %112, %114, %cst_118 {dimension_numbers = #tpu.dot_dimension_numbers<[1], [0], [0], [1], [0, 0, 1, 1], [], []>, precision = #tpu.contract_precision<fp32>} : vector<16x128xf32>, vector<128x128xf32>, vector<16x128xf32> -> vector<16x128xf32>
      %116 = arith.addf %104, %115 : vector<16x128xf32>
      %117 = arith.addf %110, %116 : vector<16x128xf32>
      %118 = arith.negf %117 : vector<16x128xf32>
      %119 = math.exp %118 : vector<16x128xf32>
      %cst_119 = arith.constant 1.000000e+00 : f32
      %120 = vector.broadcast %cst_119 : f32 to vector<16x128xf32>
      %121 = arith.addf %120, %119 : vector<16x128xf32>
      %122 = arith.divf %120, %121 : vector<16x128xf32>
      %c0_120 = arith.constant 0 : index
      %c0_121 = arith.constant 0 : index
      %c0_122 = arith.constant 0 : index
      %123 = vector.load %arg4[%c0_120, %c0_121, %c0_122] : memref<1x16x128xf32, #tpu.memory_space<vmem>>, vector<1x16x128xf32>
      %124 = vector.shape_cast %123 : vector<1x16x128xf32> to vector<16x128xf32>
      %125 = vector.shape_cast %122 : vector<16x128xf32> to vector<1x16x128xf32>
      tpu.vector_store %arg4[%c0_120, %c0_121, %c0_122], %125 {strides = array<i32>} : memref<1x16x128xf32, #tpu.memory_space<vmem>>, vector<1x16x128xf32>,
    } else {
    }
    return
  }
  func.func @transform_0(%arg0: i32, %arg1: i32) -> (i32, i32, i32, i32) {
    %c0_i32 = arith.constant 0 : i32
    %c0_i32_0 = arith.constant 0 : i32
    %c0_i32_1 = arith.constant 0 : i32
    return %arg0, %arg1, %c0_i32, %c0_i32_0 : i32, i32, i32, i32
  }
  func.func @transform_1(%arg0: i32, %arg1: i32) -> (i32, i32, i32) {
    %c0_i32 = arith.constant 0 : i32
    %c0_i32_0 = arith.constant 0 : i32
    %c0_i32_1 = arith.constant 0 : i32
    %c0_i32_2 = arith.constant 0 : i32
    return %c0_i32, %c0_i32_0, %c0_i32_1 : i32, i32, i32
  }
  func.func @transform_2(%arg0: i32, %arg1: i32) -> (i32, i32, i32) {
    %c0_i32 = arith.constant 0 : i32
    %c0_i32_0 = arith.constant 0 : i32
    %c0_i32_1 = arith.constant 0 : i32
    return %arg0, %c0_i32, %c0_i32_0 : i32, i32, i32
  }
}

</mosaic_0001>

<llo_original>
// kernel: spatial_attention.1
$region0: #{spatial_attention.1}
  #allocation0 [shape = 'u32[]', space=smem, size = 0x4, offset = 0x4, fixed_abs, tag = 'smem constant byte address 0x4 - core index']
  #allocation1 [shape = 'u32[72,128]{1,0:T(1,128)}', space=vmem, size = 0x9000, scoped, tag = 'internal scratch']
  #allocation2 [shape = 'f32[16,16]{1,0:T(8,128)}', space=vmem, size = 0x2000, scoped, tag = 'scratch operand']
  #allocation3 [shape = 'f32[16,16]{1,0:T(8,128)}', space=vmem, size = 0x2000, scoped, tag = 'scratch operand']
  #allocation4 [shape = 'f32[2,22,128]{2,1,0:T(8,128)}', space=vmem, size = 0x6000, scoped, tag = 'scratch operand']
  %s0 = inlined_call_operand.vmem [shape: f32[2,4,16,16], index: 0, kind: input, shape index: {}]
  %s1 = inlined_call_operand.vmem [shape: f32[14,128,128], index: 1, kind: input, shape index: {}]
  %s2 = inlined_call_operand.vmem [shape: f32[2,16,128], index: 2, kind: output, shape index: {}]
  %s3 = sld [smem:[#allocation0]]
  $region53: #{spatial_attention.1} parent=0
    _
  %s5 = ssub.s32 1, %s3
  %s6 = scalar_select 0, %s5, %s3
  loop: start=0, step=1, limit=4
  $region2: #{spatial_attention.1} parent=0 // loop_pre_header
    _
  $region3: #{spatial_attention.1} parent=0 // loop_header
    %s8 = sphi 0, %s12
    %p9 = scmp.ge.s32.totalorder %s8, 4
    %s15 = sphi 0, %s27
    %s16 = sphi 0, %s23
    %s17 = sphi 0, %s15
    %s18 = sphi 0, %s16
    %s19 = sphi 0, %s17
    %s20 = sphi 0, %s18
    %s32 = sphi 0, %s34
    %s35 = sphi 0, %s32
    %s36 = sphi 0, %s35
    %s52 = sphi 0, %s36
    %s56 = sphi 0, %s56
    %s58 = sphi 0, %s56
    %s59 = sphi 0, %s58
    %s73 = sphi 0, %s59
    %s79 = sphi 0, %s81
    %s82 = sphi 0, %s79
    %s83 = sphi 0, %s82
    %s99 = sphi 0, %s83
  $region4: #{spatial_attention.1} parent=0 // loop_header_branch
    %11 = sbr.rel (%p9) target = $region8
  $region5: #{spatial_attention.1} parent=0 // loop_body
    %s13 = ssub.s32 %s8, 1
    %s14 = ssub.s32 %s8, 2
    %s21 = sadd.s32 1, %s16
    %p22 = scmp.ge.s32.totalorder %s21, 1
    %s23 = scalar_select %p22, 0, %s21
    %s24 = sadd.s32 1, %s15
    %s25 = scalar_select %p22, %s24, %s15
    %p26 = scmp.ge.s32.totalorder %s25, 2
    %s27 = scalar_select %p26, 0, %s25
    %s28 = ssub.s32 %s15, %s27
    %s29 = ssub.s32 %s16, %s23
    %s30 = sor.u32 %s28, %s29
    %p31 = scmp.eq.s32.totalorder %s30, 0
    %s33 = sadd.s32 %s32, 1
    %s34 = scalar_select %p31, %s32, %s33
    %p37 = pneg %p31
    %p38 = scmp.eq.s32.totalorder %s8, 1
    %p39 = por %p37, %p38
    %p40 = scmp.ne.s32.totalorder %s32, %s35
    %p41 = scmp.eq.s32.totalorder %s8, 0
    %p42 = por %p40, %p41
    %p43 = scmp.ne.s32.totalorder %s32, %s35
    %p44 = scmp.eq.s32.totalorder %s13, 1
    %p45 = por %p43, %p44
    %p46 = scmp.ne.s32.totalorder %s35, %s36
    %p47 = scmp.eq.s32.totalorder %s13, 0
    %p48 = por %p46, %p47
    %p49 = scmp.ne.s32.totalorder %s35, %s36
    %p50 = scmp.eq.s32.totalorder %s14, 1
    %p51 = por %p49, %p50
    %p53 = scmp.ne.s32.totalorder %s36, %s52
    %p54 = scmp.eq.s32.totalorder %s14, 0
    %p55 = por %p53, %p54
    %s57 = sadd.s32 %s56, 1
    %p60 = scmp.eq.s32.totalorder %s8, 1
    %p61 = scmp.ne.s32.totalorder %s56, %s58
    %p62 = scmp.eq.s32.totalorder %s8, 0
    %p63 = por %p61, %p62
    %p64 = scmp.ne.s32.totalorder %s56, %s58
    %p65 = scmp.eq.s32.totalorder %s13, 1
    %p66 = por %p64, %p65
    %p67 = scmp.ne.s32.totalorder %s58, %s59
    %p68 = scmp.eq.s32.totalorder %s13, 0
    %p69 = por %p67, %p68
    %p70 = scmp.ne.s32.totalorder %s58, %s59
    %p71 = scmp.eq.s32.totalorder %s14, 1
    %p72 = por %p70, %p71
    %p74 = scmp.ne.s32.totalorder %s59, %s73
    %p75 = scmp.eq.s32.totalorder %s14, 0
    %p76 = por %p74, %p75
    %s77 = ssub.s32 %s15, %s27
    %p78 = scmp.eq.s32.totalorder %s77, 0
    %s80 = sadd.s32 %s79, 1
    %s81 = scalar_select %p78, %s79, %s80
    %p84 = pneg %p78
    %p85 = scmp.eq.s32.totalorder %s8, 1
    %p86 = por %p84, %p85
    %p87 = scmp.ne.s32.totalorder %s79, %s82
    %p88 = scmp.eq.s32.totalorder %s8, 0
    %p89 = por %p87, %p88
    %p90 = scmp.ne.s32.totalorder %s79, %s82
    %p91 = scmp.eq.s32.totalorder %s13, 1
    %p92 = por %p90, %p91
    %p93 = scmp.ne.s32.totalorder %s82, %s83
    %p94 = scmp.eq.s32.totalorder %s13, 0
    %p95 = por %p93, %p94
    %p96 = scmp.ne.s32.totalorder %s82, %s83
    %p97 = scmp.eq.s32.totalorder %s14, 1
    %p98 = por %p96, %p97
    %p100 = scmp.ne.s32.totalorder %s83, %s99
    %p101 = scmp.eq.s32.totalorder %s14, 0
    %p102 = por %p100, %p101
    %p103 = scmp.le.s32.totalorder 1, %s8
    %p104 = scmp.lt.s32.totalorder %s8, 3
    %p105 = pnand %p103, %p104
    %p106 = pneg %p105
    // Predicated region
    $region9: #{spatial_attention.1} parent=5 // pred_check
      _
    $region10: #{spatial_attention.1} parent=5 // pred_check_branch
      %108 = sbr.rel (%p105) target = $region12
    $region11: #{spatial_attention.1} parent=5 // pred_region
      %s109 = ssub.s32 %s8, 1
      // Predicated region
      $region13: #{spatial_attention.1} parent=11 // pred_check
        %p110 = pneg %p69
      $region14: #{spatial_attention.1} parent=11 // pred_check_branch
        %112 = sbr.rel (%p110) target = $region16
      $region15: #{spatial_attention.1} parent=11 // pred_region
        _
      $region16: #{spatial_attention.1} parent=11 // pred_fallthru
        _
    $region12: #{spatial_attention.1} parent=5 // pred_fallthru
      _
    %p113 = scmp.lt.s32.totalorder %s8, 2
    // Predicated region
    $region17: #{spatial_attention.1} parent=5 // pred_check
      %p114 = pneg %p113
    $region18: #{spatial_attention.1} parent=5 // pred_check_branch
      %116 = sbr.rel (%p114) target = $region20
    $region19: #{spatial_attention.1} parent=5 // pred_region
      // Predicated region
      $region21: #{spatial_attention.1} parent=19 // pred_check
        %p117 = pneg %p42
      $region22: #{spatial_attention.1} parent=19 // pred_check_branch
        %119 = sbr.rel (%p117) target = $region24
      $region23: #{spatial_attention.1} parent=19 // pred_region
        %s120 = smul.u32 4, %s16
        %p121 = scmp.lt.s32.totalorder %s15, 1
        %s122 = scalar_select %p121, %s15, 1
        %p123 = scmp.lt.s32.totalorder %s120, 3
        %s124 = scalar_select %p123, %s120, 3
        %s125 = smul.addr %s124, 2
        %s126 = smul.addr %s122, 8
        %s127 = sadd.s32 %s125, %s126
        %s128 = smul.addr %s127, 8
        %s129 = scalar_lea.vmem %s0, %s128
        %s130 = smul.u32 4, %s16
      $region24: #{spatial_attention.1} parent=19 // pred_fallthru
        _
    $region20: #{spatial_attention.1} parent=5 // pred_fallthru
      _
    %p131 = scmp.le.s32.totalorder 1, %s8
    %p132 = scmp.lt.s32.totalorder %s8, 3
    %p133 = pnand %p131, %p132
    %p134 = pneg %p133
    // Predicated region
    $region25: #{spatial_attention.1} parent=5 // pred_check
      _
    $region26: #{spatial_attention.1} parent=5 // pred_check_branch
      %136 = sbr.rel (%p133) target = $region28
    $region27: #{spatial_attention.1} parent=5 // pred_region
      %s137 = ssub.s32 %s8, 1
      %s138 = smul.u32 4, %s18
      %p139 = scmp.lt.s32.totalorder %s17, 1
      %s140 = scalar_select %p139, %s17, 1
      %p141 = scmp.lt.s32.totalorder %s138, 3
      %s142 = scalar_select %p141, %s138, 3
      %s143 = smul.addr %s142, 2
      %s144 = smul.addr %s140, 8
      %s145 = sadd.s32 %s143, %s144
      %s146 = smul.addr %s145, 8
      %s147 = scalar_lea.vmem %s0, %s146
      %p148 = pneg %p48
      %p149 = pneg %p45
      %p150 = pneg %p69
      %p151 = pneg %p66
      %p152 = pneg %p95
      %p153 = pneg %p92
      %p154 = scmp.lt.s32.totalorder %s17, 1
      %s155 = scalar_select %p154, %s17, 1
      %s156 = smul.addr %s155, 2
      %s157 = smul.addr %s156, 8
      %s158 = scalar_lea.vmem %s2, %s157
      %s159 = smul.u32 4, %s18
      %p160 = scmp.lt.s32.totalorder %s17, 1
      %s161 = scalar_select %p160, %s17, 1
      %p162 = scmp.lt.s32.totalorder %s159, 3
      %s163 = scalar_select %p162, %s159, 3
      %s164 = smul.addr %s163, 2
      %s165 = smul.addr %s161, 8
      %s166 = sadd.s32 %s164, %s165
      %s167 = smul.addr %s166, 8
      %s168 = scalar_lea.vmem %s0, %s167
      %s169 = smul.u32 4, %s18
      %p170 = scmp.lt.s32.totalorder %s17, 1
      %s171 = scalar_select %p170, %s17, 1
      %s172 = smul.addr %s171, 2
      %s173 = smul.addr %s172, 8
      %s174 = scalar_lea.vmem %s2, %s173
      %v175 = vld [vmem:[%s168] sm:$0xff]
      %v176 = vld [vmem:[%s168 + $0x8] sm:$0xff]
      %s177 = scalar_lea.vmem %s168, 16
      %v178 = vld [vmem:[%s177] sm:$0xff]
      %v179 = vld [vmem:[%s177 + $0x8] sm:$0xff]
      %s180 = scalar_lea.vmem %s168, 32
      %v181 = vld [vmem:[%s180] sm:$0xff]
      %v182 = vld [vmem:[%s180 + $0x8] sm:$0xff]
      %s183 = scalar_lea.vmem %s168, 48
      %v184 = vld [vmem:[%s183] sm:$0xff]
      %v185 = vld [vmem:[%s183 + $0x8] sm:$0xff]
      %v186 = vadd.f32 %v175, %v181
      %v187 = vadd.f32 %v176, %v182
      %v188 = vmax.f32 %v175, %v181
      %v189 = vmax.f32 %v176, %v182
      %v190 = vadd.f32 %v178, %v184
      %v191 = vadd.f32 %v179, %v185
      %v192 = vmax.f32 %v178, %v184
      %v193 = vmax.f32 %v179, %v185
      %v194 = vadd.f32 %v186, %v190
      %v195 = vadd.f32 %v187, %v191
      %v196 = vmax.f32 %v188, %v192
      %v197 = vmax.f32 %v189, %v193
      %p198 = scmp.eq.s32.totalorder %s18, 0
      // Predicated region
      $region29: #{spatial_attention.1} parent=27 // pred_check
        %p199 = pneg %p198
      $region30: #{spatial_attention.1} parent=27 // pred_check_branch
        %201 = sbr.rel (%p199) target = $region32
      $region31: #{spatial_attention.1} parent=27 // pred_region
        %vm202 = vcmask 130048
        %203 = vst.msk [vmem:[#allocation2] sm:$0xff] %vm202, %v194
        %204 = vst.msk [vmem:[#allocation2 + $0x8] sm:$0xff] %vm202, %v195
        %205 = vst.msk [vmem:[#allocation3] sm:$0xff] %vm202, %v196
        %206 = vst.msk [vmem:[#allocation3 + $0x8] sm:$0xff] %vm202, %v197
      $region32: #{spatial_attention.1} parent=27 // pred_fallthru
        _
      %p207 = scmp.gt.s32.totalorder %s18, 0
      // Predicated region
      $region33: #{spatial_attention.1} parent=27 // pred_check
        %p208 = pneg %p207
      $region34: #{spatial_attention.1} parent=27 // pred_check_branch
        %210 = sbr.rel (%p208) target = $region36
      $region35: #{spatial_attention.1} parent=27 // pred_region
        %v211 = vld [vmem:[#allocation2] sm:$0xff]
        %v212 = vld [vmem:[#allocation2 + $0x8] sm:$0xff]
        %v213 = vadd.f32 %v211, %v194
        %v214 = vadd.f32 %v212, %v195
        %vm215 = vcmask 130048
        %216 = vst.msk [vmem:[#allocation2] sm:$0xff] %vm215, %v213
        %217 = vst.msk [vmem:[#allocation2 + $0x8] sm:$0xff] %vm215, %v214
        %v218 = vld [vmem:[#allocation3] sm:$0xff]
        %v219 = vld [vmem:[#allocation3 + $0x8] sm:$0xff]
        %v220 = vmax.f32 %v218, %v196
        %v221 = vmax.f32 %v219, %v197
        %222 = vst.msk [vmem:[#allocation3] sm:$0xff] %vm215, %v220
        %223 = vst.msk [vmem:[#allocation3 + $0x8] sm:$0xff] %vm215, %v221
      $region36: #{spatial_attention.1} parent=27 // pred_fallthru
        _
      // Predicated region
      $region37: #{spatial_attention.1} parent=27 // pred_check
        %p224 = pneg %p198
      $region38: #{spatial_attention.1} parent=27 // pred_check_branch
        %226 = sbr.rel (%p224) target = $region40
      $region39: #{spatial_attention.1} parent=27 // pred_region
        %v227 = vld [vmem:[#allocation2] sm:$0xff]
        %v228 = vld [vmem:[#allocation2 + $0x8] sm:$0xff]
        %v229 = vmul.f32 %v227, 0.25
        %v230 = vmul.f32 %v228, 0.25
        %v231 = vld [vmem:[#allocation3] sm:$0xff]
        %v232 = vld [vmem:[#allocation3 + $0x8] sm:$0xff]
        %233 = vst [vmem:[#allocation4] sm:$0xff] 0.0
        %234 = vst [vmem:[#allocation4 + $0x8] sm:$0xff] 0.0
        %235 = vst [vmem:[#allocation4 + $0x10] sm:$0x3f] 0.0
        %236 = vst [vmem:[#allocation4 + $0x18] sm:$0xff] 0.0
        %237 = vst [vmem:[#allocation4 + $0x20] sm:$0xff] 0.0
        %238 = vst [vmem:[#allocation4 + $0x28] sm:$0x3f] 0.0
        %vm239 = vcmask 130048
        %240 = vst.msk [vmem:[#allocation4 + $0x3] sm:$0xff] %vm239, %v229
        %241 = vst.msk [vmem:[#allocation4 + $0xb] sm:$0xff] %vm239, %v230
        %s242 = scalar_lea.vmem [#allocation4], 24
        %243 = vst.msk [vmem:[%s242 + $0x3] sm:$0xff] %vm239, %v231
        %244 = vst.msk [vmem:[%s242 + $0xb] sm:$0xff] %vm239, %v232
        %v245 = vld [vmem:[#allocation4] sm:$0xff]
        %v246 = vld [vmem:[#allocation4 + $0x8] sm:$0xff]
        %v247 = vld [vmem:[%s1] sm:$0xff]
        %v248 = vld [vmem:[%s1 + $0x8] sm:$0xff]
        %v249 = vld [vmem:[%s1 + $0x10] sm:$0xff]
        %v250 = vld [vmem:[%s1 + $0x18] sm:$0xff]
        %v251 = vld [vmem:[%s1 + $0x20] sm:$0xff]
        %v252 = vld [vmem:[%s1 + $0x28] sm:$0xff]
        %v253 = vld [vmem:[%s1 + $0x30] sm:$0xff]
        %v254 = vld [vmem:[%s1 + $0x38] sm:$0xff]
        %v255 = vld [vmem:[%s1 + $0x40] sm:$0xff]
        %v256 = vld [vmem:[%s1 + $0x48] sm:$0xff]
        %v257 = vld [vmem:[%s1 + $0x50] sm:$0xff]
        %v258 = vld [vmem:[%s1 + $0x58] sm:$0xff]
        %v259 = vld [vmem:[%s1 + $0x60] sm:$0xff]
        %v260 = vld [vmem:[%s1 + $0x68] sm:$0xff]
        %v261 = vld [vmem:[%s1 + $0x70] sm:$0xff]
        %v262 = vld [vmem:[%s1 + $0x78] sm:$0xff]
        %v263 = vld [vmem:[%s242] sm:$0xff]
        %v264 = vld [vmem:[%s242 + $0x8] sm:$0xff]
        %s265 = scalar_lea.vmem %s1, 896
        %v266 = vld [vmem:[%s265] sm:$0xff]
        %v267 = vld [vmem:[%s265 + $0x8] sm:$0xff]
        %v268 = vld [vmem:[%s265 + $0x10] sm:$0xff]
        %v269 = vld [vmem:[%s265 + $0x18] sm:$0xff]
        %v270 = vld [vmem:[%s265 + $0x20] sm:$0xff]
        %v271 = vld [vmem:[%s265 + $0x28] sm:$0xff]
        %v272 = vld [vmem:[%s265 + $0x30] sm:$0xff]
        %v273 = vld [vmem:[%s265 + $0x38] sm:$0xff]
        %v274 = vld [vmem:[%s265 + $0x40] sm:$0xff]
        %v275 = vld [vmem:[%s265 + $0x48] sm:$0xff]
        %v276 = vld [vmem:[%s265 + $0x50] sm:$0xff]
        %v277 = vld [vmem:[%s265 + $0x58] sm:$0xff]
        %v278 = vld [vmem:[%s265 + $0x60] sm:$0xff]
        %v279 = vld [vmem:[%s265 + $0x68] sm:$0xff]
        %v280 = vld [vmem:[%s265 + $0x70] sm:$0xff]
        %v281 = vld [vmem:[%s265 + $0x78] sm:$0xff]
        %v282 = vld [vmem:[#allocation4 + $0x1] sm:$0xff]
        %v283 = vld [vmem:[#allocation4 + $0x9] sm:$0xff]
        %s284 = scalar_lea.vmem %s1, 128
        %v285 = vld [vmem:[%s284] sm:$0xff]
        %v286 = vld [vmem:[%s284 + $0x8] sm:$0xff]
        %v287 = vld [vmem:[%s284 + $0x10] sm:$0xff]
        %v288 = vld [vmem:[%s284 + $0x18] sm:$0xff]
        %v289 = vld [vmem:[%s284 + $0x20] sm:$0xff]
        %v290 = vld [vmem:[%s284 + $0x28] sm:$0xff]
        %v291 = vld [vmem:[%s284 + $0x30] sm:$0xff]
        %v292 = vld [vmem:[%s284 + $0x38] sm:$0xff]
        %v293 = vld [vmem:[%s284 + $0x40] sm:$0xff]
        %v294 = vld [vmem:[%s284 + $0x48] sm:$0xff]
        %v295 = vld [vmem:[%s284 + $0x50] sm:$0xff]
        %v296 = vld [vmem:[%s284 + $0x58] sm:$0xff]
        %v297 = vld [vmem:[%s284 + $0x60] sm:$0xff]
        %v298 = vld [vmem:[%s284 + $0x68] sm:$0xff]
        %v299 = vld [vmem:[%s284 + $0x70] sm:$0xff]
        %v300 = vld [vmem:[%s284 + $0x78] sm:$0xff]
        %v301 = vand.u32 %v300, 4294901760
        %302 = vmatpush.msra.mxu0 %v301
        %v303 = vand.u32 %v299, 4294901760
        %304 = vmatpush.msra.mxu0 %v303
        %v305 = vand.u32 %v298, 4294901760
        %306 = vmatpush.msra.mxu0 %v305
        %v307 = vand.u32 %v297, 4294901760
        %308 = vmatpush.msra.mxu0 %v307
        %v309 = vand.u32 %v296, 4294901760
        %310 = vmatpush.msra.mxu0 %v309
        %v311 = vand.u32 %v295, 4294901760
        %312 = vmatpush.msra.mxu0 %v311
        %v313 = vand.u32 %v294, 4294901760
        %314 = vmatpush.msra.mxu0 %v313
        %v315 = vand.u32 %v293, 4294901760
        %316 = vmatpush.msra.mxu0 %v315
        %v317 = vand.u32 %v292, 4294901760
        %318 = vmatpush.msra.mxu0 %v317
        %v319 = vand.u32 %v291, 4294901760
        %320 = vmatpush.msra.mxu0 %v319
        %v321 = vand.u32 %v290, 4294901760
        %322 = vmatpush.msra.mxu0 %v321
        %v323 = vand.u32 %v289, 4294901760
        %324 = vmatpush.msra.mxu0 %v323
        %v325 = vand.u32 %v288, 4294901760
        %326 = vmatpush.msra.mxu0 %v325
        %v327 = vand.u32 %v287, 4294901760
        %328 = vmatpush.msra.mxu0 %v327
        %v329 = vand.u32 %v286, 4294901760
        %330 = vmatpush.msra.mxu0 %v329
        %v331 = vand.u32 %v285, 4294901760
        %332 = vmatpush.msra.mxu0 %v331
        %v333 = vand.u32 %v282, 4294901760
        %v334 = vsub.f32 %v282, %v333
        %v335 = vand.u32 %v334, 4294901760
        %v336 = vsub.f32 %v334, %v335
        %v337 = vand.u32 %v336, 4294901760
        %338 = vmatmul.f32.gmra.mxu0 %v337
        %v339 = vpop.f32.mrf.mxu0
        %v340 = vadd.f32 0.0, %v339
        %v341 = vand.u32 %v283, 4294901760
        %v342 = vsub.f32 %v283, %v341
        %v343 = vand.u32 %v342, 4294901760
        %v344 = vsub.f32 %v342, %v343
        %v345 = vand.u32 %v344, 4294901760
        %346 = vmatmul.f32.gmra.mxu0 %v345
        %v347 = vpop.f32.mrf.mxu0
        %v348 = vadd.f32 0.0, %v347
        %349 = vdwg.mxu0
        %v350 = vand.u32 %v300, 4294901760
        %v351 = vsub.f32 %v300, %v350
        %v352 = vand.u32 %v351, 4294901760
        %v353 = vsub.f32 %v351, %v352
        %v354 = vand.u32 %v353, 4294901760
        %355 = vmatpush.msra.mxu0 %v354
        %v356 = vand.u32 %v299, 4294901760
        %v357 = vsub.f32 %v299, %v356
        %v358 = vand.u32 %v357, 4294901760
        %v359 = vsub.f32 %v357, %v358
        %v360 = vand.u32 %v359, 4294901760
        %361 = vmatpush.msra.mxu0 %v360
        %v362 = vand.u32 %v298, 4294901760
        %v363 = vsub.f32 %v298, %v362
        %v364 = vand.u32 %v363, 4294901760
        %v365 = vsub.f32 %v363, %v364
        %v366 = vand.u32 %v365, 4294901760
        %367 = vmatpush.msra.mxu0 %v366
        %v368 = vand.u32 %v297, 4294901760
        %v369 = vsub.f32 %v297, %v368
        %v370 = vand.u32 %v369, 4294901760
        %v371 = vsub.f32 %v369, %v370
        %v372 = vand.u32 %v371, 4294901760
        %373 = vmatpush.msra.mxu0 %v372
        %v374 = vand.u32 %v296, 4294901760
        %v375 = vsub.f32 %v296, %v374
        %v376 = vand.u32 %v375, 4294901760
        %v377 = vsub.f32 %v375, %v376
        %v378 = vand.u32 %v377, 4294901760
        %379 = vmatpush.msra.mxu0 %v378
        %v380 = vand.u32 %v295, 4294901760
        %v381 = vsub.f32 %v295, %v380
        %v382 = vand.u32 %v381, 4294901760
        %v383 = vsub.f32 %v381, %v382
        %v384 = vand.u32 %v383, 4294901760
        %385 = vmatpush.msra.mxu0 %v384
        %v386 = vand.u32 %v294, 4294901760
        %v387 = vsub.f32 %v294, %v386
        %v388 = vand.u32 %v387, 4294901760
        %v389 = vsub.f32 %v387, %v388
        %v390 = vand.u32 %v389, 4294901760
        %391 = vmatpush.msra.mxu0 %v390
        %v392 = vand.u32 %v293, 4294901760
        %v393 = vsub.f32 %v293, %v392
        %v394 = vand.u32 %v393, 4294901760
        %v395 = vsub.f32 %v393, %v394
        %v396 = vand.u32 %v395, 4294901760
        %397 = vmatpush.msra.mxu0 %v396
        %v398 = vand.u32 %v292, 4294901760
        %v399 = vsub.f32 %v292, %v398
        %v400 = vand.u32 %v399, 4294901760
        %v401 = vsub.f32 %v399, %v400
        %v402 = vand.u32 %v401, 4294901760
        %403 = vmatpush.msra.mxu0 %v402
        %v404 = vand.u32 %v291, 4294901760
        %v405 = vsub.f32 %v291, %v404
        %v406 = vand.u32 %v405, 4294901760
        %v407 = vsub.f32 %v405, %v406
        %v408 = vand.u32 %v407, 4294901760
        %409 = vmatpush.msra.mxu0 %v408
        %v410 = vand.u32 %v290, 4294901760
        %v411 = vsub.f32 %v290, %v410
        %v412 = vand.u32 %v411, 4294901760
        %v413 = vsub.f32 %v411, %v412
        %v414 = vand.u32 %v413, 4294901760
        %415 = vmatpush.msra.mxu0 %v414
        %v416 = vand.u32 %v289, 4294901760
        %v417 = vsub.f32 %v289, %v416
        %v418 = vand.u32 %v417, 4294901760
        %v419 = vsub.f32 %v417, %v418
        %v420 = vand.u32 %v419, 4294901760
        %421 = vmatpush.msra.mxu0 %v420
        %v422 = vand.u32 %v288, 4294901760
        %v423 = vsub.f32 %v288, %v422
        %v424 = vand.u32 %v423, 4294901760
        %v425 = vsub.f32 %v423, %v424
        %v426 = vand.u32 %v425, 4294901760
        %427 = vmatpush.msra.mxu0 %v426
        %v428 = vand.u32 %v287, 4294901760
        %v429 = vsub.f32 %v287, %v428
        %v430 = vand.u32 %v429, 4294901760
        %v431 = vsub.f32 %v429, %v430
        %v432 = vand.u32 %v431, 4294901760
        %433 = vmatpush.msra.mxu0 %v432
        %v434 = vand.u32 %v286, 4294901760
        %v435 = vsub.f32 %v286, %v434
        %v436 = vand.u32 %v435, 4294901760
        %v437 = vsub.f32 %v435, %v436
        %v438 = vand.u32 %v437, 4294901760
        %439 = vmatpush.msra.mxu0 %v438
        %v440 = vand.u32 %v285, 4294901760
        %v441 = vsub.f32 %v285, %v440
        %v442 = vand.u32 %v441, 4294901760
        %v443 = vsub.f32 %v441, %v442
        %v444 = vand.u32 %v443, 4294901760
        %445 = vmatpush.msra.mxu0 %v444
        %v446 = vand.u32 %v282, 4294901760
        %447 = vmatmul.f32.gmra.mxu0 %v446
        %v448 = vpop.f32.mrf.mxu0
        %v449 = vadd.f32 %v340, %v448
        %v450 = vand.u32 %v283, 4294901760
        %451 = vmatmul.f32.gmra.mxu0 %v450
        %v452 = vpop.f32.mrf.mxu0
        %v453 = vadd.f32 %v348, %v452
        %454 = vdwg.mxu0
        %v455 = vand.u32 %v300, 4294901760
        %v456 = vsub.f32 %v300, %v455
        %457 = vmatpush.msra.mxu0 %v456
        %v458 = vand.u32 %v299, 4294901760
        %v459 = vsub.f32 %v299, %v458
        %460 = vmatpush.msra.mxu0 %v459
        %v461 = vand.u32 %v298, 4294901760
        %v462 = vsub.f32 %v298, %v461
        %463 = vmatpush.msra.mxu0 %v462
        %v464 = vand.u32 %v297, 4294901760
        %v465 = vsub.f32 %v297, %v464
        %466 = vmatpush.msra.mxu0 %v465
        %v467 = vand.u32 %v296, 4294901760
        %v468 = vsub.f32 %v296, %v467
        %469 = vmatpush.msra.mxu0 %v468
        %v470 = vand.u32 %v295, 4294901760
        %v471 = vsub.f32 %v295, %v470
        %472 = vmatpush.msra.mxu0 %v471
        %v473 = vand.u32 %v294, 4294901760
        %v474 = vsub.f32 %v294, %v473
        %475 = vmatpush.msra.mxu0 %v474
        %v476 = vand.u32 %v293, 4294901760
        %v477 = vsub.f32 %v293, %v476
        %478 = vmatpush.msra.mxu0 %v477
        %v479 = vand.u32 %v292, 4294901760
        %v480 = vsub.f32 %v292, %v479
        %481 = vmatpush.msra.mxu0 %v480
        %v482 = vand.u32 %v291, 4294901760
        %v483 = vsub.f32 %v291, %v482
        %484 = vmatpush.msra.mxu0 %v483
        %v485 = vand.u32 %v290, 4294901760
        %v486 = vsub.f32 %v290, %v485
        %487 = vmatpush.msra.mxu0 %v486
        %v488 = vand.u32 %v289, 4294901760
        %v489 = vsub.f32 %v289, %v488
        %490 = vmatpush.msra.mxu0 %v489
        %v491 = vand.u32 %v288, 4294901760
        %v492 = vsub.f32 %v288, %v491
        %493 = vmatpush.msra.mxu0 %v492
        %v494 = vand.u32 %v287, 4294901760
        %v495 = vsub.f32 %v287, %v494
        %496 = vmatpush.msra.mxu0 %v495
        %v497 = vand.u32 %v286, 4294901760
        %v498 = vsub.f32 %v286, %v497
        %499 = vmatpush.msra.mxu0 %v498
        %v500 = vand.u32 %v285, 4294901760
        %v501 = vsub.f32 %v285, %v500
        %502 = vmatpush.msra.mxu0 %v501
        %v503 = vand.u32 %v282, 4294901760
        %v504 = vsub.f32 %v282, %v503
        %505 = vmatmul.f32.gmra.mxu0 %v504
        %v506 = vpop.f32.mrf.mxu0
        %v507 = vadd.f32 %v449, %v506
        %v508 = vand.u32 %v283, 4294901760
        %v509 = vsub.f32 %v283, %v508
        %510 = vmatmul.f32.gmra.mxu0 %v509
        %v511 = vpop.f32.mrf.mxu0
        %v512 = vadd.f32 %v453, %v511
        %513 = vdwg.mxu0
        %v514 = vand.u32 %v300, 4294901760
        %515 = vmatpush.msra.mxu0 %v514
        %v516 = vand.u32 %v299, 4294901760
        %517 = vmatpush.msra.mxu0 %v516
        %v518 = vand.u32 %v298, 4294901760
        %519 = vmatpush.msra.mxu0 %v518
        %v520 = vand.u32 %v297, 4294901760
        %521 = vmatpush.msra.mxu0 %v520
        %v522 = vand.u32 %v296, 4294901760
        %523 = vmatpush.msra.mxu0 %v522
        %v524 = vand.u32 %v295, 4294901760
        %525 = vmatpush.msra.mxu0 %v524
        %v526 = vand.u32 %v294, 4294901760
        %527 = vmatpush.msra.mxu0 %v526
        %v528 = vand.u32 %v293, 4294901760
        %529 = vmatpush.msra.mxu0 %v528
        %v530 = vand.u32 %v292, 4294901760
        %531 = vmatpush.msra.mxu0 %v530
        %v532 = vand.u32 %v291, 4294901760
        %533 = vmatpush.msra.mxu0 %v532
        %v534 = vand.u32 %v290, 4294901760
        %535 = vmatpush.msra.mxu0 %v534
        %v536 = vand.u32 %v289, 4294901760
        %537 = vmatpush.msra.mxu0 %v536
        %v538 = vand.u32 %v288, 4294901760
        %539 = vmatpush.msra.mxu0 %v538
        %v540 = vand.u32 %v287, 4294901760
        %541 = vmatpush.msra.mxu0 %v540
        %v542 = vand.u32 %v286, 4294901760
        %543 = vmatpush.msra.mxu0 %v542
        %v544 = vand.u32 %v285, 4294901760
        %545 = vmatpush.msra.mxu0 %v544
        %v546 = vand.u32 %v282, 4294901760
        %v547 = vsub.f32 %v282, %v546
        %v548 = vand.u32 %v547, 4294901760
        %549 = vmatmul.f32.gmra.mxu0 %v548
        %v550 = vpop.f32.mrf.mxu0
        %v551 = vadd.f32 %v507, %v550
        %v552 = vand.u32 %v283, 4294901760
        %v553 = vsub.f32 %v283, %v552
        %v554 = vand.u32 %v553, 4294901760
        %555 = vmatmul.f32.gmra.mxu0 %v554
        %v556 = vpop.f32.mrf.mxu0
        %v557 = vadd.f32 %v512, %v556
        %558 = vdwg.mxu0
        %v559 = vand.u32 %v300, 4294901760
        %v560 = vsub.f32 %v300, %v559
        %v561 = vand.u32 %v560, 4294901760
        %562 = vmatpush.msra.mxu0 %v561
        %v563 = vand.u32 %v299, 4294901760
        %v564 = vsub.f32 %v299, %v563
        %v565 = vand.u32 %v564, 4294901760
        %566 = vmatpush.msra.mxu0 %v565
        %v567 = vand.u32 %v298, 4294901760
        %v568 = vsub.f32 %v298, %v567
        %v569 = vand.u32 %v568, 4294901760
        %570 = vmatpush.msra.mxu0 %v569
        %v571 = vand.u32 %v297, 4294901760
        %v572 = vsub.f32 %v297, %v571
        %v573 = vand.u32 %v572, 4294901760
        %574 = vmatpush.msra.mxu0 %v573
        %v575 = vand.u32 %v296, 4294901760
        %v576 = vsub.f32 %v296, %v575
        %v577 = vand.u32 %v576, 4294901760
        %578 = vmatpush.msra.mxu0 %v577
        %v579 = vand.u32 %v295, 4294901760
        %v580 = vsub.f32 %v295, %v579
        %v581 = vand.u32 %v580, 4294901760
        %582 = vmatpush.msra.mxu0 %v581
        %v583 = vand.u32 %v294, 4294901760
        %v584 = vsub.f32 %v294, %v583
        %v585 = vand.u32 %v584, 4294901760
        %586 = vmatpush.msra.mxu0 %v585
        %v587 = vand.u32 %v293, 4294901760
        %v588 = vsub.f32 %v293, %v587
        %v589 = vand.u32 %v588, 4294901760
        %590 = vmatpush.msra.mxu0 %v589
        %v591 = vand.u32 %v292, 4294901760
        %v592 = vsub.f32 %v292, %v591
        %v593 = vand.u32 %v592, 4294901760
        %594 = vmatpush.msra.mxu0 %v593
        %v595 = vand.u32 %v291, 4294901760
        %v596 = vsub.f32 %v291, %v595
        %v597 = vand.u32 %v596, 4294901760
        %598 = vmatpush.msra.mxu0 %v597
        %v599 = vand.u32 %v290, 4294901760
        %v600 = vsub.f32 %v290, %v599
        %v601 = vand.u32 %v600, 4294901760
        %602 = vmatpush.msra.mxu0 %v601
        %v603 = vand.u32 %v289, 4294901760
        %v604 = vsub.f32 %v289, %v603
        %v605 = vand.u32 %v604, 4294901760
        %606 = vmatpush.msra.mxu0 %v605
        %v607 = vand.u32 %v288, 4294901760
        %v608 = vsub.f32 %v288, %v607
        %v609 = vand.u32 %v608, 4294901760
        %610 = vmatpush.msra.mxu0 %v609
        %v611 = vand.u32 %v287, 4294901760
        %v612 = vsub.f32 %v287, %v611
        %v613 = vand.u32 %v612, 4294901760
        %614 = vmatpush.msra.mxu0 %v613
        %v615 = vand.u32 %v286, 4294901760
        %v616 = vsub.f32 %v286, %v615
        %v617 = vand.u32 %v616, 4294901760
        %618 = vmatpush.msra.mxu0 %v617
        %v619 = vand.u32 %v285, 4294901760
        %v620 = vsub.f32 %v285, %v619
        %v621 = vand.u32 %v620, 4294901760
        %622 = vmatpush.msra.mxu0 %v621
        %v623 = vand.u32 %v282, 4294901760
        %624 = vmatmul.f32.gmra.mxu0 %v623
        %v625 = vpop.f32.mrf.mxu0
        %v626 = vadd.f32 %v551, %v625
        %v627 = vand.u32 %v283, 4294901760
        %628 = vmatmul.f32.gmra.mxu0 %v627
        %v629 = vpop.f32.mrf.mxu0
        %v630 = vadd.f32 %v557, %v629
        %631 = vdwg.mxu0
        %v632 = vand.u32 %v300, 4294901760
        %633 = vmatpush.msra.mxu0 %v632
        %v634 = vand.u32 %v299, 4294901760
        %635 = vmatpush.msra.mxu0 %v634
        %v636 = vand.u32 %v298, 4294901760
        %637 = vmatpush.msra.mxu0 %v636
        %v638 = vand.u32 %v297, 4294901760
        %639 = vmatpush.msra.mxu0 %v638
        %v640 = vand.u32 %v296, 4294901760
        %641 = vmatpush.msra.mxu0 %v640
        %v642 = vand.u32 %v295, 4294901760
        %643 = vmatpush.msra.mxu0 %v642
        %v644 = vand.u32 %v294, 4294901760
        %645 = vmatpush.msra.mxu0 %v644
        %v646 = vand.u32 %v293, 4294901760
        %647 = vmatpush.msra.mxu0 %v646
        %v648 = vand.u32 %v292, 4294901760
        %649 = vmatpush.msra.mxu0 %v648
        %v650 = vand.u32 %v291, 4294901760
        %651 = vmatpush.msra.mxu0 %v650
        %v652 = vand.u32 %v290, 4294901760
        %653 = vmatpush.msra.mxu0 %v652
        %v654 = vand.u32 %v289, 4294901760
        %655 = vmatpush.msra.mxu0 %v654
        %v656 = vand.u32 %v288, 4294901760
        %657 = vmatpush.msra.mxu0 %v656
        %v658 = vand.u32 %v287, 4294901760
        %659 = vmatpush.msra.mxu0 %v658
        %v660 = vand.u32 %v286, 4294901760
        %661 = vmatpush.msra.mxu0 %v660
        %v662 = vand.u32 %v285, 4294901760
        %663 = vmatpush.msra.mxu0 %v662
        %v664 = vand.u32 %v282, 4294901760
        %665 = vmatmul.f32.gmra.mxu0 %v664
        %v666 = vpop.f32.mrf.mxu0
        %v667 = vadd.f32 %v626, %v666
        %v668 = vand.u32 %v283, 4294901760
        %669 = vmatmul.f32.gmra.mxu0 %v668
        %v670 = vpop.f32.mrf.mxu0
        %v671 = vadd.f32 %v630, %v670
        %672 = vdwg.mxu0
        %v673 = vand.u32 %v262, 4294901760
        %674 = vmatpush.msra.mxu0 %v673
        %v675 = vand.u32 %v261, 4294901760
        %676 = vmatpush.msra.mxu0 %v675
        %v677 = vand.u32 %v260, 4294901760
        %678 = vmatpush.msra.mxu0 %v677
        %v679 = vand.u32 %v259, 4294901760
        %680 = vmatpush.msra.mxu0 %v679
        %v681 = vand.u32 %v258, 4294901760
        %682 = vmatpush.msra.mxu0 %v681
        %v683 = vand.u32 %v257, 4294901760
        %684 = vmatpush.msra.mxu0 %v683
        %v685 = vand.u32 %v256, 4294901760
        %686 = vmatpush.msra.mxu0 %v685
        %v687 = vand.u32 %v255, 4294901760
        %688 = vmatpush.msra.mxu0 %v687
        %v689 = vand.u32 %v254, 4294901760
        %690 = vmatpush.msra.mxu0 %v689
        %v691 = vand.u32 %v253, 4294901760
        %692 = vmatpush.msra.mxu0 %v691
        %v693 = vand.u32 %v252, 4294901760
        %694 = vmatpush.msra.mxu0 %v693
        %v695 = vand.u32 %v251, 4294901760
        %696 = vmatpush.msra.mxu0 %v695
        %v697 = vand.u32 %v250, 4294901760
        %698 = vmatpush.msra.mxu0 %v697
        %v699 = vand.u32 %v249, 4294901760
        %700 = vmatpush.msra.mxu0 %v699
        %v701 = vand.u32 %v248, 4294901760
        %702 = vmatpush.msra.mxu0 %v701
        %v703 = vand.u32 %v247, 4294901760
        %704 = vmatpush.msra.mxu0 %v703
        %v705 = vand.u32 %v245, 4294901760
        %v706 = vsub.f32 %v245, %v705
        %v707 = vand.u32 %v706, 4294901760
        %v708 = vsub.f32 %v706, %v707
        %v709 = vand.u32 %v708, 4294901760
        %710 = vmatmul.f32.gmra.mxu0 %v709
        %v711 = vpop.f32.mrf.mxu0
        %v712 = vadd.f32 %v667, %v711
        %v713 = vand.u32 %v246, 4294901760
        %v714 = vsub.f32 %v246, %v713
        %v715 = vand.u32 %v714, 4294901760
        %v716 = vsub.f32 %v714, %v715
        %v717 = vand.u32 %v716, 4294901760
        %718 = vmatmul.f32.gmra.mxu0 %v717
        %v719 = vpop.f32.mrf.mxu0
        %v720 = vadd.f32 %v671, %v719
        %721 = vdwg.mxu0
        %v722 = vand.u32 %v262, 4294901760
        %v723 = vsub.f32 %v262, %v722
        %v724 = vand.u32 %v723, 4294901760
        %v725 = vsub.f32 %v723, %v724
        %v726 = vand.u32 %v725, 4294901760
        %727 = vmatpush.msra.mxu0 %v726
        %v728 = vand.u32 %v261, 4294901760
        %v729 = vsub.f32 %v261, %v728
        %v730 = vand.u32 %v729, 4294901760
        %v731 = vsub.f32 %v729, %v730
        %v732 = vand.u32 %v731, 4294901760
        %733 = vmatpush.msra.mxu0 %v732
        %v734 = vand.u32 %v260, 4294901760
        %v735 = vsub.f32 %v260, %v734
        %v736 = vand.u32 %v735, 4294901760
        %v737 = vsub.f32 %v735, %v736
        %v738 = vand.u32 %v737, 4294901760
        %739 = vmatpush.msra.mxu0 %v738
        %v740 = vand.u32 %v259, 4294901760
        %v741 = vsub.f32 %v259, %v740
        %v742 = vand.u32 %v741, 4294901760
        %v743 = vsub.f32 %v741, %v742
        %v744 = vand.u32 %v743, 4294901760
        %745 = vmatpush.msra.mxu0 %v744
        %v746 = vand.u32 %v258, 4294901760
        %v747 = vsub.f32 %v258, %v746
        %v748 = vand.u32 %v747, 4294901760
        %v749 = vsub.f32 %v747, %v748
        %v750 = vand.u32 %v749, 4294901760
        %751 = vmatpush.msra.mxu0 %v750
        %v752 = vand.u32 %v257, 4294901760
        %v753 = vsub.f32 %v257, %v752
        %v754 = vand.u32 %v753, 4294901760
        %v755 = vsub.f32 %v753, %v754
        %v756 = vand.u32 %v755, 4294901760
        %757 = vmatpush.msra.mxu0 %v756
        %v758 = vand.u32 %v256, 4294901760
        %v759 = vsub.f32 %v256, %v758
        %v760 = vand.u32 %v759, 4294901760
        %v761 = vsub.f32 %v759, %v760
        %v762 = vand.u32 %v761, 4294901760
        %763 = vmatpush.msra.mxu0 %v762
        %v764 = vand.u32 %v255, 4294901760
        %v765 = vsub.f32 %v255, %v764
        %v766 = vand.u32 %v765, 4294901760
        %v767 = vsub.f32 %v765, %v766
        %v768 = vand.u32 %v767, 4294901760
        %769 = vmatpush.msra.mxu0 %v768
        %v770 = vand.u32 %v254, 4294901760
        %v771 = vsub.f32 %v254, %v770
        %v772 = vand.u32 %v771, 4294901760
        %v773 = vsub.f32 %v771, %v772
        %v774 = vand.u32 %v773, 4294901760
        %775 = vmatpush.msra.mxu0 %v774
        %v776 = vand.u32 %v253, 4294901760
        %v777 = vsub.f32 %v253, %v776
        %v778 = vand.u32 %v777, 4294901760
        %v779 = vsub.f32 %v777, %v778
        %v780 = vand.u32 %v779, 4294901760
        %781 = vmatpush.msra.mxu0 %v780
        %v782 = vand.u32 %v252, 4294901760
        %v783 = vsub.f32 %v252, %v782
        %v784 = vand.u32 %v783, 4294901760
        %v785 = vsub.f32 %v783, %v784
        %v786 = vand.u32 %v785, 4294901760
        %787 = vmatpush.msra.mxu0 %v786
        %v788 = vand.u32 %v251, 4294901760
        %v789 = vsub.f32 %v251, %v788
        %v790 = vand.u32 %v789, 4294901760
        %v791 = vsub.f32 %v789, %v790
        %v792 = vand.u32 %v791, 4294901760
        %793 = vmatpush.msra.mxu0 %v792
        %v794 = vand.u32 %v250, 4294901760
        %v795 = vsub.f32 %v250, %v794
        %v796 = vand.u32 %v795, 4294901760
        %v797 = vsub.f32 %v795, %v796
        %v798 = vand.u32 %v797, 4294901760
        %799 = vmatpush.msra.mxu0 %v798
        %v800 = vand.u32 %v249, 4294901760
        %v801 = vsub.f32 %v249, %v800
        %v802 = vand.u32 %v801, 4294901760
        %v803 = vsub.f32 %v801, %v802
        %v804 = vand.u32 %v803, 4294901760
        %805 = vmatpush.msra.mxu0 %v804
        %v806 = vand.u32 %v248, 4294901760
        %v807 = vsub.f32 %v248, %v806
        %v808 = vand.u32 %v807, 4294901760
        %v809 = vsub.f32 %v807, %v808
        %v810 = vand.u32 %v809, 4294901760
        %811 = vmatpush.msra.mxu0 %v810
        %v812 = vand.u32 %v247, 4294901760
        %v813 = vsub.f32 %v247, %v812
        %v814 = vand.u32 %v813, 4294901760
        %v815 = vsub.f32 %v813, %v814
        %v816 = vand.u32 %v815, 4294901760
        %817 = vmatpush.msra.mxu0 %v816
        %v818 = vand.u32 %v245, 4294901760
        %819 = vmatmul.f32.gmra.mxu0 %v818
        %v820 = vpop.f32.mrf.mxu0
        %v821 = vadd.f32 %v712, %v820
        %v822 = vand.u32 %v246, 4294901760
        %823 = vmatmul.f32.gmra.mxu0 %v822
        %v824 = vpop.f32.mrf.mxu0
        %v825 = vadd.f32 %v720, %v824
        %826 = vdwg.mxu0
        %v827 = vand.u32 %v262, 4294901760
        %v828 = vsub.f32 %v262, %v827
        %829 = vmatpush.msra.mxu0 %v828
        %v830 = vand.u32 %v261, 4294901760
        %v831 = vsub.f32 %v261, %v830
        %832 = vmatpush.msra.mxu0 %v831
        %v833 = vand.u32 %v260, 4294901760
        %v834 = vsub.f32 %v260, %v833
        %835 = vmatpush.msra.mxu0 %v834
        %v836 = vand.u32 %v259, 4294901760
        %v837 = vsub.f32 %v259, %v836
        %838 = vmatpush.msra.mxu0 %v837
        %v839 = vand.u32 %v258, 4294901760
        %v840 = vsub.f32 %v258, %v839
        %841 = vmatpush.msra.mxu0 %v840
        %v842 = vand.u32 %v257, 4294901760
        %v843 = vsub.f32 %v257, %v842
        %844 = vmatpush.msra.mxu0 %v843
        %v845 = vand.u32 %v256, 4294901760
        %v846 = vsub.f32 %v256, %v845
        %847 = vmatpush.msra.mxu0 %v846
        %v848 = vand.u32 %v255, 4294901760
        %v849 = vsub.f32 %v255, %v848
        %850 = vmatpush.msra.mxu0 %v849
        %v851 = vand.u32 %v254, 4294901760
        %v852 = vsub.f32 %v254, %v851
        %853 = vmatpush.msra.mxu0 %v852
        %v854 = vand.u32 %v253, 4294901760
        %v855 = vsub.f32 %v253, %v854
        %856 = vmatpush.msra.mxu0 %v855
        %v857 = vand.u32 %v252, 4294901760
        %v858 = vsub.f32 %v252, %v857
        %859 = vmatpush.msra.mxu0 %v858
        %v860 = vand.u32 %v251, 4294901760
        %v861 = vsub.f32 %v251, %v860
        %862 = vmatpush.msra.mxu0 %v861
        %v863 = vand.u32 %v250, 4294901760
        %v864 = vsub.f32 %v250, %v863
        %865 = vmatpush.msra.mxu0 %v864
        %v866 = vand.u32 %v249, 4294901760
        %v867 = vsub.f32 %v249, %v866
        %868 = vmatpush.msra.mxu0 %v867
        %v869 = vand.u32 %v248, 4294901760
        %v870 = vsub.f32 %v248, %v869
        %871 = vmatpush.msra.mxu0 %v870
        %v872 = vand.u32 %v247, 4294901760
        %v873 = vsub.f32 %v247, %v872
        %874 = vmatpush.msra.mxu0 %v873
        %v875 = vand.u32 %v245, 4294901760
        %v876 = vsub.f32 %v245, %v875
        %877 = vmatmul.f32.gmra.mxu0 %v876
        %v878 = vpop.f32.mrf.mxu0
        %v879 = vadd.f32 %v821, %v878
        %v880 = vand.u32 %v246, 4294901760
        %v881 = vsub.f32 %v246, %v880
        %882 = vmatmul.f32.gmra.mxu0 %v881
        %v883 = vpop.f32.mrf.mxu0
        %v884 = vadd.f32 %v825, %v883
        %885 = vdwg.mxu0
        %v886 = vand.u32 %v262, 4294901760
        %887 = vmatpush.msra.mxu0 %v886
        %v888 = vand.u32 %v261, 4294901760
        %889 = vmatpush.msra.mxu0 %v888
        %v890 = vand.u32 %v260, 4294901760
        %891 = vmatpush.msra.mxu0 %v890
        %v892 = vand.u32 %v259, 4294901760
        %893 = vmatpush.msra.mxu0 %v892
        %v894 = vand.u32 %v258, 4294901760
        %895 = vmatpush.msra.mxu0 %v894
        %v896 = vand.u32 %v257, 4294901760
        %897 = vmatpush.msra.mxu0 %v896
        %v898 = vand.u32 %v256, 4294901760
        %899 = vmatpush.msra.mxu0 %v898
        %v900 = vand.u32 %v255, 4294901760
        %901 = vmatpush.msra.mxu0 %v900
        %v902 = vand.u32 %v254, 4294901760
        %903 = vmatpush.msra.mxu0 %v902
        %v904 = vand.u32 %v253, 4294901760
        %905 = vmatpush.msra.mxu0 %v904
        %v906 = vand.u32 %v252, 4294901760
        %907 = vmatpush.msra.mxu0 %v906
        %v908 = vand.u32 %v251, 4294901760
        %909 = vmatpush.msra.mxu0 %v908
        %v910 = vand.u32 %v250, 4294901760
        %911 = vmatpush.msra.mxu0 %v910
        %v912 = vand.u32 %v249, 4294901760
        %913 = vmatpush.msra.mxu0 %v912
        %v914 = vand.u32 %v248, 4294901760
        %915 = vmatpush.msra.mxu0 %v914
        %v916 = vand.u32 %v247, 4294901760
        %917 = vmatpush.msra.mxu0 %v916
        %v918 = vand.u32 %v245, 4294901760
        %v919 = vsub.f32 %v245, %v918
        %v920 = vand.u32 %v919, 4294901760
        %921 = vmatmul.f32.gmra.mxu0 %v920
        %v922 = vpop.f32.mrf.mxu0
        %v923 = vadd.f32 %v879, %v922
        %v924 = vand.u32 %v246, 4294901760
        %v925 = vsub.f32 %v246, %v924
        %v926 = vand.u32 %v925, 4294901760
        %927 = vmatmul.f32.gmra.mxu0 %v926
        %v928 = vpop.f32.mrf.mxu0
        %v929 = vadd.f32 %v884, %v928
        %930 = vdwg.mxu0
        %v931 = vand.u32 %v262, 4294901760
        %v932 = vsub.f32 %v262, %v931
        %v933 = vand.u32 %v932, 4294901760
        %934 = vmatpush.msra.mxu0 %v933
        %v935 = vand.u32 %v261, 4294901760
        %v936 = vsub.f32 %v261, %v935
        %v937 = vand.u32 %v936, 4294901760
        %938 = vmatpush.msra.mxu0 %v937
        %v939 = vand.u32 %v260, 4294901760
        %v940 = vsub.f32 %v260, %v939
        %v941 = vand.u32 %v940, 4294901760
        %942 = vmatpush.msra.mxu0 %v941
        %v943 = vand.u32 %v259, 4294901760
        %v944 = vsub.f32 %v259, %v943
        %v945 = vand.u32 %v944, 4294901760
        %946 = vmatpush.msra.mxu0 %v945
        %v947 = vand.u32 %v258, 4294901760
        %v948 = vsub.f32 %v258, %v947
        %v949 = vand.u32 %v948, 4294901760
        %950 = vmatpush.msra.mxu0 %v949
        %v951 = vand.u32 %v257, 4294901760
        %v952 = vsub.f32 %v257, %v951
        %v953 = vand.u32 %v952, 4294901760
        %954 = vmatpush.msra.mxu0 %v953
        %v955 = vand.u32 %v256, 4294901760
        %v956 = vsub.f32 %v256, %v955
        %v957 = vand.u32 %v956, 4294901760
        %958 = vmatpush.msra.mxu0 %v957
        %v959 = vand.u32 %v255, 4294901760
        %v960 = vsub.f32 %v255, %v959
        %v961 = vand.u32 %v960, 4294901760
        %962 = vmatpush.msra.mxu0 %v961
        %v963 = vand.u32 %v254, 4294901760
        %v964 = vsub.f32 %v254, %v963
        %v965 = vand.u32 %v964, 4294901760
        %966 = vmatpush.msra.mxu0 %v965
        %v967 = vand.u32 %v253, 4294901760
        %v968 = vsub.f32 %v253, %v967
        %v969 = vand.u32 %v968, 4294901760
        %970 = vmatpush.msra.mxu0 %v969
        %v971 = vand.u32 %v252, 4294901760
        %v972 = vsub.f32 %v252, %v971
        %v973 = vand.u32 %v972, 4294901760
        %974 = vmatpush.msra.mxu0 %v973
        %v975 = vand.u32 %v251, 4294901760
        %v976 = vsub.f32 %v251, %v975
        %v977 = vand.u32 %v976, 4294901760
        %978 = vmatpush.msra.mxu0 %v977
        %v979 = vand.u32 %v250, 4294901760
        %v980 = vsub.f32 %v250, %v979
        %v981 = vand.u32 %v980, 4294901760
        %982 = vmatpush.msra.mxu0 %v981
        %v983 = vand.u32 %v249, 4294901760
        %v984 = vsub.f32 %v249, %v983
        %v985 = vand.u32 %v984, 4294901760
        %986 = vmatpush.msra.mxu0 %v985
        %v987 = vand.u32 %v248, 4294901760
        %v988 = vsub.f32 %v248, %v987
        %v989 = vand.u32 %v988, 4294901760
        %990 = vmatpush.msra.mxu0 %v989
        %v991 = vand.u32 %v247, 4294901760
        %v992 = vsub.f32 %v247, %v991
        %v993 = vand.u32 %v992, 4294901760
        %994 = vmatpush.msra.mxu0 %v993
        %v995 = vand.u32 %v245, 4294901760
        %996 = vmatmul.f32.gmra.mxu0 %v995
        %v997 = vpop.f32.mrf.mxu0
        %v998 = vadd.f32 %v923, %v997
        %v999 = vand.u32 %v246, 4294901760
        %1000 = vmatmul.f32.gmra.mxu0 %v999
        %v1001 = vpop.f32.mrf.mxu0
        %v1002 = vadd.f32 %v929, %v1001
        %1003 = vdwg.mxu0
        %v1004 = vand.u32 %v262, 4294901760
        %1005 = vmatpush.msra.mxu0 %v1004
        %v1006 = vand.u32 %v261, 4294901760
        %1007 = vmatpush.msra.mxu0 %v1006
        %v1008 = vand.u32 %v260, 4294901760
        %1009 = vmatpush.msra.mxu0 %v1008
        %v1010 = vand.u32 %v259, 4294901760
        %1011 = vmatpush.msra.mxu0 %v1010
        %v1012 = vand.u32 %v258, 4294901760
        %1013 = vmatpush.msra.mxu0 %v1012
        %v1014 = vand.u32 %v257, 4294901760
        %1015 = vmatpush.msra.mxu0 %v1014
        %v1016 = vand.u32 %v256, 4294901760
        %1017 = vmatpush.msra.mxu0 %v1016
        %v1018 = vand.u32 %v255, 4294901760
        %1019 = vmatpush.msra.mxu0 %v1018
        %v1020 = vand.u32 %v254, 4294901760
        %1021 = vmatpush.msra.mxu0 %v1020
        %v1022 = vand.u32 %v253, 4294901760
        %1023 = vmatpush.msra.mxu0 %v1022
        %v1024 = vand.u32 %v252, 4294901760
        %1025 = vmatpush.msra.mxu0 %v1024
        %v1026 = vand.u32 %v251, 4294901760
        %1027 = vmatpush.msra.mxu0 %v1026
        %v1028 = vand.u32 %v250, 4294901760
        %1029 = vmatpush.msra.mxu0 %v1028
        %v1030 = vand.u32 %v249, 4294901760
        %1031 = vmatpush.msra.mxu0 %v1030
        %v1032 = vand.u32 %v248, 4294901760
        %1033 = vmatpush.msra.mxu0 %v1032
        %v1034 = vand.u32 %v247, 4294901760
        %1035 = vmatpush.msra.mxu0 %v1034
        %v1036 = vand.u32 %v245, 4294901760
        %1037 = vmatmul.f32.gmra.mxu0 %v1036
        %v1038 = vpop.f32.mrf.mxu0
        %v1039 = vadd.f32 %v998, %v1038
        %v1040 = vand.u32 %v246, 4294901760
        %1041 = vmatmul.f32.gmra.mxu0 %v1040
        %v1042 = vpop.f32.mrf.mxu0
        %v1043 = vadd.f32 %v1002, %v1042
        %1044 = vdwg.mxu0
        %v1045 = vld [vmem:[%s242 + $0x1] sm:$0xff]
        %v1046 = vld [vmem:[%s242 + $0x9] sm:$0xff]
        %s1047 = scalar_lea.vmem %s1, 1024
        %v1048 = vld [vmem:[%s1047] sm:$0xff]
        %v1049 = vld [vmem:[%s1047 + $0x8] sm:$0xff]
        %v1050 = vld [vmem:[%s1047 + $0x10] sm:$0xff]
        %v1051 = vld [vmem:[%s1047 + $0x18] sm:$0xff]
        %v1052 = vld [vmem:[%s1047 + $0x20] sm:$0xff]
        %v1053 = vld [vmem:[%s1047 + $0x28] sm:$0xff]
        %v1054 = vld [vmem:[%s1047 + $0x30] sm:$0xff]
        %v1055 = vld [vmem:[%s1047 + $0x38] sm:$0xff]
        %v1056 = vld [vmem:[%s1047 + $0x40] sm:$0xff]
        %v1057 = vld [vmem:[%s1047 + $0x48] sm:$0xff]
        %v1058 = vld [vmem:[%s1047 + $0x50] sm:$0xff]
        %v1059 = vld [vmem:[%s1047 + $0x58] sm:$0xff]
        %v1060 = vld [vmem:[%s1047 + $0x60] sm:$0xff]
        %v1061 = vld [vmem:[%s1047 + $0x68] sm:$0xff]
        %v1062 = vld [vmem:[%s1047 + $0x70] sm:$0xff]
        %v1063 = vld [vmem:[%s1047 + $0x78] sm:$0xff]
        %v1064 = vand.u32 %v1063, 4294901760
        %1065 = vmatpush.msra.mxu0 %v1064
        %v1066 = vand.u32 %v1062, 4294901760
        %1067 = vmatpush.msra.mxu0 %v1066
        %v1068 = vand.u32 %v1061, 4294901760
        %1069 = vmatpush.msra.mxu0 %v1068
        %v1070 = vand.u32 %v1060, 4294901760
        %1071 = vmatpush.msra.mxu0 %v1070
        %v1072 = vand.u32 %v1059, 4294901760
        %1073 = vmatpush.msra.mxu0 %v1072
        %v1074 = vand.u32 %v1058, 4294901760
        %1075 = vmatpush.msra.mxu0 %v1074
        %v1076 = vand.u32 %v1057, 4294901760
        %1077 = vmatpush.msra.mxu0 %v1076
        %v1078 = vand.u32 %v1056, 4294901760
        %1079 = vmatpush.msra.mxu0 %v1078
        %v1080 = vand.u32 %v1055, 4294901760
        %1081 = vmatpush.msra.mxu0 %v1080
        %v1082 = vand.u32 %v1054, 4294901760
        %1083 = vmatpush.msra.mxu0 %v1082
        %v1084 = vand.u32 %v1053, 4294901760
        %1085 = vmatpush.msra.mxu0 %v1084
        %v1086 = vand.u32 %v1052, 4294901760
        %1087 = vmatpush.msra.mxu0 %v1086
        %v1088 = vand.u32 %v1051, 4294901760
        %1089 = vmatpush.msra.mxu0 %v1088
        %v1090 = vand.u32 %v1050, 4294901760
        %1091 = vmatpush.msra.mxu0 %v1090
        %v1092 = vand.u32 %v1049, 4294901760
        %1093 = vmatpush.msra.mxu0 %v1092
        %v1094 = vand.u32 %v1048, 4294901760
        %1095 = vmatpush.msra.mxu0 %v1094
        %v1096 = vand.u32 %v1045, 4294901760
        %v1097 = vsub.f32 %v1045, %v1096
        %v1098 = vand.u32 %v1097, 4294901760
        %v1099 = vsub.f32 %v1097, %v1098
        %v1100 = vand.u32 %v1099, 4294901760
        %1101 = vmatmul.f32.gmra.mxu0 %v1100
        %v1102 = vpop.f32.mrf.mxu0
        %v1103 = vadd.f32 0.0, %v1102
        %v1104 = vand.u32 %v1046, 4294901760
        %v1105 = vsub.f32 %v1046, %v1104
        %v1106 = vand.u32 %v1105, 4294901760
        %v1107 = vsub.f32 %v1105, %v1106
        %v1108 = vand.u32 %v1107, 4294901760
        %1109 = vmatmul.f32.gmra.mxu0 %v1108
        %v1110 = vpop.f32.mrf.mxu0
        %v1111 = vadd.f32 0.0, %v1110
        %1112 = vdwg.mxu0
        %v1113 = vand.u32 %v1063, 4294901760
        %v1114 = vsub.f32 %v1063, %v1113
        %v1115 = vand.u32 %v1114, 4294901760
        %v1116 = vsub.f32 %v1114, %v1115
        %v1117 = vand.u32 %v1116, 4294901760
        %1118 = vmatpush.msra.mxu0 %v1117
        %v1119 = vand.u32 %v1062, 4294901760
        %v1120 = vsub.f32 %v1062, %v1119
        %v1121 = vand.u32 %v1120, 4294901760
        %v1122 = vsub.f32 %v1120, %v1121
        %v1123 = vand.u32 %v1122, 4294901760
        %1124 = vmatpush.msra.mxu0 %v1123
        %v1125 = vand.u32 %v1061, 4294901760
        %v1126 = vsub.f32 %v1061, %v1125
        %v1127 = vand.u32 %v1126, 4294901760
        %v1128 = vsub.f32 %v1126, %v1127
        %v1129 = vand.u32 %v1128, 4294901760
        %1130 = vmatpush.msra.mxu0 %v1129
        %v1131 = vand.u32 %v1060, 4294901760
        %v1132 = vsub.f32 %v1060, %v1131
        %v1133 = vand.u32 %v1132, 4294901760
        %v1134 = vsub.f32 %v1132, %v1133
        %v1135 = vand.u32 %v1134, 4294901760
        %1136 = vmatpush.msra.mxu0 %v1135
        %v1137 = vand.u32 %v1059, 4294901760
        %v1138 = vsub.f32 %v1059, %v1137
        %v1139 = vand.u32 %v1138, 4294901760
        %v1140 = vsub.f32 %v1138, %v1139
        %v1141 = vand.u32 %v1140, 4294901760
        %1142 = vmatpush.msra.mxu0 %v1141
        %v1143 = vand.u32 %v1058, 4294901760
        %v1144 = vsub.f32 %v1058, %v1143
        %v1145 = vand.u32 %v1144, 4294901760
        %v1146 = vsub.f32 %v1144, %v1145
        %v1147 = vand.u32 %v1146, 4294901760
        %1148 = vmatpush.msra.mxu0 %v1147
        %v1149 = vand.u32 %v1057, 4294901760
        %v1150 = vsub.f32 %v1057, %v1149
        %v1151 = vand.u32 %v1150, 4294901760
        %v1152 = vsub.f32 %v1150, %v1151
        %v1153 = vand.u32 %v1152, 4294901760
        %1154 = vmatpush.msra.mxu0 %v1153
        %v1155 = vand.u32 %v1056, 4294901760
        %v1156 = vsub.f32 %v1056, %v1155
        %v1157 = vand.u32 %v1156, 4294901760
        %v1158 = vsub.f32 %v1156, %v1157
        %v1159 = vand.u32 %v1158, 4294901760
        %1160 = vmatpush.msra.mxu0 %v1159
        %v1161 = vand.u32 %v1055, 4294901760
        %v1162 = vsub.f32 %v1055, %v1161
        %v1163 = vand.u32 %v1162, 4294901760
        %v1164 = vsub.f32 %v1162, %v1163
        %v1165 = vand.u32 %v1164, 4294901760
        %1166 = vmatpush.msra.mxu0 %v1165
        %v1167 = vand.u32 %v1054, 4294901760
        %v1168 = vsub.f32 %v1054, %v1167
        %v1169 = vand.u32 %v1168, 4294901760
        %v1170 = vsub.f32 %v1168, %v1169
        %v1171 = vand.u32 %v1170, 4294901760
        %1172 = vmatpush.msra.mxu0 %v1171
        %v1173 = vand.u32 %v1053, 4294901760
        %v1174 = vsub.f32 %v1053, %v1173
        %v1175 = vand.u32 %v1174, 4294901760
        %v1176 = vsub.f32 %v1174, %v1175
        %v1177 = vand.u32 %v1176, 4294901760
        %1178 = vmatpush.msra.mxu0 %v1177
        %v1179 = vand.u32 %v1052, 4294901760
        %v1180 = vsub.f32 %v1052, %v1179
        %v1181 = vand.u32 %v1180, 4294901760
        %v1182 = vsub.f32 %v1180, %v1181
        %v1183 = vand.u32 %v1182, 4294901760
        %1184 = vmatpush.msra.mxu0 %v1183
        %v1185 = vand.u32 %v1051, 4294901760
        %v1186 = vsub.f32 %v1051, %v1185
        %v1187 = vand.u32 %v1186, 4294901760
        %v1188 = vsub.f32 %v1186, %v1187
        %v1189 = vand.u32 %v1188, 4294901760
        %1190 = vmatpush.msra.mxu0 %v1189
        %v1191 = vand.u32 %v1050, 4294901760
        %v1192 = vsub.f32 %v1050, %v1191
        %v1193 = vand.u32 %v1192, 4294901760
        %v1194 = vsub.f32 %v1192, %v1193
        %v1195 = vand.u32 %v1194, 4294901760
        %1196 = vmatpush.msra.mxu0 %v1195
        %v1197 = vand.u32 %v1049, 4294901760
        %v1198 = vsub.f32 %v1049, %v1197
        %v1199 = vand.u32 %v1198, 4294901760
        %v1200 = vsub.f32 %v1198, %v1199
        %v1201 = vand.u32 %v1200, 4294901760
        %1202 = vmatpush.msra.mxu0 %v1201
        %v1203 = vand.u32 %v1048, 4294901760
        %v1204 = vsub.f32 %v1048, %v1203
        %v1205 = vand.u32 %v1204, 4294901760
        %v1206 = vsub.f32 %v1204, %v1205
        %v1207 = vand.u32 %v1206, 4294901760
        %1208 = vmatpush.msra.mxu0 %v1207
        %v1209 = vand.u32 %v1045, 4294901760
        %1210 = vmatmul.f32.gmra.mxu0 %v1209
        %v1211 = vpop.f32.mrf.mxu0
        %v1212 = vadd.f32 %v1103, %v1211
        %v1213 = vand.u32 %v1046, 4294901760
        %1214 = vmatmul.f32.gmra.mxu0 %v1213
        %v1215 = vpop.f32.mrf.mxu0
        %v1216 = vadd.f32 %v1111, %v1215
        %1217 = vdwg.mxu0
        %v1218 = vand.u32 %v1063, 4294901760
        %v1219 = vsub.f32 %v1063, %v1218
        %1220 = vmatpush.msra.mxu0 %v1219
        %v1221 = vand.u32 %v1062, 4294901760
        %v1222 = vsub.f32 %v1062, %v1221
        %1223 = vmatpush.msra.mxu0 %v1222
        %v1224 = vand.u32 %v1061, 4294901760
        %v1225 = vsub.f32 %v1061, %v1224
        %1226 = vmatpush.msra.mxu0 %v1225
        %v1227 = vand.u32 %v1060, 4294901760
        %v1228 = vsub.f32 %v1060, %v1227
        %1229 = vmatpush.msra.mxu0 %v1228
        %v1230 = vand.u32 %v1059, 4294901760
        %v1231 = vsub.f32 %v1059, %v1230
        %1232 = vmatpush.msra.mxu0 %v1231
        %v1233 = vand.u32 %v1058, 4294901760
        %v1234 = vsub.f32 %v1058, %v1233
        %1235 = vmatpush.msra.mxu0 %v1234
        %v1236 = vand.u32 %v1057, 4294901760
        %v1237 = vsub.f32 %v1057, %v1236
        %1238 = vmatpush.msra.mxu0 %v1237
        %v1239 = vand.u32 %v1056, 4294901760
        %v1240 = vsub.f32 %v1056, %v1239
        %1241 = vmatpush.msra.mxu0 %v1240
        %v1242 = vand.u32 %v1055, 4294901760
        %v1243 = vsub.f32 %v1055, %v1242
        %1244 = vmatpush.msra.mxu0 %v1243
        %v1245 = vand.u32 %v1054, 4294901760
        %v1246 = vsub.f32 %v1054, %v1245
        %1247 = vmatpush.msra.mxu0 %v1246
        %v1248 = vand.u32 %v1053, 4294901760
        %v1249 = vsub.f32 %v1053, %v1248
        %1250 = vmatpush.msra.mxu0 %v1249
        %v1251 = vand.u32 %v1052, 4294901760
        %v1252 = vsub.f32 %v1052, %v1251
        %1253 = vmatpush.msra.mxu0 %v1252
        %v1254 = vand.u32 %v1051, 4294901760
        %v1255 = vsub.f32 %v1051, %v1254
        %1256 = vmatpush.msra.mxu0 %v1255
        %v1257 = vand.u32 %v1050, 4294901760
        %v1258 = vsub.f32 %v1050, %v1257
        %1259 = vmatpush.msra.mxu0 %v1258
        %v1260 = vand.u32 %v1049, 4294901760
        %v1261 = vsub.f32 %v1049, %v1260
        %1262 = vmatpush.msra.mxu0 %v1261
        %v1263 = vand.u32 %v1048, 4294901760
        %v1264 = vsub.f32 %v1048, %v1263
        %1265 = vmatpush.msra.mxu0 %v1264
        %v1266 = vand.u32 %v1045, 4294901760
        %v1267 = vsub.f32 %v1045, %v1266
        %1268 = vmatmul.f32.gmra.mxu0 %v1267
        %v1269 = vpop.f32.mrf.mxu0
        %v1270 = vadd.f32 %v1212, %v1269
        %v1271 = vand.u32 %v1046, 4294901760
        %v1272 = vsub.f32 %v1046, %v1271
        %1273 = vmatmul.f32.gmra.mxu0 %v1272
        %v1274 = vpop.f32.mrf.mxu0
        %v1275 = vadd.f32 %v1216, %v1274
        %1276 = vdwg.mxu0
        %v1277 = vand.u32 %v1063, 4294901760
        %1278 = vmatpush.msra.mxu0 %v1277
        %v1279 = vand.u32 %v1062, 4294901760
        %1280 = vmatpush.msra.mxu0 %v1279
        %v1281 = vand.u32 %v1061, 4294901760
        %1282 = vmatpush.msra.mxu0 %v1281
        %v1283 = vand.u32 %v1060, 4294901760
        %1284 = vmatpush.msra.mxu0 %v1283
        %v1285 = vand.u32 %v1059, 4294901760
        %1286 = vmatpush.msra.mxu0 %v1285
        %v1287 = vand.u32 %v1058, 4294901760
        %1288 = vmatpush.msra.mxu0 %v1287
        %v1289 = vand.u32 %v1057, 4294901760
        %1290 = vmatpush.msra.mxu0 %v1289
        %v1291 = vand.u32 %v1056, 4294901760
        %1292 = vmatpush.msra.mxu0 %v1291
        %v1293 = vand.u32 %v1055, 4294901760
        %1294 = vmatpush.msra.mxu0 %v1293
        %v1295 = vand.u32 %v1054, 4294901760
        %1296 = vmatpush.msra.mxu0 %v1295
        %v1297 = vand.u32 %v1053, 4294901760
        %1298 = vmatpush.msra.mxu0 %v1297
        %v1299 = vand.u32 %v1052, 4294901760
        %1300 = vmatpush.msra.mxu0 %v1299
        %v1301 = vand.u32 %v1051, 4294901760
        %1302 = vmatpush.msra.mxu0 %v1301
        %v1303 = vand.u32 %v1050, 4294901760
        %1304 = vmatpush.msra.mxu0 %v1303
        %v1305 = vand.u32 %v1049, 4294901760
        %1306 = vmatpush.msra.mxu0 %v1305
        %v1307 = vand.u32 %v1048, 4294901760
        %1308 = vmatpush.msra.mxu0 %v1307
        %v1309 = vand.u32 %v1045, 4294901760
        %v1310 = vsub.f32 %v1045, %v1309
        %v1311 = vand.u32 %v1310, 4294901760
        %1312 = vmatmul.f32.gmra.mxu0 %v1311
        %v1313 = vpop.f32.mrf.mxu0
        %v1314 = vadd.f32 %v1270, %v1313
        %v1315 = vand.u32 %v1046, 4294901760
        %v1316 = vsub.f32 %v1046, %v1315
        %v1317 = vand.u32 %v1316, 4294901760
        %1318 = vmatmul.f32.gmra.mxu0 %v1317
        %v1319 = vpop.f32.mrf.mxu0
        %v1320 = vadd.f32 %v1275, %v1319
        %1321 = vdwg.mxu0
        %v1322 = vand.u32 %v1063, 4294901760
        %v1323 = vsub.f32 %v1063, %v1322
        %v1324 = vand.u32 %v1323, 4294901760
        %1325 = vmatpush.msra.mxu0 %v1324
        %v1326 = vand.u32 %v1062, 4294901760
        %v1327 = vsub.f32 %v1062, %v1326
        %v1328 = vand.u32 %v1327, 4294901760
        %1329 = vmatpush.msra.mxu0 %v1328
        %v1330 = vand.u32 %v1061, 4294901760
        %v1331 = vsub.f32 %v1061, %v1330
        %v1332 = vand.u32 %v1331, 4294901760
        %1333 = vmatpush.msra.mxu0 %v1332
        %v1334 = vand.u32 %v1060, 4294901760
        %v1335 = vsub.f32 %v1060, %v1334
        %v1336 = vand.u32 %v1335, 4294901760
        %1337 = vmatpush.msra.mxu0 %v1336
        %v1338 = vand.u32 %v1059, 4294901760
        %v1339 = vsub.f32 %v1059, %v1338
        %v1340 = vand.u32 %v1339, 4294901760
        %1341 = vmatpush.msra.mxu0 %v1340
        %v1342 = vand.u32 %v1058, 4294901760
        %v1343 = vsub.f32 %v1058, %v1342
        %v1344 = vand.u32 %v1343, 4294901760
        %1345 = vmatpush.msra.mxu0 %v1344
        %v1346 = vand.u32 %v1057, 4294901760
        %v1347 = vsub.f32 %v1057, %v1346
        %v1348 = vand.u32 %v1347, 4294901760
        %1349 = vmatpush.msra.mxu0 %v1348
        %v1350 = vand.u32 %v1056, 4294901760
        %v1351 = vsub.f32 %v1056, %v1350
        %v1352 = vand.u32 %v1351, 4294901760
        %1353 = vmatpush.msra.mxu0 %v1352
        %v1354 = vand.u32 %v1055, 4294901760
        %v1355 = vsub.f32 %v1055, %v1354
        %v1356 = vand.u32 %v1355, 4294901760
        %1357 = vmatpush.msra.mxu0 %v1356
        %v1358 = vand.u32 %v1054, 4294901760
        %v1359 = vsub.f32 %v1054, %v1358
        %v1360 = vand.u32 %v1359, 4294901760
        %1361 = vmatpush.msra.mxu0 %v1360
        %v1362 = vand.u32 %v1053, 4294901760
        %v1363 = vsub.f32 %v1053, %v1362
        %v1364 = vand.u32 %v1363, 4294901760
        %1365 = vmatpush.msra.mxu0 %v1364
        %v1366 = vand.u32 %v1052, 4294901760
        %v1367 = vsub.f32 %v1052, %v1366
        %v1368 = vand.u32 %v1367, 4294901760
        %1369 = vmatpush.msra.mxu0 %v1368
        %v1370 = vand.u32 %v1051, 4294901760
        %v1371 = vsub.f32 %v1051, %v1370
        %v1372 = vand.u32 %v1371, 4294901760
        %1373 = vmatpush.msra.mxu0 %v1372
        %v1374 = vand.u32 %v1050, 4294901760
        %v1375 = vsub.f32 %v1050, %v1374
        %v1376 = vand.u32 %v1375, 4294901760
        %1377 = vmatpush.msra.mxu0 %v1376
        %v1378 = vand.u32 %v1049, 4294901760
        %v1379 = vsub.f32 %v1049, %v1378
        %v1380 = vand.u32 %v1379, 4294901760
        %1381 = vmatpush.msra.mxu0 %v1380
        %v1382 = vand.u32 %v1048, 4294901760
        %v1383 = vsub.f32 %v1048, %v1382
        %v1384 = vand.u32 %v1383, 4294901760
        %1385 = vmatpush.msra.mxu0 %v1384
        %v1386 = vand.u32 %v1045, 4294901760
        %1387 = vmatmul.f32.gmra.mxu0 %v1386
        %v1388 = vpop.f32.mrf.mxu0
        %v1389 = vadd.f32 %v1314, %v1388
        %v1390 = vand.u32 %v1046, 4294901760
        %1391 = vmatmul.f32.gmra.mxu0 %v1390
        %v1392 = vpop.f32.mrf.mxu0
        %v1393 = vadd.f32 %v1320, %v1392
        %1394 = vdwg.mxu0
        %v1395 = vand.u32 %v1063, 4294901760
        %1396 = vmatpush.msra.mxu0 %v1395
        %v1397 = vand.u32 %v1062, 4294901760
        %1398 = vmatpush.msra.mxu0 %v1397
        %v1399 = vand.u32 %v1061, 4294901760
        %1400 = vmatpush.msra.mxu0 %v1399
        %v1401 = vand.u32 %v1060, 4294901760
        %1402 = vmatpush.msra.mxu0 %v1401
        %v1403 = vand.u32 %v1059, 4294901760
        %1404 = vmatpush.msra.mxu0 %v1403
        %v1405 = vand.u32 %v1058, 4294901760
        %1406 = vmatpush.msra.mxu0 %v1405
        %v1407 = vand.u32 %v1057, 4294901760
        %1408 = vmatpush.msra.mxu0 %v1407
        %v1409 = vand.u32 %v1056, 4294901760
        %1410 = vmatpush.msra.mxu0 %v1409
        %v1411 = vand.u32 %v1055, 4294901760
        %1412 = vmatpush.msra.mxu0 %v1411
        %v1413 = vand.u32 %v1054, 4294901760
        %1414 = vmatpush.msra.mxu0 %v1413
        %v1415 = vand.u32 %v1053, 4294901760
        %1416 = vmatpush.msra.mxu0 %v1415
        %v1417 = vand.u32 %v1052, 4294901760
        %1418 = vmatpush.msra.mxu0 %v1417
        %v1419 = vand.u32 %v1051, 4294901760
        %1420 = vmatpush.msra.mxu0 %v1419
        %v1421 = vand.u32 %v1050, 4294901760
        %1422 = vmatpush.msra.mxu0 %v1421
        %v1423 = vand.u32 %v1049, 4294901760
        %1424 = vmatpush.msra.mxu0 %v1423
        %v1425 = vand.u32 %v1048, 4294901760
        %1426 = vmatpush.msra.mxu0 %v1425
        %v1427 = vand.u32 %v1045, 4294901760
        %1428 = vmatmul.f32.gmra.mxu0 %v1427
        %v1429 = vpop.f32.mrf.mxu0
        %v1430 = vadd.f32 %v1389, %v1429
        %v1431 = vand.u32 %v1046, 4294901760
        %1432 = vmatmul.f32.gmra.mxu0 %v1431
        %v1433 = vpop.f32.mrf.mxu0
        %v1434 = vadd.f32 %v1393, %v1433
        %1435 = vdwg.mxu0
        %v1436 = vand.u32 %v281, 4294901760
        %1437 = vmatpush.msra.mxu0 %v1436
        %v1438 = vand.u32 %v280, 4294901760
        %1439 = vmatpush.msra.mxu0 %v1438
        %v1440 = vand.u32 %v279, 4294901760
        %1441 = vmatpush.msra.mxu0 %v1440
        %v1442 = vand.u32 %v278, 4294901760
        %1443 = vmatpush.msra.mxu0 %v1442
        %v1444 = vand.u32 %v277, 4294901760
        %1445 = vmatpush.msra.mxu0 %v1444
        %v1446 = vand.u32 %v276, 4294901760
        %1447 = vmatpush.msra.mxu0 %v1446
        %v1448 = vand.u32 %v275, 4294901760
        %1449 = vmatpush.msra.mxu0 %v1448
        %v1450 = vand.u32 %v274, 4294901760
        %1451 = vmatpush.msra.mxu0 %v1450
        %v1452 = vand.u32 %v273, 4294901760
        %1453 = vmatpush.msra.mxu0 %v1452
        %v1454 = vand.u32 %v272, 4294901760
        %1455 = vmatpush.msra.mxu0 %v1454
        %v1456 = vand.u32 %v271, 4294901760
        %1457 = vmatpush.msra.mxu0 %v1456
        %v1458 = vand.u32 %v270, 4294901760
        %1459 = vmatpush.msra.mxu0 %v1458
        %v1460 = vand.u32 %v269, 4294901760
        %1461 = vmatpush.msra.mxu0 %v1460
        %v1462 = vand.u32 %v268, 4294901760
        %1463 = vmatpush.msra.mxu0 %v1462
        %v1464 = vand.u32 %v267, 4294901760
        %1465 = vmatpush.msra.mxu0 %v1464
        %v1466 = vand.u32 %v266, 4294901760
        %1467 = vmatpush.msra.mxu0 %v1466
        %v1468 = vand.u32 %v263, 4294901760
        %v1469 = vsub.f32 %v263, %v1468
        %v1470 = vand.u32 %v1469, 4294901760
        %v1471 = vsub.f32 %v1469, %v1470
        %v1472 = vand.u32 %v1471, 4294901760
        %1473 = vmatmul.f32.gmra.mxu0 %v1472
        %v1474 = vpop.f32.mrf.mxu0
        %v1475 = vadd.f32 %v1430, %v1474
        %v1476 = vand.u32 %v264, 4294901760
        %v1477 = vsub.f32 %v264, %v1476
        %v1478 = vand.u32 %v1477, 4294901760
        %v1479 = vsub.f32 %v1477, %v1478
        %v1480 = vand.u32 %v1479, 4294901760
        %1481 = vmatmul.f32.gmra.mxu0 %v1480
        %v1482 = vpop.f32.mrf.mxu0
        %v1483 = vadd.f32 %v1434, %v1482
        %1484 = vdwg.mxu0
        %v1485 = vand.u32 %v281, 4294901760
        %v1486 = vsub.f32 %v281, %v1485
        %v1487 = vand.u32 %v1486, 4294901760
        %v1488 = vsub.f32 %v1486, %v1487
        %v1489 = vand.u32 %v1488, 4294901760
        %1490 = vmatpush.msra.mxu0 %v1489
        %v1491 = vand.u32 %v280, 4294901760
        %v1492 = vsub.f32 %v280, %v1491
        %v1493 = vand.u32 %v1492, 4294901760
        %v1494 = vsub.f32 %v1492, %v1493
        %v1495 = vand.u32 %v1494, 4294901760
        %1496 = vmatpush.msra.mxu0 %v1495
        %v1497 = vand.u32 %v279, 4294901760
        %v1498 = vsub.f32 %v279, %v1497
        %v1499 = vand.u32 %v1498, 4294901760
        %v1500 = vsub.f32 %v1498, %v1499
        %v1501 = vand.u32 %v1500, 4294901760
        %1502 = vmatpush.msra.mxu0 %v1501
        %v1503 = vand.u32 %v278, 4294901760
        %v1504 = vsub.f32 %v278, %v1503
        %v1505 = vand.u32 %v1504, 4294901760
        %v1506 = vsub.f32 %v1504, %v1505
        %v1507 = vand.u32 %v1506, 4294901760
        %1508 = vmatpush.msra.mxu0 %v1507
        %v1509 = vand.u32 %v277, 4294901760
        %v1510 = vsub.f32 %v277, %v1509
        %v1511 = vand.u32 %v1510, 4294901760
        %v1512 = vsub.f32 %v1510, %v1511
        %v1513 = vand.u32 %v1512, 4294901760
        %1514 = vmatpush.msra.mxu0 %v1513
        %v1515 = vand.u32 %v276, 4294901760
        %v1516 = vsub.f32 %v276, %v1515
        %v1517 = vand.u32 %v1516, 4294901760
        %v1518 = vsub.f32 %v1516, %v1517
        %v1519 = vand.u32 %v1518, 4294901760
        %1520 = vmatpush.msra.mxu0 %v1519
        %v1521 = vand.u32 %v275, 4294901760
        %v1522 = vsub.f32 %v275, %v1521
        %v1523 = vand.u32 %v1522, 4294901760
        %v1524 = vsub.f32 %v1522, %v1523
        %v1525 = vand.u32 %v1524, 4294901760
        %1526 = vmatpush.msra.mxu0 %v1525
        %v1527 = vand.u32 %v274, 4294901760
        %v1528 = vsub.f32 %v274, %v1527
        %v1529 = vand.u32 %v1528, 4294901760
        %v1530 = vsub.f32 %v1528, %v1529
        %v1531 = vand.u32 %v1530, 4294901760
        %1532 = vmatpush.msra.mxu0 %v1531
        %v1533 = vand.u32 %v273, 4294901760
        %v1534 = vsub.f32 %v273, %v1533
        %v1535 = vand.u32 %v1534, 4294901760
        %v1536 = vsub.f32 %v1534, %v1535
        %v1537 = vand.u32 %v1536, 4294901760
        %1538 = vmatpush.msra.mxu0 %v1537
        %v1539 = vand.u32 %v272, 4294901760
        %v1540 = vsub.f32 %v272, %v1539
        %v1541 = vand.u32 %v1540, 4294901760
        %v1542 = vsub.f32 %v1540, %v1541
        %v1543 = vand.u32 %v1542, 4294901760
        %1544 = vmatpush.msra.mxu0 %v1543
        %v1545 = vand.u32 %v271, 4294901760
        %v1546 = vsub.f32 %v271, %v1545
        %v1547 = vand.u32 %v1546, 4294901760
        %v1548 = vsub.f32 %v1546, %v1547
        %v1549 = vand.u32 %v1548, 4294901760
        %1550 = vmatpush.msra.mxu0 %v1549
        %v1551 = vand.u32 %v270, 4294901760
        %v1552 = vsub.f32 %v270, %v1551
        %v1553 = vand.u32 %v1552, 4294901760
        %v1554 = vsub.f32 %v1552, %v1553
        %v1555 = vand.u32 %v1554, 4294901760
        %1556 = vmatpush.msra.mxu0 %v1555
        %v1557 = vand.u32 %v269, 4294901760
        %v1558 = vsub.f32 %v269, %v1557
        %v1559 = vand.u32 %v1558, 4294901760
        %v1560 = vsub.f32 %v1558, %v1559
        %v1561 = vand.u32 %v1560, 4294901760
        %1562 = vmatpush.msra.mxu0 %v1561
        %v1563 = vand.u32 %v268, 4294901760
        %v1564 = vsub.f32 %v268, %v1563
        %v1565 = vand.u32 %v1564, 4294901760
        %v1566 = vsub.f32 %v1564, %v1565
        %v1567 = vand.u32 %v1566, 4294901760
        %1568 = vmatpush.msra.mxu0 %v1567
        %v1569 = vand.u32 %v267, 4294901760
        %v1570 = vsub.f32 %v267, %v1569
        %v1571 = vand.u32 %v1570, 4294901760
        %v1572 = vsub.f32 %v1570, %v1571
        %v1573 = vand.u32 %v1572, 4294901760
        %1574 = vmatpush.msra.mxu0 %v1573
        %v1575 = vand.u32 %v266, 4294901760
        %v1576 = vsub.f32 %v266, %v1575
        %v1577 = vand.u32 %v1576, 4294901760
        %v1578 = vsub.f32 %v1576, %v1577
        %v1579 = vand.u32 %v1578, 4294901760
        %1580 = vmatpush.msra.mxu0 %v1579
        %v1581 = vand.u32 %v263, 4294901760
        %1582 = vmatmul.f32.gmra.mxu0 %v1581
        %v1583 = vpop.f32.mrf.mxu0
        %v1584 = vadd.f32 %v1475, %v1583
        %v1585 = vand.u32 %v264, 4294901760
        %1586 = vmatmul.f32.gmra.mxu0 %v1585
        %v1587 = vpop.f32.mrf.mxu0
        %v1588 = vadd.f32 %v1483, %v1587
        %1589 = vdwg.mxu0
        %v1590 = vand.u32 %v281, 4294901760
        %v1591 = vsub.f32 %v281, %v1590
        %1592 = vmatpush.msra.mxu0 %v1591
        %v1593 = vand.u32 %v280, 4294901760
        %v1594 = vsub.f32 %v280, %v1593
        %1595 = vmatpush.msra.mxu0 %v1594
        %v1596 = vand.u32 %v279, 4294901760
        %v1597 = vsub.f32 %v279, %v1596
        %1598 = vmatpush.msra.mxu0 %v1597
        %v1599 = vand.u32 %v278, 4294901760
        %v1600 = vsub.f32 %v278, %v1599
        %1601 = vmatpush.msra.mxu0 %v1600
        %v1602 = vand.u32 %v277, 4294901760
        %v1603 = vsub.f32 %v277, %v1602
        %1604 = vmatpush.msra.mxu0 %v1603
        %v1605 = vand.u32 %v276, 4294901760
        %v1606 = vsub.f32 %v276, %v1605
        %1607 = vmatpush.msra.mxu0 %v1606
        %v1608 = vand.u32 %v275, 4294901760
        %v1609 = vsub.f32 %v275, %v1608
        %1610 = vmatpush.msra.mxu0 %v1609
        %v1611 = vand.u32 %v274, 4294901760
        %v1612 = vsub.f32 %v274, %v1611
        %1613 = vmatpush.msra.mxu0 %v1612
        %v1614 = vand.u32 %v273, 4294901760
        %v1615 = vsub.f32 %v273, %v1614
        %1616 = vmatpush.msra.mxu0 %v1615
        %v1617 = vand.u32 %v272, 4294901760
        %v1618 = vsub.f32 %v272, %v1617
        %1619 = vmatpush.msra.mxu0 %v1618
        %v1620 = vand.u32 %v271, 4294901760
        %v1621 = vsub.f32 %v271, %v1620
        %1622 = vmatpush.msra.mxu0 %v1621
        %v1623 = vand.u32 %v270, 4294901760
        %v1624 = vsub.f32 %v270, %v1623
        %1625 = vmatpush.msra.mxu0 %v1624
        %v1626 = vand.u32 %v269, 4294901760
        %v1627 = vsub.f32 %v269, %v1626
        %1628 = vmatpush.msra.mxu0 %v1627
        %v1629 = vand.u32 %v268, 4294901760
        %v1630 = vsub.f32 %v268, %v1629
        %1631 = vmatpush.msra.mxu0 %v1630
        %v1632 = vand.u32 %v267, 4294901760
        %v1633 = vsub.f32 %v267, %v1632
        %1634 = vmatpush.msra.mxu0 %v1633
        %v1635 = vand.u32 %v266, 4294901760
        %v1636 = vsub.f32 %v266, %v1635
        %1637 = vmatpush.msra.mxu0 %v1636
        %v1638 = vand.u32 %v263, 4294901760
        %v1639 = vsub.f32 %v263, %v1638
        %1640 = vmatmul.f32.gmra.mxu0 %v1639
        %v1641 = vpop.f32.mrf.mxu0
        %v1642 = vadd.f32 %v1584, %v1641
        %v1643 = vand.u32 %v264, 4294901760
        %v1644 = vsub.f32 %v264, %v1643
        %1645 = vmatmul.f32.gmra.mxu0 %v1644
        %v1646 = vpop.f32.mrf.mxu0
        %v1647 = vadd.f32 %v1588, %v1646
        %1648 = vdwg.mxu0
        %v1649 = vand.u32 %v281, 4294901760
        %1650 = vmatpush.msra.mxu0 %v1649
        %v1651 = vand.u32 %v280, 4294901760
        %1652 = vmatpush.msra.mxu0 %v1651
        %v1653 = vand.u32 %v279, 4294901760
        %1654 = vmatpush.msra.mxu0 %v1653
        %v1655 = vand.u32 %v278, 4294901760
        %1656 = vmatpush.msra.mxu0 %v1655
        %v1657 = vand.u32 %v277, 4294901760
        %1658 = vmatpush.msra.mxu0 %v1657
        %v1659 = vand.u32 %v276, 4294901760
        %1660 = vmatpush.msra.mxu0 %v1659
        %v1661 = vand.u32 %v275, 4294901760
        %1662 = vmatpush.msra.mxu0 %v1661
        %v1663 = vand.u32 %v274, 4294901760
        %1664 = vmatpush.msra.mxu0 %v1663
        %v1665 = vand.u32 %v273, 4294901760
        %1666 = vmatpush.msra.mxu0 %v1665
        %v1667 = vand.u32 %v272, 4294901760
        %1668 = vmatpush.msra.mxu0 %v1667
        %v1669 = vand.u32 %v271, 4294901760
        %1670 = vmatpush.msra.mxu0 %v1669
        %v1671 = vand.u32 %v270, 4294901760
        %1672 = vmatpush.msra.mxu0 %v1671
        %v1673 = vand.u32 %v269, 4294901760
        %1674 = vmatpush.msra.mxu0 %v1673
        %v1675 = vand.u32 %v268, 4294901760
        %1676 = vmatpush.msra.mxu0 %v1675
        %v1677 = vand.u32 %v267, 4294901760
        %1678 = vmatpush.msra.mxu0 %v1677
        %v1679 = vand.u32 %v266, 4294901760
        %1680 = vmatpush.msra.mxu0 %v1679
        %v1681 = vand.u32 %v263, 4294901760
        %v1682 = vsub.f32 %v263, %v1681
        %v1683 = vand.u32 %v1682, 4294901760
        %1684 = vmatmul.f32.gmra.mxu0 %v1683
        %v1685 = vpop.f32.mrf.mxu0
        %v1686 = vadd.f32 %v1642, %v1685
        %v1687 = vand.u32 %v264, 4294901760
        %v1688 = vsub.f32 %v264, %v1687
        %v1689 = vand.u32 %v1688, 4294901760
        %1690 = vmatmul.f32.gmra.mxu0 %v1689
        %v1691 = vpop.f32.mrf.mxu0
        %v1692 = vadd.f32 %v1647, %v1691
        %1693 = vdwg.mxu0
        %v1694 = vand.u32 %v281, 4294901760
        %v1695 = vsub.f32 %v281, %v1694
        %v1696 = vand.u32 %v1695, 4294901760
        %1697 = vmatpush.msra.mxu0 %v1696
        %v1698 = vand.u32 %v280, 4294901760
        %v1699 = vsub.f32 %v280, %v1698
        %v1700 = vand.u32 %v1699, 4294901760
        %1701 = vmatpush.msra.mxu0 %v1700
        %v1702 = vand.u32 %v279, 4294901760
        %v1703 = vsub.f32 %v279, %v1702
        %v1704 = vand.u32 %v1703, 4294901760
        %1705 = vmatpush.msra.mxu0 %v1704
        %v1706 = vand.u32 %v278, 4294901760
        %v1707 = vsub.f32 %v278, %v1706
        %v1708 = vand.u32 %v1707, 4294901760
        %1709 = vmatpush.msra.mxu0 %v1708
        %v1710 = vand.u32 %v277, 4294901760
        %v1711 = vsub.f32 %v277, %v1710
        %v1712 = vand.u32 %v1711, 4294901760
        %1713 = vmatpush.msra.mxu0 %v1712
        %v1714 = vand.u32 %v276, 4294901760
        %v1715 = vsub.f32 %v276, %v1714
        %v1716 = vand.u32 %v1715, 4294901760
        %1717 = vmatpush.msra.mxu0 %v1716
        %v1718 = vand.u32 %v275, 4294901760
        %v1719 = vsub.f32 %v275, %v1718
        %v1720 = vand.u32 %v1719, 4294901760
        %1721 = vmatpush.msra.mxu0 %v1720
        %v1722 = vand.u32 %v274, 4294901760
        %v1723 = vsub.f32 %v274, %v1722
        %v1724 = vand.u32 %v1723, 4294901760
        %1725 = vmatpush.msra.mxu0 %v1724
        %v1726 = vand.u32 %v273, 4294901760
        %v1727 = vsub.f32 %v273, %v1726
        %v1728 = vand.u32 %v1727, 4294901760
        %1729 = vmatpush.msra.mxu0 %v1728
        %v1730 = vand.u32 %v272, 4294901760
        %v1731 = vsub.f32 %v272, %v1730
        %v1732 = vand.u32 %v1731, 4294901760
        %1733 = vmatpush.msra.mxu0 %v1732
        %v1734 = vand.u32 %v271, 4294901760
        %v1735 = vsub.f32 %v271, %v1734
        %v1736 = vand.u32 %v1735, 4294901760
        %1737 = vmatpush.msra.mxu0 %v1736
        %v1738 = vand.u32 %v270, 4294901760
        %v1739 = vsub.f32 %v270, %v1738
        %v1740 = vand.u32 %v1739, 4294901760
        %1741 = vmatpush.msra.mxu0 %v1740
        %v1742 = vand.u32 %v269, 4294901760
        %v1743 = vsub.f32 %v269, %v1742
        %v1744 = vand.u32 %v1743, 4294901760
        %1745 = vmatpush.msra.mxu0 %v1744
        %v1746 = vand.u32 %v268, 4294901760
        %v1747 = vsub.f32 %v268, %v1746
        %v1748 = vand.u32 %v1747, 4294901760
        %1749 = vmatpush.msra.mxu0 %v1748
        %v1750 = vand.u32 %v267, 4294901760
        %v1751 = vsub.f32 %v267, %v1750
        %v1752 = vand.u32 %v1751, 4294901760
        %1753 = vmatpush.msra.mxu0 %v1752
        %v1754 = vand.u32 %v266, 4294901760
        %v1755 = vsub.f32 %v266, %v1754
        %v1756 = vand.u32 %v1755, 4294901760
        %1757 = vmatpush.msra.mxu0 %v1756
        %v1758 = vand.u32 %v263, 4294901760
        %1759 = vmatmul.f32.gmra.mxu0 %v1758
        %v1760 = vpop.f32.mrf.mxu0
        %v1761 = vadd.f32 %v1686, %v1760
        %v1762 = vand.u32 %v264, 4294901760
        %1763 = vmatmul.f32.gmra.mxu0 %v1762
        %v1764 = vpop.f32.mrf.mxu0
        %v1765 = vadd.f32 %v1692, %v1764
        %1766 = vdwg.mxu0
        %v1767 = vand.u32 %v281, 4294901760
        %1768 = vmatpush.msra.mxu0 %v1767
        %v1769 = vand.u32 %v280, 4294901760
        %1770 = vmatpush.msra.mxu0 %v1769
        %v1771 = vand.u32 %v279, 4294901760
        %1772 = vmatpush.msra.mxu0 %v1771
        %v1773 = vand.u32 %v278, 4294901760
        %1774 = vmatpush.msra.mxu0 %v1773
        %v1775 = vand.u32 %v277, 4294901760
        %1776 = vmatpush.msra.mxu0 %v1775
        %v1777 = vand.u32 %v276, 4294901760
        %1778 = vmatpush.msra.mxu0 %v1777
        %v1779 = vand.u32 %v275, 4294901760
        %1780 = vmatpush.msra.mxu0 %v1779
        %v1781 = vand.u32 %v274, 4294901760
        %1782 = vmatpush.msra.mxu0 %v1781
        %v1783 = vand.u32 %v273, 4294901760
        %1784 = vmatpush.msra.mxu0 %v1783
        %v1785 = vand.u32 %v272, 4294901760
        %1786 = vmatpush.msra.mxu0 %v1785
        %v1787 = vand.u32 %v271, 4294901760
        %1788 = vmatpush.msra.mxu0 %v1787
        %v1789 = vand.u32 %v270, 4294901760
        %1790 = vmatpush.msra.mxu0 %v1789
        %v1791 = vand.u32 %v269, 4294901760
        %1792 = vmatpush.msra.mxu0 %v1791
        %v1793 = vand.u32 %v268, 4294901760
        %1794 = vmatpush.msra.mxu0 %v1793
        %v1795 = vand.u32 %v267, 4294901760
        %1796 = vmatpush.msra.mxu0 %v1795
        %v1797 = vand.u32 %v266, 4294901760
        %1798 = vmatpush.msra.mxu0 %v1797
        %v1799 = vand.u32 %v263, 4294901760
        %1800 = vmatmul.f32.gmra.mxu0 %v1799
        %v1801 = vpop.f32.mrf.mxu0
        %v1802 = vadd.f32 %v1761, %v1801
        %v1803 = vand.u32 %v264, 4294901760
        %1804 = vmatmul.f32.gmra.mxu0 %v1803
        %v1805 = vpop.f32.mrf.mxu0
        %v1806 = vadd.f32 %v1765, %v1805
        %1807 = vdwg.mxu0
        %v1808 = vld [vmem:[#allocation4 + $0x2] sm:$0xff]
        %v1809 = vld [vmem:[#allocation4 + $0xa] sm:$0xff]
        %s1810 = scalar_lea.vmem %s1, 256
        %v1811 = vld [vmem:[%s1810] sm:$0xff]
        %v1812 = vld [vmem:[%s1810 + $0x8] sm:$0xff]
        %v1813 = vld [vmem:[%s1810 + $0x10] sm:$0xff]
        %v1814 = vld [vmem:[%s1810 + $0x18] sm:$0xff]
        %v1815 = vld [vmem:[%s1810 + $0x20] sm:$0xff]
        %v1816 = vld [vmem:[%s1810 + $0x28] sm:$0xff]
        %v1817 = vld [vmem:[%s1810 + $0x30] sm:$0xff]
        %v1818 = vld [vmem:[%s1810 + $0x38] sm:$0xff]
        %v1819 = vld [vmem:[%s1810 + $0x40] sm:$0xff]
        %v1820 = vld [vmem:[%s1810 + $0x48] sm:$0xff]
        %v1821 = vld [vmem:[%s1810 + $0x50] sm:$0xff]
        %v1822 = vld [vmem:[%s1810 + $0x58] sm:$0xff]
        %v1823 = vld [vmem:[%s1810 + $0x60] sm:$0xff]
        %v1824 = vld [vmem:[%s1810 + $0x68] sm:$0xff]
        %v1825 = vld [vmem:[%s1810 + $0x70] sm:$0xff]
        %v1826 = vld [vmem:[%s1810 + $0x78] sm:$0xff]
        %v1827 = vand.u32 %v1826, 4294901760
        %1828 = vmatpush.msra.mxu0 %v1827
        %v1829 = vand.u32 %v1825, 4294901760
        %1830 = vmatpush.msra.mxu0 %v1829
        %v1831 = vand.u32 %v1824, 4294901760
        %1832 = vmatpush.msra.mxu0 %v1831
        %v1833 = vand.u32 %v1823, 4294901760
        %1834 = vmatpush.msra.mxu0 %v1833
        %v1835 = vand.u32 %v1822, 4294901760
        %1836 = vmatpush.msra.mxu0 %v1835
        %v1837 = vand.u32 %v1821, 4294901760
        %1838 = vmatpush.msra.mxu0 %v1837
        %v1839 = vand.u32 %v1820, 4294901760
        %1840 = vmatpush.msra.mxu0 %v1839
        %v1841 = vand.u32 %v1819, 4294901760
        %1842 = vmatpush.msra.mxu0 %v1841
        %v1843 = vand.u32 %v1818, 4294901760
        %1844 = vmatpush.msra.mxu0 %v1843
        %v1845 = vand.u32 %v1817, 4294901760
        %1846 = vmatpush.msra.mxu0 %v1845
        %v1847 = vand.u32 %v1816, 4294901760
        %1848 = vmatpush.msra.mxu0 %v1847
        %v1849 = vand.u32 %v1815, 4294901760
        %1850 = vmatpush.msra.mxu0 %v1849
        %v1851 = vand.u32 %v1814, 4294901760
        %1852 = vmatpush.msra.mxu0 %v1851
        %v1853 = vand.u32 %v1813, 4294901760
        %1854 = vmatpush.msra.mxu0 %v1853
        %v1855 = vand.u32 %v1812, 4294901760
        %1856 = vmatpush.msra.mxu0 %v1855
        %v1857 = vand.u32 %v1811, 4294901760
        %1858 = vmatpush.msra.mxu0 %v1857
        %v1859 = vand.u32 %v1808, 4294901760
        %v1860 = vsub.f32 %v1808, %v1859
        %v1861 = vand.u32 %v1860, 4294901760
        %v1862 = vsub.f32 %v1860, %v1861
        %v1863 = vand.u32 %v1862, 4294901760
        %1864 = vmatmul.f32.gmra.mxu0 %v1863
        %v1865 = vpop.f32.mrf.mxu0
        %v1866 = vadd.f32 0.0, %v1865
        %v1867 = vand.u32 %v1809, 4294901760
        %v1868 = vsub.f32 %v1809, %v1867
        %v1869 = vand.u32 %v1868, 4294901760
        %v1870 = vsub.f32 %v1868, %v1869
        %v1871 = vand.u32 %v1870, 4294901760
        %1872 = vmatmul.f32.gmra.mxu0 %v1871
        %v1873 = vpop.f32.mrf.mxu0
        %v1874 = vadd.f32 0.0, %v1873
        %1875 = vdwg.mxu0
        %v1876 = vand.u32 %v1826, 4294901760
        %v1877 = vsub.f32 %v1826, %v1876
        %v1878 = vand.u32 %v1877, 4294901760
        %v1879 = vsub.f32 %v1877, %v1878
        %v1880 = vand.u32 %v1879, 4294901760
        %1881 = vmatpush.msra.mxu0 %v1880
        %v1882 = vand.u32 %v1825, 4294901760
        %v1883 = vsub.f32 %v1825, %v1882
        %v1884 = vand.u32 %v1883, 4294901760
        %v1885 = vsub.f32 %v1883, %v1884
        %v1886 = vand.u32 %v1885, 4294901760
        %1887 = vmatpush.msra.mxu0 %v1886
        %v1888 = vand.u32 %v1824, 4294901760
        %v1889 = vsub.f32 %v1824, %v1888
        %v1890 = vand.u32 %v1889, 4294901760
        %v1891 = vsub.f32 %v1889, %v1890
        %v1892 = vand.u32 %v1891, 4294901760
        %1893 = vmatpush.msra.mxu0 %v1892
        %v1894 = vand.u32 %v1823, 4294901760
        %v1895 = vsub.f32 %v1823, %v1894
        %v1896 = vand.u32 %v1895, 4294901760
        %v1897 = vsub.f32 %v1895, %v1896
        %v1898 = vand.u32 %v1897, 4294901760
        %1899 = vmatpush.msra.mxu0 %v1898
        %v1900 = vand.u32 %v1822, 4294901760
        %v1901 = vsub.f32 %v1822, %v1900
        %v1902 = vand.u32 %v1901, 4294901760
        %v1903 = vsub.f32 %v1901, %v1902
        %v1904 = vand.u32 %v1903, 4294901760
        %1905 = vmatpush.msra.mxu0 %v1904
        %v1906 = vand.u32 %v1821, 4294901760
        %v1907 = vsub.f32 %v1821, %v1906
        %v1908 = vand.u32 %v1907, 4294901760
        %v1909 = vsub.f32 %v1907, %v1908
        %v1910 = vand.u32 %v1909, 4294901760
        %1911 = vmatpush.msra.mxu0 %v1910
        %v1912 = vand.u32 %v1820, 4294901760
        %v1913 = vsub.f32 %v1820, %v1912
        %v1914 = vand.u32 %v1913, 4294901760
        %v1915 = vsub.f32 %v1913, %v1914
        %v1916 = vand.u32 %v1915, 4294901760
        %1917 = vmatpush.msra.mxu0 %v1916
        %v1918 = vand.u32 %v1819, 4294901760
        %v1919 = vsub.f32 %v1819, %v1918
        %v1920 = vand.u32 %v1919, 4294901760
        %v1921 = vsub.f32 %v1919, %v1920
        %v1922 = vand.u32 %v1921, 4294901760
        %1923 = vmatpush.msra.mxu0 %v1922
        %v1924 = vand.u32 %v1818, 4294901760
        %v1925 = vsub.f32 %v1818, %v1924
        %v1926 = vand.u32 %v1925, 4294901760
        %v1927 = vsub.f32 %v1925, %v1926
        %v1928 = vand.u32 %v1927, 4294901760
        %1929 = vmatpush.msra.mxu0 %v1928
        %v1930 = vand.u32 %v1817, 4294901760
        %v1931 = vsub.f32 %v1817, %v1930
        %v1932 = vand.u32 %v1931, 4294901760
        %v1933 = vsub.f32 %v1931, %v1932
        %v1934 = vand.u32 %v1933, 4294901760
        %1935 = vmatpush.msra.mxu0 %v1934
        %v1936 = vand.u32 %v1816, 4294901760
        %v1937 = vsub.f32 %v1816, %v1936
        %v1938 = vand.u32 %v1937, 4294901760
        %v1939 = vsub.f32 %v1937, %v1938
        %v1940 = vand.u32 %v1939, 4294901760
        %1941 = vmatpush.msra.mxu0 %v1940
        %v1942 = vand.u32 %v1815, 4294901760
        %v1943 = vsub.f32 %v1815, %v1942
        %v1944 = vand.u32 %v1943, 4294901760
        %v1945 = vsub.f32 %v1943, %v1944
        %v1946 = vand.u32 %v1945, 4294901760
        %1947 = vmatpush.msra.mxu0 %v1946
        %v1948 = vand.u32 %v1814, 4294901760
        %v1949 = vsub.f32 %v1814, %v1948
        %v1950 = vand.u32 %v1949, 4294901760
        %v1951 = vsub.f32 %v1949, %v1950
        %v1952 = vand.u32 %v1951, 4294901760
        %1953 = vmatpush.msra.mxu0 %v1952
        %v1954 = vand.u32 %v1813, 4294901760
        %v1955 = vsub.f32 %v1813, %v1954
        %v1956 = vand.u32 %v1955, 4294901760
        %v1957 = vsub.f32 %v1955, %v1956
        %v1958 = vand.u32 %v1957, 4294901760
        %1959 = vmatpush.msra.mxu0 %v1958
        %v1960 = vand.u32 %v1812, 4294901760
        %v1961 = vsub.f32 %v1812, %v1960
        %v1962 = vand.u32 %v1961, 4294901760
        %v1963 = vsub.f32 %v1961, %v1962
        %v1964 = vand.u32 %v1963, 4294901760
        %1965 = vmatpush.msra.mxu0 %v1964
        %v1966 = vand.u32 %v1811, 4294901760
        %v1967 = vsub.f32 %v1811, %v1966
        %v1968 = vand.u32 %v1967, 4294901760
        %v1969 = vsub.f32 %v1967, %v1968
        %v1970 = vand.u32 %v1969, 4294901760
        %1971 = vmatpush.msra.mxu0 %v1970
        %v1972 = vand.u32 %v1808, 4294901760
        %1973 = vmatmul.f32.gmra.mxu0 %v1972
        %v1974 = vpop.f32.mrf.mxu0
        %v1975 = vadd.f32 %v1866, %v1974
        %v1976 = vand.u32 %v1809, 4294901760
        %1977 = vmatmul.f32.gmra.mxu0 %v1976
        %v1978 = vpop.f32.mrf.mxu0
        %v1979 = vadd.f32 %v1874, %v1978
        %1980 = vdwg.mxu0
        %v1981 = vand.u32 %v1826, 4294901760
        %v1982 = vsub.f32 %v1826, %v1981
        %1983 = vmatpush.msra.mxu0 %v1982
        %v1984 = vand.u32 %v1825, 4294901760
        %v1985 = vsub.f32 %v1825, %v1984
        %1986 = vmatpush.msra.mxu0 %v1985
        %v1987 = vand.u32 %v1824, 4294901760
        %v1988 = vsub.f32 %v1824, %v1987
        %1989 = vmatpush.msra.mxu0 %v1988
        %v1990 = vand.u32 %v1823, 4294901760
        %v1991 = vsub.f32 %v1823, %v1990
        %1992 = vmatpush.msra.mxu0 %v1991
        %v1993 = vand.u32 %v1822, 4294901760
        %v1994 = vsub.f32 %v1822, %v1993
        %1995 = vmatpush.msra.mxu0 %v1994
        %v1996 = vand.u32 %v1821, 4294901760
        %v1997 = vsub.f32 %v1821, %v1996
        %1998 = vmatpush.msra.mxu0 %v1997
        %v1999 = vand.u32 %v1820, 4294901760
        %v2000 = vsub.f32 %v1820, %v1999
        %2001 = vmatpush.msra.mxu0 %v2000
        %v2002 = vand.u32 %v1819, 4294901760
        %v2003 = vsub.f32 %v1819, %v2002
        %2004 = vmatpush.msra.mxu0 %v2003
        %v2005 = vand.u32 %v1818, 4294901760
        %v2006 = vsub.f32 %v1818, %v2005
        %2007 = vmatpush.msra.mxu0 %v2006
        %v2008 = vand.u32 %v1817, 4294901760
        %v2009 = vsub.f32 %v1817, %v2008
        %2010 = vmatpush.msra.mxu0 %v2009
        %v2011 = vand.u32 %v1816, 4294901760
        %v2012 = vsub.f32 %v1816, %v2011
        %2013 = vmatpush.msra.mxu0 %v2012
        %v2014 = vand.u32 %v1815, 4294901760
        %v2015 = vsub.f32 %v1815, %v2014
        %2016 = vmatpush.msra.mxu0 %v2015
        %v2017 = vand.u32 %v1814, 4294901760
        %v2018 = vsub.f32 %v1814, %v2017
        %2019 = vmatpush.msra.mxu0 %v2018
        %v2020 = vand.u32 %v1813, 4294901760
        %v2021 = vsub.f32 %v1813, %v2020
        %2022 = vmatpush.msra.mxu0 %v2021
        %v2023 = vand.u32 %v1812, 4294901760
        %v2024 = vsub.f32 %v1812, %v2023
        %2025 = vmatpush.msra.mxu0 %v2024
        %v2026 = vand.u32 %v1811, 4294901760
        %v2027 = vsub.f32 %v1811, %v2026
        %2028 = vmatpush.msra.mxu0 %v2027
        %v2029 = vand.u32 %v1808, 4294901760
        %v2030 = vsub.f32 %v1808, %v2029
        %2031 = vmatmul.f32.gmra.mxu0 %v2030
        %v2032 = vpop.f32.mrf.mxu0
        %v2033 = vadd.f32 %v1975, %v2032
        %v2034 = vand.u32 %v1809, 4294901760
        %v2035 = vsub.f32 %v1809, %v2034
        %2036 = vmatmul.f32.gmra.mxu0 %v2035
        %v2037 = vpop.f32.mrf.mxu0
        %v2038 = vadd.f32 %v1979, %v2037
        %2039 = vdwg.mxu0
        %v2040 = vand.u32 %v1826, 4294901760
        %2041 = vmatpush.msra.mxu0 %v2040
        %v2042 = vand.u32 %v1825, 4294901760
        %2043 = vmatpush.msra.mxu0 %v2042
        %v2044 = vand.u32 %v1824, 4294901760
        %2045 = vmatpush.msra.mxu0 %v2044
        %v2046 = vand.u32 %v1823, 4294901760
        %2047 = vmatpush.msra.mxu0 %v2046
        %v2048 = vand.u32 %v1822, 4294901760
        %2049 = vmatpush.msra.mxu0 %v2048
        %v2050 = vand.u32 %v1821, 4294901760
        %2051 = vmatpush.msra.mxu0 %v2050
        %v2052 = vand.u32 %v1820, 4294901760
        %2053 = vmatpush.msra.mxu0 %v2052
        %v2054 = vand.u32 %v1819, 4294901760
        %2055 = vmatpush.msra.mxu0 %v2054
        %v2056 = vand.u32 %v1818, 4294901760
        %2057 = vmatpush.msra.mxu0 %v2056
        %v2058 = vand.u32 %v1817, 4294901760
        %2059 = vmatpush.msra.mxu0 %v2058
        %v2060 = vand.u32 %v1816, 4294901760
        %2061 = vmatpush.msra.mxu0 %v2060
        %v2062 = vand.u32 %v1815, 4294901760
        %2063 = vmatpush.msra.mxu0 %v2062
        %v2064 = vand.u32 %v1814, 4294901760
        %2065 = vmatpush.msra.mxu0 %v2064
        %v2066 = vand.u32 %v1813, 4294901760
        %2067 = vmatpush.msra.mxu0 %v2066
        %v2068 = vand.u32 %v1812, 4294901760
        %2069 = vmatpush.msra.mxu0 %v2068
        %v2070 = vand.u32 %v1811, 4294901760
        %2071 = vmatpush.msra.mxu0 %v2070
        %v2072 = vand.u32 %v1808, 4294901760
        %v2073 = vsub.f32 %v1808, %v2072
        %v2074 = vand.u32 %v2073, 4294901760
        %2075 = vmatmul.f32.gmra.mxu0 %v2074
        %v2076 = vpop.f32.mrf.mxu0
        %v2077 = vadd.f32 %v2033, %v2076
        %v2078 = vand.u32 %v1809, 4294901760
        %v2079 = vsub.f32 %v1809, %v2078
        %v2080 = vand.u32 %v2079, 4294901760
        %2081 = vmatmul.f32.gmra.mxu0 %v2080
        %v2082 = vpop.f32.mrf.mxu0
        %v2083 = vadd.f32 %v2038, %v2082
        %2084 = vdwg.mxu0
        %v2085 = vand.u32 %v1826, 4294901760
        %v2086 = vsub.f32 %v1826, %v2085
        %v2087 = vand.u32 %v2086, 4294901760
        %2088 = vmatpush.msra.mxu0 %v2087
        %v2089 = vand.u32 %v1825, 4294901760
        %v2090 = vsub.f32 %v1825, %v2089
        %v2091 = vand.u32 %v2090, 4294901760
        %2092 = vmatpush.msra.mxu0 %v2091
        %v2093 = vand.u32 %v1824, 4294901760
        %v2094 = vsub.f32 %v1824, %v2093
        %v2095 = vand.u32 %v2094, 4294901760
        %2096 = vmatpush.msra.mxu0 %v2095
        %v2097 = vand.u32 %v1823, 4294901760
        %v2098 = vsub.f32 %v1823, %v2097
        %v2099 = vand.u32 %v2098, 4294901760
        %2100 = vmatpush.msra.mxu0 %v2099
        %v2101 = vand.u32 %v1822, 4294901760
        %v2102 = vsub.f32 %v1822, %v2101
        %v2103 = vand.u32 %v2102, 4294901760
        %2104 = vmatpush.msra.mxu0 %v2103
        %v2105 = vand.u32 %v1821, 4294901760
        %v2106 = vsub.f32 %v1821, %v2105
        %v2107 = vand.u32 %v2106, 4294901760
        %2108 = vmatpush.msra.mxu0 %v2107
        %v2109 = vand.u32 %v1820, 4294901760
        %v2110 = vsub.f32 %v1820, %v2109
        %v2111 = vand.u32 %v2110, 4294901760
        %2112 = vmatpush.msra.mxu0 %v2111
        %v2113 = vand.u32 %v1819, 4294901760
        %v2114 = vsub.f32 %v1819, %v2113
        %v2115 = vand.u32 %v2114, 4294901760
        %2116 = vmatpush.msra.mxu0 %v2115
        %v2117 = vand.u32 %v1818, 4294901760
        %v2118 = vsub.f32 %v1818, %v2117
        %v2119 = vand.u32 %v2118, 4294901760
        %2120 = vmatpush.msra.mxu0 %v2119
        %v2121 = vand.u32 %v1817, 4294901760
        %v2122 = vsub.f32 %v1817, %v2121
        %v2123 = vand.u32 %v2122, 4294901760
        %2124 = vmatpush.msra.mxu0 %v2123
        %v2125 = vand.u32 %v1816, 4294901760
        %v2126 = vsub.f32 %v1816, %v2125
        %v2127 = vand.u32 %v2126, 4294901760
        %2128 = vmatpush.msra.mxu0 %v2127
        %v2129 = vand.u32 %v1815, 4294901760
        %v2130 = vsub.f32 %v1815, %v2129
        %v2131 = vand.u32 %v2130, 4294901760
        %2132 = vmatpush.msra.mxu0 %v2131
        %v2133 = vand.u32 %v1814, 4294901760
        %v2134 = vsub.f32 %v1814, %v2133
        %v2135 = vand.u32 %v2134, 4294901760
        %2136 = vmatpush.msra.mxu0 %v2135
        %v2137 = vand.u32 %v1813, 4294901760
        %v2138 = vsub.f32 %v1813, %v2137
        %v2139 = vand.u32 %v2138, 4294901760
        %2140 = vmatpush.msra.mxu0 %v2139
        %v2141 = vand.u32 %v1812, 4294901760
        %v2142 = vsub.f32 %v1812, %v2141
        %v2143 = vand.u32 %v2142, 4294901760
        %2144 = vmatpush.msra.mxu0 %v2143
        %v2145 = vand.u32 %v1811, 4294901760
        %v2146 = vsub.f32 %v1811, %v2145
        %v2147 = vand.u32 %v2146, 4294901760
        %2148 = vmatpush.msra.mxu0 %v2147
        %v2149 = vand.u32 %v1808, 4294901760
        %2150 = vmatmul.f32.gmra.mxu0 %v2149
        %v2151 = vpop.f32.mrf.mxu0
        %v2152 = vadd.f32 %v2077, %v2151
        %v2153 = vand.u32 %v1809, 4294901760
        %2154 = vmatmul.f32.gmra.mxu0 %v2153
        %v2155 = vpop.f32.mrf.mxu0
        %v2156 = vadd.f32 %v2083, %v2155
        %2157 = vdwg.mxu0
        %v2158 = vand.u32 %v1826, 4294901760
        %2159 = vmatpush.msra.mxu0 %v2158
        %v2160 = vand.u32 %v1825, 4294901760
        %2161 = vmatpush.msra.mxu0 %v2160
        %v2162 = vand.u32 %v1824, 4294901760
        %2163 = vmatpush.msra.mxu0 %v2162
        %v2164 = vand.u32 %v1823, 4294901760
        %2165 = vmatpush.msra.mxu0 %v2164
        %v2166 = vand.u32 %v1822, 4294901760
        %2167 = vmatpush.msra.mxu0 %v2166
        %v2168 = vand.u32 %v1821, 4294901760
        %2169 = vmatpush.msra.mxu0 %v2168
        %v2170 = vand.u32 %v1820, 4294901760
        %2171 = vmatpush.msra.mxu0 %v2170
        %v2172 = vand.u32 %v1819, 4294901760
        %2173 = vmatpush.msra.mxu0 %v2172
        %v2174 = vand.u32 %v1818, 4294901760
        %2175 = vmatpush.msra.mxu0 %v2174
        %v2176 = vand.u32 %v1817, 4294901760
        %2177 = vmatpush.msra.mxu0 %v2176
        %v2178 = vand.u32 %v1816, 4294901760
        %2179 = vmatpush.msra.mxu0 %v2178
        %v2180 = vand.u32 %v1815, 4294901760
        %2181 = vmatpush.msra.mxu0 %v2180
        %v2182 = vand.u32 %v1814, 4294901760
        %2183 = vmatpush.msra.mxu0 %v2182
        %v2184 = vand.u32 %v1813, 4294901760
        %2185 = vmatpush.msra.mxu0 %v2184
        %v2186 = vand.u32 %v1812, 4294901760
        %2187 = vmatpush.msra.mxu0 %v2186
        %v2188 = vand.u32 %v1811, 4294901760
        %2189 = vmatpush.msra.mxu0 %v2188
        %v2190 = vand.u32 %v1808, 4294901760
        %2191 = vmatmul.f32.gmra.mxu0 %v2190
        %v2192 = vpop.f32.mrf.mxu0
        %v2193 = vadd.f32 %v2152, %v2192
        %v2194 = vand.u32 %v1809, 4294901760
        %2195 = vmatmul.f32.gmra.mxu0 %v2194
        %v2196 = vpop.f32.mrf.mxu0
        %v2197 = vadd.f32 %v2156, %v2196
        %2198 = vdwg.mxu0
        %v2199 = vadd.f32 %v1039, %v2193
        %v2200 = vadd.f32 %v1043, %v2197
        %v2201 = vld [vmem:[%s242 + $0x2] sm:$0xff]
        %v2202 = vld [vmem:[%s242 + $0xa] sm:$0xff]
        %s2203 = scalar_lea.vmem %s1, 1152
        %v2204 = vld [vmem:[%s2203] sm:$0xff]
        %v2205 = vld [vmem:[%s2203 + $0x8] sm:$0xff]
        %v2206 = vld [vmem:[%s2203 + $0x10] sm:$0xff]
        %v2207 = vld [vmem:[%s2203 + $0x18] sm:$0xff]
        %v2208 = vld [vmem:[%s2203 + $0x20] sm:$0xff]
        %v2209 = vld [vmem:[%s2203 + $0x28] sm:$0xff]
        %v2210 = vld [vmem:[%s2203 + $0x30] sm:$0xff]
        %v2211 = vld [vmem:[%s2203 + $0x38] sm:$0xff]
        %v2212 = vld [vmem:[%s2203 + $0x40] sm:$0xff]
        %v2213 = vld [vmem:[%s2203 + $0x48] sm:$0xff]
        %v2214 = vld [vmem:[%s2203 + $0x50] sm:$0xff]
        %v2215 = vld [vmem:[%s2203 + $0x58] sm:$0xff]
        %v2216 = vld [vmem:[%s2203 + $0x60] sm:$0xff]
        %v2217 = vld [vmem:[%s2203 + $0x68] sm:$0xff]
        %v2218 = vld [vmem:[%s2203 + $0x70] sm:$0xff]
        %v2219 = vld [vmem:[%s2203 + $0x78] sm:$0xff]
        %v2220 = vand.u32 %v2219, 4294901760
        %2221 = vmatpush.msra.mxu0 %v2220
        %v2222 = vand.u32 %v2218, 4294901760
        %2223 = vmatpush.msra.mxu0 %v2222
        %v2224 = vand.u32 %v2217, 4294901760
        %2225 = vmatpush.msra.mxu0 %v2224
        %v2226 = vand.u32 %v2216, 4294901760
        %2227 = vmatpush.msra.mxu0 %v2226
        %v2228 = vand.u32 %v2215, 4294901760
        %2229 = vmatpush.msra.mxu0 %v2228
        %v2230 = vand.u32 %v2214, 4294901760
        %2231 = vmatpush.msra.mxu0 %v2230
        %v2232 = vand.u32 %v2213, 4294901760
        %2233 = vmatpush.msra.mxu0 %v2232
        %v2234 = vand.u32 %v2212, 4294901760
        %2235 = vmatpush.msra.mxu0 %v2234
        %v2236 = vand.u32 %v2211, 4294901760
        %2237 = vmatpush.msra.mxu0 %v2236
        %v2238 = vand.u32 %v2210, 4294901760
        %2239 = vmatpush.msra.mxu0 %v2238
        %v2240 = vand.u32 %v2209, 4294901760
        %2241 = vmatpush.msra.mxu0 %v2240
        %v2242 = vand.u32 %v2208, 4294901760
        %2243 = vmatpush.msra.mxu0 %v2242
        %v2244 = vand.u32 %v2207, 4294901760
        %2245 = vmatpush.msra.mxu0 %v2244
        %v2246 = vand.u32 %v2206, 4294901760
        %2247 = vmatpush.msra.mxu0 %v2246
        %v2248 = vand.u32 %v2205, 4294901760
        %2249 = vmatpush.msra.mxu0 %v2248
        %v2250 = vand.u32 %v2204, 4294901760
        %2251 = vmatpush.msra.mxu0 %v2250
        %v2252 = vand.u32 %v2201, 4294901760
        %v2253 = vsub.f32 %v2201, %v2252
        %v2254 = vand.u32 %v2253, 4294901760
        %v2255 = vsub.f32 %v2253, %v2254
        %v2256 = vand.u32 %v2255, 4294901760
        %2257 = vmatmul.f32.gmra.mxu0 %v2256
        %v2258 = vpop.f32.mrf.mxu0
        %v2259 = vadd.f32 0.0, %v2258
        %v2260 = vand.u32 %v2202, 4294901760
        %v2261 = vsub.f32 %v2202, %v2260
        %v2262 = vand.u32 %v2261, 4294901760
        %v2263 = vsub.f32 %v2261, %v2262
        %v2264 = vand.u32 %v2263, 4294901760
        %2265 = vmatmul.f32.gmra.mxu0 %v2264
        %v2266 = vpop.f32.mrf.mxu0
        %v2267 = vadd.f32 0.0, %v2266
        %2268 = vdwg.mxu0
        %v2269 = vand.u32 %v2219, 4294901760
        %v2270 = vsub.f32 %v2219, %v2269
        %v2271 = vand.u32 %v2270, 4294901760
        %v2272 = vsub.f32 %v2270, %v2271
        %v2273 = vand.u32 %v2272, 4294901760
        %2274 = vmatpush.msra.mxu0 %v2273
        %v2275 = vand.u32 %v2218, 4294901760
        %v2276 = vsub.f32 %v2218, %v2275
        %v2277 = vand.u32 %v2276, 4294901760
        %v2278 = vsub.f32 %v2276, %v2277
        %v2279 = vand.u32 %v2278, 4294901760
        %2280 = vmatpush.msra.mxu0 %v2279
        %v2281 = vand.u32 %v2217, 4294901760
        %v2282 = vsub.f32 %v2217, %v2281
        %v2283 = vand.u32 %v2282, 4294901760
        %v2284 = vsub.f32 %v2282, %v2283
        %v2285 = vand.u32 %v2284, 4294901760
        %2286 = vmatpush.msra.mxu0 %v2285
        %v2287 = vand.u32 %v2216, 4294901760
        %v2288 = vsub.f32 %v2216, %v2287
        %v2289 = vand.u32 %v2288, 4294901760
        %v2290 = vsub.f32 %v2288, %v2289
        %v2291 = vand.u32 %v2290, 4294901760
        %2292 = vmatpush.msra.mxu0 %v2291
        %v2293 = vand.u32 %v2215, 4294901760
        %v2294 = vsub.f32 %v2215, %v2293
        %v2295 = vand.u32 %v2294, 4294901760
        %v2296 = vsub.f32 %v2294, %v2295
        %v2297 = vand.u32 %v2296, 4294901760
        %2298 = vmatpush.msra.mxu0 %v2297
        %v2299 = vand.u32 %v2214, 4294901760
        %v2300 = vsub.f32 %v2214, %v2299
        %v2301 = vand.u32 %v2300, 4294901760
        %v2302 = vsub.f32 %v2300, %v2301
        %v2303 = vand.u32 %v2302, 4294901760
        %2304 = vmatpush.msra.mxu0 %v2303
        %v2305 = vand.u32 %v2213, 4294901760
        %v2306 = vsub.f32 %v2213, %v2305
        %v2307 = vand.u32 %v2306, 4294901760
        %v2308 = vsub.f32 %v2306, %v2307
        %v2309 = vand.u32 %v2308, 4294901760
        %2310 = vmatpush.msra.mxu0 %v2309
        %v2311 = vand.u32 %v2212, 4294901760
        %v2312 = vsub.f32 %v2212, %v2311
        %v2313 = vand.u32 %v2312, 4294901760
        %v2314 = vsub.f32 %v2312, %v2313
        %v2315 = vand.u32 %v2314, 4294901760
        %2316 = vmatpush.msra.mxu0 %v2315
        %v2317 = vand.u32 %v2211, 4294901760
        %v2318 = vsub.f32 %v2211, %v2317
        %v2319 = vand.u32 %v2318, 4294901760
        %v2320 = vsub.f32 %v2318, %v2319
        %v2321 = vand.u32 %v2320, 4294901760
        %2322 = vmatpush.msra.mxu0 %v2321
        %v2323 = vand.u32 %v2210, 4294901760
        %v2324 = vsub.f32 %v2210, %v2323
        %v2325 = vand.u32 %v2324, 4294901760
        %v2326 = vsub.f32 %v2324, %v2325
        %v2327 = vand.u32 %v2326, 4294901760
        %2328 = vmatpush.msra.mxu0 %v2327
        %v2329 = vand.u32 %v2209, 4294901760
        %v2330 = vsub.f32 %v2209, %v2329
        %v2331 = vand.u32 %v2330, 4294901760
        %v2332 = vsub.f32 %v2330, %v2331
        %v2333 = vand.u32 %v2332, 4294901760
        %2334 = vmatpush.msra.mxu0 %v2333
        %v2335 = vand.u32 %v2208, 4294901760
        %v2336 = vsub.f32 %v2208, %v2335
        %v2337 = vand.u32 %v2336, 4294901760
        %v2338 = vsub.f32 %v2336, %v2337
        %v2339 = vand.u32 %v2338, 4294901760
        %2340 = vmatpush.msra.mxu0 %v2339
        %v2341 = vand.u32 %v2207, 4294901760
        %v2342 = vsub.f32 %v2207, %v2341
        %v2343 = vand.u32 %v2342, 4294901760
        %v2344 = vsub.f32 %v2342, %v2343
        %v2345 = vand.u32 %v2344, 4294901760
        %2346 = vmatpush.msra.mxu0 %v2345
        %v2347 = vand.u32 %v2206, 4294901760
        %v2348 = vsub.f32 %v2206, %v2347
        %v2349 = vand.u32 %v2348, 4294901760
        %v2350 = vsub.f32 %v2348, %v2349
        %v2351 = vand.u32 %v2350, 4294901760
        %2352 = vmatpush.msra.mxu0 %v2351
        %v2353 = vand.u32 %v2205, 4294901760
        %v2354 = vsub.f32 %v2205, %v2353
        %v2355 = vand.u32 %v2354, 4294901760
        %v2356 = vsub.f32 %v2354, %v2355
        %v2357 = vand.u32 %v2356, 4294901760
        %2358 = vmatpush.msra.mxu0 %v2357
        %v2359 = vand.u32 %v2204, 4294901760
        %v2360 = vsub.f32 %v2204, %v2359
        %v2361 = vand.u32 %v2360, 4294901760
        %v2362 = vsub.f32 %v2360, %v2361
        %v2363 = vand.u32 %v2362, 4294901760
        %2364 = vmatpush.msra.mxu0 %v2363
        %v2365 = vand.u32 %v2201, 4294901760
        %2366 = vmatmul.f32.gmra.mxu0 %v2365
        %v2367 = vpop.f32.mrf.mxu0
        %v2368 = vadd.f32 %v2259, %v2367
        %v2369 = vand.u32 %v2202, 4294901760
        %2370 = vmatmul.f32.gmra.mxu0 %v2369
        %v2371 = vpop.f32.mrf.mxu0
        %v2372 = vadd.f32 %v2267, %v2371
        %2373 = vdwg.mxu0
        %v2374 = vand.u32 %v2219, 4294901760
        %v2375 = vsub.f32 %v2219, %v2374
        %2376 = vmatpush.msra.mxu0 %v2375
        %v2377 = vand.u32 %v2218, 4294901760
        %v2378 = vsub.f32 %v2218, %v2377
        %2379 = vmatpush.msra.mxu0 %v2378
        %v2380 = vand.u32 %v2217, 4294901760
        %v2381 = vsub.f32 %v2217, %v2380
        %2382 = vmatpush.msra.mxu0 %v2381
        %v2383 = vand.u32 %v2216, 4294901760
        %v2384 = vsub.f32 %v2216, %v2383
        %2385 = vmatpush.msra.mxu0 %v2384
        %v2386 = vand.u32 %v2215, 4294901760
        %v2387 = vsub.f32 %v2215, %v2386
        %2388 = vmatpush.msra.mxu0 %v2387
        %v2389 = vand.u32 %v2214, 4294901760
        %v2390 = vsub.f32 %v2214, %v2389
        %2391 = vmatpush.msra.mxu0 %v2390
        %v2392 = vand.u32 %v2213, 4294901760
        %v2393 = vsub.f32 %v2213, %v2392
        %2394 = vmatpush.msra.mxu0 %v2393
        %v2395 = vand.u32 %v2212, 4294901760
        %v2396 = vsub.f32 %v2212, %v2395
        %2397 = vmatpush.msra.mxu0 %v2396
        %v2398 = vand.u32 %v2211, 4294901760
        %v2399 = vsub.f32 %v2211, %v2398
        %2400 = vmatpush.msra.mxu0 %v2399
        %v2401 = vand.u32 %v2210, 4294901760
        %v2402 = vsub.f32 %v2210, %v2401
        %2403 = vmatpush.msra.mxu0 %v2402
        %v2404 = vand.u32 %v2209, 4294901760
        %v2405 = vsub.f32 %v2209, %v2404
        %2406 = vmatpush.msra.mxu0 %v2405
        %v2407 = vand.u32 %v2208, 4294901760
        %v2408 = vsub.f32 %v2208, %v2407
        %2409 = vmatpush.msra.mxu0 %v2408
        %v2410 = vand.u32 %v2207, 4294901760
        %v2411 = vsub.f32 %v2207, %v2410
        %2412 = vmatpush.msra.mxu0 %v2411
        %v2413 = vand.u32 %v2206, 4294901760
        %v2414 = vsub.f32 %v2206, %v2413
        %2415 = vmatpush.msra.mxu0 %v2414
        %v2416 = vand.u32 %v2205, 4294901760
        %v2417 = vsub.f32 %v2205, %v2416
        %2418 = vmatpush.msra.mxu0 %v2417
        %v2419 = vand.u32 %v2204, 4294901760
        %v2420 = vsub.f32 %v2204, %v2419
        %2421 = vmatpush.msra.mxu0 %v2420
        %v2422 = vand.u32 %v2201, 4294901760
        %v2423 = vsub.f32 %v2201, %v2422
        %2424 = vmatmul.f32.gmra.mxu0 %v2423
        %v2425 = vpop.f32.mrf.mxu0
        %v2426 = vadd.f32 %v2368, %v2425
        %v2427 = vand.u32 %v2202, 4294901760
        %v2428 = vsub.f32 %v2202, %v2427
        %2429 = vmatmul.f32.gmra.mxu0 %v2428
        %v2430 = vpop.f32.mrf.mxu0
        %v2431 = vadd.f32 %v2372, %v2430
        %2432 = vdwg.mxu0
        %v2433 = vand.u32 %v2219, 4294901760
        %2434 = vmatpush.msra.mxu0 %v2433
        %v2435 = vand.u32 %v2218, 4294901760
        %2436 = vmatpush.msra.mxu0 %v2435
        %v2437 = vand.u32 %v2217, 4294901760
        %2438 = vmatpush.msra.mxu0 %v2437
        %v2439 = vand.u32 %v2216, 4294901760
        %2440 = vmatpush.msra.mxu0 %v2439
        %v2441 = vand.u32 %v2215, 4294901760
        %2442 = vmatpush.msra.mxu0 %v2441
        %v2443 = vand.u32 %v2214, 4294901760
        %2444 = vmatpush.msra.mxu0 %v2443
        %v2445 = vand.u32 %v2213, 4294901760
        %2446 = vmatpush.msra.mxu0 %v2445
        %v2447 = vand.u32 %v2212, 4294901760
        %2448 = vmatpush.msra.mxu0 %v2447
        %v2449 = vand.u32 %v2211, 4294901760
        %2450 = vmatpush.msra.mxu0 %v2449
        %v2451 = vand.u32 %v2210, 4294901760
        %2452 = vmatpush.msra.mxu0 %v2451
        %v2453 = vand.u32 %v2209, 4294901760
        %2454 = vmatpush.msra.mxu0 %v2453
        %v2455 = vand.u32 %v2208, 4294901760
        %2456 = vmatpush.msra.mxu0 %v2455
        %v2457 = vand.u32 %v2207, 4294901760
        %2458 = vmatpush.msra.mxu0 %v2457
        %v2459 = vand.u32 %v2206, 4294901760
        %2460 = vmatpush.msra.mxu0 %v2459
        %v2461 = vand.u32 %v2205, 4294901760
        %2462 = vmatpush.msra.mxu0 %v2461
        %v2463 = vand.u32 %v2204, 4294901760
        %2464 = vmatpush.msra.mxu0 %v2463
        %v2465 = vand.u32 %v2201, 4294901760
        %v2466 = vsub.f32 %v2201, %v2465
        %v2467 = vand.u32 %v2466, 4294901760
        %2468 = vmatmul.f32.gmra.mxu0 %v2467
        %v2469 = vpop.f32.mrf.mxu0
        %v2470 = vadd.f32 %v2426, %v2469
        %v2471 = vand.u32 %v2202, 4294901760
        %v2472 = vsub.f32 %v2202, %v2471
        %v2473 = vand.u32 %v2472, 4294901760
        %2474 = vmatmul.f32.gmra.mxu0 %v2473
        %v2475 = vpop.f32.mrf.mxu0
        %v2476 = vadd.f32 %v2431, %v2475
        %2477 = vdwg.mxu0
        %v2478 = vand.u32 %v2219, 4294901760
        %v2479 = vsub.f32 %v2219, %v2478
        %v2480 = vand.u32 %v2479, 4294901760
        %2481 = vmatpush.msra.mxu0 %v2480
        %v2482 = vand.u32 %v2218, 4294901760
        %v2483 = vsub.f32 %v2218, %v2482
        %v2484 = vand.u32 %v2483, 4294901760
        %2485 = vmatpush.msra.mxu0 %v2484
        %v2486 = vand.u32 %v2217, 4294901760
        %v2487 = vsub.f32 %v2217, %v2486
        %v2488 = vand.u32 %v2487, 4294901760
        %2489 = vmatpush.msra.mxu0 %v2488
        %v2490 = vand.u32 %v2216, 4294901760
        %v2491 = vsub.f32 %v2216, %v2490
        %v2492 = vand.u32 %v2491, 4294901760
        %2493 = vmatpush.msra.mxu0 %v2492
        %v2494 = vand.u32 %v2215, 4294901760
        %v2495 = vsub.f32 %v2215, %v2494
        %v2496 = vand.u32 %v2495, 4294901760
        %2497 = vmatpush.msra.mxu0 %v2496
        %v2498 = vand.u32 %v2214, 4294901760
        %v2499 = vsub.f32 %v2214, %v2498
        %v2500 = vand.u32 %v2499, 4294901760
        %2501 = vmatpush.msra.mxu0 %v2500
        %v2502 = vand.u32 %v2213, 4294901760
        %v2503 = vsub.f32 %v2213, %v2502
        %v2504 = vand.u32 %v2503, 4294901760
        %2505 = vmatpush.msra.mxu0 %v2504
        %v2506 = vand.u32 %v2212, 4294901760
        %v2507 = vsub.f32 %v2212, %v2506
        %v2508 = vand.u32 %v2507, 4294901760
        %2509 = vmatpush.msra.mxu0 %v2508
        %v2510 = vand.u32 %v2211, 4294901760
        %v2511 = vsub.f32 %v2211, %v2510
        %v2512 = vand.u32 %v2511, 4294901760
        %2513 = vmatpush.msra.mxu0 %v2512
        %v2514 = vand.u32 %v2210, 4294901760
        %v2515 = vsub.f32 %v2210, %v2514
        %v2516 = vand.u32 %v2515, 4294901760
        %2517 = vmatpush.msra.mxu0 %v2516
        %v2518 = vand.u32 %v2209, 4294901760
        %v2519 = vsub.f32 %v2209, %v2518
        %v2520 = vand.u32 %v2519, 4294901760
        %2521 = vmatpush.msra.mxu0 %v2520
        %v2522 = vand.u32 %v2208, 4294901760
        %v2523 = vsub.f32 %v2208, %v2522
        %v2524 = vand.u32 %v2523, 4294901760
        %2525 = vmatpush.msra.mxu0 %v2524
        %v2526 = vand.u32 %v2207, 4294901760
        %v2527 = vsub.f32 %v2207, %v2526
        %v2528 = vand.u32 %v2527, 4294901760
        %2529 = vmatpush.msra.mxu0 %v2528
        %v2530 = vand.u32 %v2206, 4294901760
        %v2531 = vsub.f32 %v2206, %v2530
        %v2532 = vand.u32 %v2531, 4294901760
        %2533 = vmatpush.msra.mxu0 %v2532
        %v2534 = vand.u32 %v2205, 4294901760
        %v2535 = vsub.f32 %v2205, %v2534
        %v2536 = vand.u32 %v2535, 4294901760
        %2537 = vmatpush.msra.mxu0 %v2536
        %v2538 = vand.u32 %v2204, 4294901760
        %v2539 = vsub.f32 %v2204, %v2538
        %v2540 = vand.u32 %v2539, 4294901760
        %2541 = vmatpush.msra.mxu0 %v2540
        %v2542 = vand.u32 %v2201, 4294901760
        %2543 = vmatmul.f32.gmra.mxu0 %v2542
        %v2544 = vpop.f32.mrf.mxu0
        %v2545 = vadd.f32 %v2470, %v2544
        %v2546 = vand.u32 %v2202, 4294901760
        %2547 = vmatmul.f32.gmra.mxu0 %v2546
        %v2548 = vpop.f32.mrf.mxu0
        %v2549 = vadd.f32 %v2476, %v2548
        %2550 = vdwg.mxu0
        %v2551 = vand.u32 %v2219, 4294901760
        %2552 = vmatpush.msra.mxu0 %v2551
        %v2553 = vand.u32 %v2218, 4294901760
        %2554 = vmatpush.msra.mxu0 %v2553
        %v2555 = vand.u32 %v2217, 4294901760
        %2556 = vmatpush.msra.mxu0 %v2555
        %v2557 = vand.u32 %v2216, 4294901760
        %2558 = vmatpush.msra.mxu0 %v2557
        %v2559 = vand.u32 %v2215, 4294901760
        %2560 = vmatpush.msra.mxu0 %v2559
        %v2561 = vand.u32 %v2214, 4294901760
        %2562 = vmatpush.msra.mxu0 %v2561
        %v2563 = vand.u32 %v2213, 4294901760
        %2564 = vmatpush.msra.mxu0 %v2563
        %v2565 = vand.u32 %v2212, 4294901760
        %2566 = vmatpush.msra.mxu0 %v2565
        %v2567 = vand.u32 %v2211, 4294901760
        %2568 = vmatpush.msra.mxu0 %v2567
        %v2569 = vand.u32 %v2210, 4294901760
        %2570 = vmatpush.msra.mxu0 %v2569
        %v2571 = vand.u32 %v2209, 4294901760
        %2572 = vmatpush.msra.mxu0 %v2571
        %v2573 = vand.u32 %v2208, 4294901760
        %2574 = vmatpush.msra.mxu0 %v2573
        %v2575 = vand.u32 %v2207, 4294901760
        %2576 = vmatpush.msra.mxu0 %v2575
        %v2577 = vand.u32 %v2206, 4294901760
        %2578 = vmatpush.msra.mxu0 %v2577
        %v2579 = vand.u32 %v2205, 4294901760
        %2580 = vmatpush.msra.mxu0 %v2579
        %v2581 = vand.u32 %v2204, 4294901760
        %2582 = vmatpush.msra.mxu0 %v2581
        %v2583 = vand.u32 %v2201, 4294901760
        %2584 = vmatmul.f32.gmra.mxu0 %v2583
        %v2585 = vpop.f32.mrf.mxu0
        %v2586 = vadd.f32 %v2545, %v2585
        %v2587 = vand.u32 %v2202, 4294901760
        %2588 = vmatmul.f32.gmra.mxu0 %v2587
        %v2589 = vpop.f32.mrf.mxu0
        %v2590 = vadd.f32 %v2549, %v2589
        %2591 = vdwg.mxu0
        %v2592 = vadd.f32 %v1802, %v2586
        %v2593 = vadd.f32 %v1806, %v2590
        %v2594 = vld [vmem:[#allocation4 + $0x3] sm:$0xff]
        %v2595 = vld [vmem:[#allocation4 + $0xb] sm:$0xff]
        %s2596 = scalar_lea.vmem %s1, 384
        %v2597 = vld [vmem:[%s2596] sm:$0xff]
        %v2598 = vld [vmem:[%s2596 + $0x8] sm:$0xff]
        %v2599 = vld [vmem:[%s2596 + $0x10] sm:$0xff]
        %v2600 = vld [vmem:[%s2596 + $0x18] sm:$0xff]
        %v2601 = vld [vmem:[%s2596 + $0x20] sm:$0xff]
        %v2602 = vld [vmem:[%s2596 + $0x28] sm:$0xff]
        %v2603 = vld [vmem:[%s2596 + $0x30] sm:$0xff]
        %v2604 = vld [vmem:[%s2596 + $0x38] sm:$0xff]
        %v2605 = vld [vmem:[%s2596 + $0x40] sm:$0xff]
        %v2606 = vld [vmem:[%s2596 + $0x48] sm:$0xff]
        %v2607 = vld [vmem:[%s2596 + $0x50] sm:$0xff]
        %v2608 = vld [vmem:[%s2596 + $0x58] sm:$0xff]
        %v2609 = vld [vmem:[%s2596 + $0x60] sm:$0xff]
        %v2610 = vld [vmem:[%s2596 + $0x68] sm:$0xff]
        %v2611 = vld [vmem:[%s2596 + $0x70] sm:$0xff]
        %v2612 = vld [vmem:[%s2596 + $0x78] sm:$0xff]
        %v2613 = vand.u32 %v2612, 4294901760
        %2614 = vmatpush.msra.mxu0 %v2613
        %v2615 = vand.u32 %v2611, 4294901760
        %2616 = vmatpush.msra.mxu0 %v2615
        %v2617 = vand.u32 %v2610, 4294901760
        %2618 = vmatpush.msra.mxu0 %v2617
        %v2619 = vand.u32 %v2609, 4294901760
        %2620 = vmatpush.msra.mxu0 %v2619
        %v2621 = vand.u32 %v2608, 4294901760
        %2622 = vmatpush.msra.mxu0 %v2621
        %v2623 = vand.u32 %v2607, 4294901760
        %2624 = vmatpush.msra.mxu0 %v2623
        %v2625 = vand.u32 %v2606, 4294901760
        %2626 = vmatpush.msra.mxu0 %v2625
        %v2627 = vand.u32 %v2605, 4294901760
        %2628 = vmatpush.msra.mxu0 %v2627
        %v2629 = vand.u32 %v2604, 4294901760
        %2630 = vmatpush.msra.mxu0 %v2629
        %v2631 = vand.u32 %v2603, 4294901760
        %2632 = vmatpush.msra.mxu0 %v2631
        %v2633 = vand.u32 %v2602, 4294901760
        %2634 = vmatpush.msra.mxu0 %v2633
        %v2635 = vand.u32 %v2601, 4294901760
        %2636 = vmatpush.msra.mxu0 %v2635
        %v2637 = vand.u32 %v2600, 4294901760
        %2638 = vmatpush.msra.mxu0 %v2637
        %v2639 = vand.u32 %v2599, 4294901760
        %2640 = vmatpush.msra.mxu0 %v2639
        %v2641 = vand.u32 %v2598, 4294901760
        %2642 = vmatpush.msra.mxu0 %v2641
        %v2643 = vand.u32 %v2597, 4294901760
        %2644 = vmatpush.msra.mxu0 %v2643
        %v2645 = vand.u32 %v2594, 4294901760
        %v2646 = vsub.f32 %v2594, %v2645
        %v2647 = vand.u32 %v2646, 4294901760
        %v2648 = vsub.f32 %v2646, %v2647
        %v2649 = vand.u32 %v2648, 4294901760
        %2650 = vmatmul.f32.gmra.mxu0 %v2649
        %v2651 = vpop.f32.mrf.mxu0
        %v2652 = vadd.f32 0.0, %v2651
        %v2653 = vand.u32 %v2595, 4294901760
        %v2654 = vsub.f32 %v2595, %v2653
        %v2655 = vand.u32 %v2654, 4294901760
        %v2656 = vsub.f32 %v2654, %v2655
        %v2657 = vand.u32 %v2656, 4294901760
        %2658 = vmatmul.f32.gmra.mxu0 %v2657
        %v2659 = vpop.f32.mrf.mxu0
        %v2660 = vadd.f32 0.0, %v2659
        %2661 = vdwg.mxu0
        %v2662 = vand.u32 %v2612, 4294901760
        %v2663 = vsub.f32 %v2612, %v2662
        %v2664 = vand.u32 %v2663, 4294901760
        %v2665 = vsub.f32 %v2663, %v2664
        %v2666 = vand.u32 %v2665, 4294901760
        %2667 = vmatpush.msra.mxu0 %v2666
        %v2668 = vand.u32 %v2611, 4294901760
        %v2669 = vsub.f32 %v2611, %v2668
        %v2670 = vand.u32 %v2669, 4294901760
        %v2671 = vsub.f32 %v2669, %v2670
        %v2672 = vand.u32 %v2671, 4294901760
        %2673 = vmatpush.msra.mxu0 %v2672
        %v2674 = vand.u32 %v2610, 4294901760
        %v2675 = vsub.f32 %v2610, %v2674
        %v2676 = vand.u32 %v2675, 4294901760
        %v2677 = vsub.f32 %v2675, %v2676
        %v2678 = vand.u32 %v2677, 4294901760
        %2679 = vmatpush.msra.mxu0 %v2678
        %v2680 = vand.u32 %v2609, 4294901760
        %v2681 = vsub.f32 %v2609, %v2680
        %v2682 = vand.u32 %v2681, 4294901760
        %v2683 = vsub.f32 %v2681, %v2682
        %v2684 = vand.u32 %v2683, 4294901760
        %2685 = vmatpush.msra.mxu0 %v2684
        %v2686 = vand.u32 %v2608, 4294901760
        %v2687 = vsub.f32 %v2608, %v2686
        %v2688 = vand.u32 %v2687, 4294901760
        %v2689 = vsub.f32 %v2687, %v2688
        %v2690 = vand.u32 %v2689, 4294901760
        %2691 = vmatpush.msra.mxu0 %v2690
        %v2692 = vand.u32 %v2607, 4294901760
        %v2693 = vsub.f32 %v2607, %v2692
        %v2694 = vand.u32 %v2693, 4294901760
        %v2695 = vsub.f32 %v2693, %v2694
        %v2696 = vand.u32 %v2695, 4294901760
        %2697 = vmatpush.msra.mxu0 %v2696
        %v2698 = vand.u32 %v2606, 4294901760
        %v2699 = vsub.f32 %v2606, %v2698
        %v2700 = vand.u32 %v2699, 4294901760
        %v2701 = vsub.f32 %v2699, %v2700
        %v2702 = vand.u32 %v2701, 4294901760
        %2703 = vmatpush.msra.mxu0 %v2702
        %v2704 = vand.u32 %v2605, 4294901760
        %v2705 = vsub.f32 %v2605, %v2704
        %v2706 = vand.u32 %v2705, 4294901760
        %v2707 = vsub.f32 %v2705, %v2706
        %v2708 = vand.u32 %v2707, 4294901760
        %2709 = vmatpush.msra.mxu0 %v2708
        %v2710 = vand.u32 %v2604, 4294901760
        %v2711 = vsub.f32 %v2604, %v2710
        %v2712 = vand.u32 %v2711, 4294901760
        %v2713 = vsub.f32 %v2711, %v2712
        %v2714 = vand.u32 %v2713, 4294901760
        %2715 = vmatpush.msra.mxu0 %v2714
        %v2716 = vand.u32 %v2603, 4294901760
        %v2717 = vsub.f32 %v2603, %v2716
        %v2718 = vand.u32 %v2717, 4294901760
        %v2719 = vsub.f32 %v2717, %v2718
        %v2720 = vand.u32 %v2719, 4294901760
        %2721 = vmatpush.msra.mxu0 %v2720
        %v2722 = vand.u32 %v2602, 4294901760
        %v2723 = vsub.f32 %v2602, %v2722
        %v2724 = vand.u32 %v2723, 4294901760
        %v2725 = vsub.f32 %v2723, %v2724
        %v2726 = vand.u32 %v2725, 4294901760
        %2727 = vmatpush.msra.mxu0 %v2726
        %v2728 = vand.u32 %v2601, 4294901760
        %v2729 = vsub.f32 %v2601, %v2728
        %v2730 = vand.u32 %v2729, 4294901760
        %v2731 = vsub.f32 %v2729, %v2730
        %v2732 = vand.u32 %v2731, 4294901760
        %2733 = vmatpush.msra.mxu0 %v2732
        %v2734 = vand.u32 %v2600, 4294901760
        %v2735 = vsub.f32 %v2600, %v2734
        %v2736 = vand.u32 %v2735, 4294901760
        %v2737 = vsub.f32 %v2735, %v2736
        %v2738 = vand.u32 %v2737, 4294901760
        %2739 = vmatpush.msra.mxu0 %v2738
        %v2740 = vand.u32 %v2599, 4294901760
        %v2741 = vsub.f32 %v2599, %v2740
        %v2742 = vand.u32 %v2741, 4294901760
        %v2743 = vsub.f32 %v2741, %v2742
        %v2744 = vand.u32 %v2743, 4294901760
        %2745 = vmatpush.msra.mxu0 %v2744
        %v2746 = vand.u32 %v2598, 4294901760
        %v2747 = vsub.f32 %v2598, %v2746
        %v2748 = vand.u32 %v2747, 4294901760
        %v2749 = vsub.f32 %v2747, %v2748
        %v2750 = vand.u32 %v2749, 4294901760
        %2751 = vmatpush.msra.mxu0 %v2750
        %v2752 = vand.u32 %v2597, 4294901760
        %v2753 = vsub.f32 %v2597, %v2752
        %v2754 = vand.u32 %v2753, 4294901760
        %v2755 = vsub.f32 %v2753, %v2754
        %v2756 = vand.u32 %v2755, 4294901760
        %2757 = vmatpush.msra.mxu0 %v2756
        %v2758 = vand.u32 %v2594, 4294901760
        %2759 = vmatmul.f32.gmra.mxu0 %v2758
        %v2760 = vpop.f32.mrf.mxu0
        %v2761 = vadd.f32 %v2652, %v2760
        %v2762 = vand.u32 %v2595, 4294901760
        %2763 = vmatmul.f32.gmra.mxu0 %v2762
        %v2764 = vpop.f32.mrf.mxu0
        %v2765 = vadd.f32 %v2660, %v2764
        %2766 = vdwg.mxu0
        %v2767 = vand.u32 %v2612, 4294901760
        %v2768 = vsub.f32 %v2612, %v2767
        %2769 = vmatpush.msra.mxu0 %v2768
        %v2770 = vand.u32 %v2611, 4294901760
        %v2771 = vsub.f32 %v2611, %v2770
        %2772 = vmatpush.msra.mxu0 %v2771
        %v2773 = vand.u32 %v2610, 4294901760
        %v2774 = vsub.f32 %v2610, %v2773
        %2775 = vmatpush.msra.mxu0 %v2774
        %v2776 = vand.u32 %v2609, 4294901760
        %v2777 = vsub.f32 %v2609, %v2776
        %2778 = vmatpush.msra.mxu0 %v2777
        %v2779 = vand.u32 %v2608, 4294901760
        %v2780 = vsub.f32 %v2608, %v2779
        %2781 = vmatpush.msra.mxu0 %v2780
        %v2782 = vand.u32 %v2607, 4294901760
        %v2783 = vsub.f32 %v2607, %v2782
        %2784 = vmatpush.msra.mxu0 %v2783
        %v2785 = vand.u32 %v2606, 4294901760
        %v2786 = vsub.f32 %v2606, %v2785
        %2787 = vmatpush.msra.mxu0 %v2786
        %v2788 = vand.u32 %v2605, 4294901760
        %v2789 = vsub.f32 %v2605, %v2788
        %2790 = vmatpush.msra.mxu0 %v2789
        %v2791 = vand.u32 %v2604, 4294901760
        %v2792 = vsub.f32 %v2604, %v2791
        %2793 = vmatpush.msra.mxu0 %v2792
        %v2794 = vand.u32 %v2603, 4294901760
        %v2795 = vsub.f32 %v2603, %v2794
        %2796 = vmatpush.msra.mxu0 %v2795
        %v2797 = vand.u32 %v2602, 4294901760
        %v2798 = vsub.f32 %v2602, %v2797
        %2799 = vmatpush.msra.mxu0 %v2798
        %v2800 = vand.u32 %v2601, 4294901760
        %v2801 = vsub.f32 %v2601, %v2800
        %2802 = vmatpush.msra.mxu0 %v2801
        %v2803 = vand.u32 %v2600, 4294901760
        %v2804 = vsub.f32 %v2600, %v2803
        %2805 = vmatpush.msra.mxu0 %v2804
        %v2806 = vand.u32 %v2599, 4294901760
        %v2807 = vsub.f32 %v2599, %v2806
        %2808 = vmatpush.msra.mxu0 %v2807
        %v2809 = vand.u32 %v2598, 4294901760
        %v2810 = vsub.f32 %v2598, %v2809
        %2811 = vmatpush.msra.mxu0 %v2810
        %v2812 = vand.u32 %v2597, 4294901760
        %v2813 = vsub.f32 %v2597, %v2812
        %2814 = vmatpush.msra.mxu0 %v2813
        %v2815 = vand.u32 %v2594, 4294901760
        %v2816 = vsub.f32 %v2594, %v2815
        %2817 = vmatmul.f32.gmra.mxu0 %v2816
        %v2818 = vpop.f32.mrf.mxu0
        %v2819 = vadd.f32 %v2761, %v2818
        %v2820 = vand.u32 %v2595, 4294901760
        %v2821 = vsub.f32 %v2595, %v2820
        %2822 = vmatmul.f32.gmra.mxu0 %v2821
        %v2823 = vpop.f32.mrf.mxu0
        %v2824 = vadd.f32 %v2765, %v2823
        %2825 = vdwg.mxu0
        %v2826 = vand.u32 %v2612, 4294901760
        %2827 = vmatpush.msra.mxu0 %v2826
        %v2828 = vand.u32 %v2611, 4294901760
        %2829 = vmatpush.msra.mxu0 %v2828
        %v2830 = vand.u32 %v2610, 4294901760
        %2831 = vmatpush.msra.mxu0 %v2830
        %v2832 = vand.u32 %v2609, 4294901760
        %2833 = vmatpush.msra.mxu0 %v2832
        %v2834 = vand.u32 %v2608, 4294901760
        %2835 = vmatpush.msra.mxu0 %v2834
        %v2836 = vand.u32 %v2607, 4294901760
        %2837 = vmatpush.msra.mxu0 %v2836
        %v2838 = vand.u32 %v2606, 4294901760
        %2839 = vmatpush.msra.mxu0 %v2838
        %v2840 = vand.u32 %v2605, 4294901760
        %2841 = vmatpush.msra.mxu0 %v2840
        %v2842 = vand.u32 %v2604, 4294901760
        %2843 = vmatpush.msra.mxu0 %v2842
        %v2844 = vand.u32 %v2603, 4294901760
        %2845 = vmatpush.msra.mxu0 %v2844
        %v2846 = vand.u32 %v2602, 4294901760
        %2847 = vmatpush.msra.mxu0 %v2846
        %v2848 = vand.u32 %v2601, 4294901760
        %2849 = vmatpush.msra.mxu0 %v2848
        %v2850 = vand.u32 %v2600, 4294901760
        %2851 = vmatpush.msra.mxu0 %v2850
        %v2852 = vand.u32 %v2599, 4294901760
        %2853 = vmatpush.msra.mxu0 %v2852
        %v2854 = vand.u32 %v2598, 4294901760
        %2855 = vmatpush.msra.mxu0 %v2854
        %v2856 = vand.u32 %v2597, 4294901760
        %2857 = vmatpush.msra.mxu0 %v2856
        %v2858 = vand.u32 %v2594, 4294901760
        %v2859 = vsub.f32 %v2594, %v2858
        %v2860 = vand.u32 %v2859, 4294901760
        %2861 = vmatmul.f32.gmra.mxu0 %v2860
        %v2862 = vpop.f32.mrf.mxu0
        %v2863 = vadd.f32 %v2819, %v2862
        %v2864 = vand.u32 %v2595, 4294901760
        %v2865 = vsub.f32 %v2595, %v2864
        %v2866 = vand.u32 %v2865, 4294901760
        %2867 = vmatmul.f32.gmra.mxu0 %v2866
        %v2868 = vpop.f32.mrf.mxu0
        %v2869 = vadd.f32 %v2824, %v2868
        %2870 = vdwg.mxu0
        %v2871 = vand.u32 %v2612, 4294901760
        %v2872 = vsub.f32 %v2612, %v2871
        %v2873 = vand.u32 %v2872, 4294901760
        %2874 = vmatpush.msra.mxu0 %v2873
        %v2875 = vand.u32 %v2611, 4294901760
        %v2876 = vsub.f32 %v2611, %v2875
        %v2877 = vand.u32 %v2876, 4294901760
        %2878 = vmatpush.msra.mxu0 %v2877
        %v2879 = vand.u32 %v2610, 4294901760
        %v2880 = vsub.f32 %v2610, %v2879
        %v2881 = vand.u32 %v2880, 4294901760
        %2882 = vmatpush.msra.mxu0 %v2881
        %v2883 = vand.u32 %v2609, 4294901760
        %v2884 = vsub.f32 %v2609, %v2883
        %v2885 = vand.u32 %v2884, 4294901760
        %2886 = vmatpush.msra.mxu0 %v2885
        %v2887 = vand.u32 %v2608, 4294901760
        %v2888 = vsub.f32 %v2608, %v2887
        %v2889 = vand.u32 %v2888, 4294901760
        %2890 = vmatpush.msra.mxu0 %v2889
        %v2891 = vand.u32 %v2607, 4294901760
        %v2892 = vsub.f32 %v2607, %v2891
        %v2893 = vand.u32 %v2892, 4294901760
        %2894 = vmatpush.msra.mxu0 %v2893
        %v2895 = vand.u32 %v2606, 4294901760
        %v2896 = vsub.f32 %v2606, %v2895
        %v2897 = vand.u32 %v2896, 4294901760
        %2898 = vmatpush.msra.mxu0 %v2897
        %v2899 = vand.u32 %v2605, 4294901760
        %v2900 = vsub.f32 %v2605, %v2899
        %v2901 = vand.u32 %v2900, 4294901760
        %2902 = vmatpush.msra.mxu0 %v2901
        %v2903 = vand.u32 %v2604, 4294901760
        %v2904 = vsub.f32 %v2604, %v2903
        %v2905 = vand.u32 %v2904, 4294901760
        %2906 = vmatpush.msra.mxu0 %v2905
        %v2907 = vand.u32 %v2603, 4294901760
        %v2908 = vsub.f32 %v2603, %v2907
        %v2909 = vand.u32 %v2908, 4294901760
        %2910 = vmatpush.msra.mxu0 %v2909
        %v2911 = vand.u32 %v2602, 4294901760
        %v2912 = vsub.f32 %v2602, %v2911
        %v2913 = vand.u32 %v2912, 4294901760
        %2914 = vmatpush.msra.mxu0 %v2913
        %v2915 = vand.u32 %v2601, 4294901760
        %v2916 = vsub.f32 %v2601, %v2915
        %v2917 = vand.u32 %v2916, 4294901760
        %2918 = vmatpush.msra.mxu0 %v2917
        %v2919 = vand.u32 %v2600, 4294901760
        %v2920 = vsub.f32 %v2600, %v2919
        %v2921 = vand.u32 %v2920, 4294901760
        %2922 = vmatpush.msra.mxu0 %v2921
        %v2923 = vand.u32 %v2599, 4294901760
        %v2924 = vsub.f32 %v2599, %v2923
        %v2925 = vand.u32 %v2924, 4294901760
        %2926 = vmatpush.msra.mxu0 %v2925
        %v2927 = vand.u32 %v2598, 4294901760
        %v2928 = vsub.f32 %v2598, %v2927
        %v2929 = vand.u32 %v2928, 4294901760
        %2930 = vmatpush.msra.mxu0 %v2929
        %v2931 = vand.u32 %v2597, 4294901760
        %v2932 = vsub.f32 %v2597, %v2931
        %v2933 = vand.u32 %v2932, 4294901760
        %2934 = vmatpush.msra.mxu0 %v2933
        %v2935 = vand.u32 %v2594, 4294901760
        %2936 = vmatmul.f32.gmra.mxu0 %v2935
        %v2937 = vpop.f32.mrf.mxu0
        %v2938 = vadd.f32 %v2863, %v2937
        %v2939 = vand.u32 %v2595, 4294901760
        %2940 = vmatmul.f32.gmra.mxu0 %v2939
        %v2941 = vpop.f32.mrf.mxu0
        %v2942 = vadd.f32 %v2869, %v2941
        %2943 = vdwg.mxu0
        %v2944 = vand.u32 %v2612, 4294901760
        %2945 = vmatpush.msra.mxu0 %v2944
        %v2946 = vand.u32 %v2611, 4294901760
        %2947 = vmatpush.msra.mxu0 %v2946
        %v2948 = vand.u32 %v2610, 4294901760
        %2949 = vmatpush.msra.mxu0 %v2948
        %v2950 = vand.u32 %v2609, 4294901760
        %2951 = vmatpush.msra.mxu0 %v2950
        %v2952 = vand.u32 %v2608, 4294901760
        %2953 = vmatpush.msra.mxu0 %v2952
        %v2954 = vand.u32 %v2607, 4294901760
        %2955 = vmatpush.msra.mxu0 %v2954
        %v2956 = vand.u32 %v2606, 4294901760
        %2957 = vmatpush.msra.mxu0 %v2956
        %v2958 = vand.u32 %v2605, 4294901760
        %2959 = vmatpush.msra.mxu0 %v2958
        %v2960 = vand.u32 %v2604, 4294901760
        %2961 = vmatpush.msra.mxu0 %v2960
        %v2962 = vand.u32 %v2603, 4294901760
        %2963 = vmatpush.msra.mxu0 %v2962
        %v2964 = vand.u32 %v2602, 4294901760
        %2965 = vmatpush.msra.mxu0 %v2964
        %v2966 = vand.u32 %v2601, 4294901760
        %2967 = vmatpush.msra.mxu0 %v2966
        %v2968 = vand.u32 %v2600, 4294901760
        %2969 = vmatpush.msra.mxu0 %v2968
        %v2970 = vand.u32 %v2599, 4294901760
        %2971 = vmatpush.msra.mxu0 %v2970
        %v2972 = vand.u32 %v2598, 4294901760
        %2973 = vmatpush.msra.mxu0 %v2972
        %v2974 = vand.u32 %v2597, 4294901760
        %2975 = vmatpush.msra.mxu0 %v2974
        %v2976 = vand.u32 %v2594, 4294901760
        %2977 = vmatmul.f32.gmra.mxu0 %v2976
        %v2978 = vpop.f32.mrf.mxu0
        %v2979 = vadd.f32 %v2938, %v2978
        %v2980 = vand.u32 %v2595, 4294901760
        %2981 = vmatmul.f32.gmra.mxu0 %v2980
        %v2982 = vpop.f32.mrf.mxu0
        %v2983 = vadd.f32 %v2942, %v2982
        %2984 = vdwg.mxu0
        %v2985 = vadd.f32 %v2199, %v2979
        %v2986 = vadd.f32 %v2200, %v2983
        %v2987 = vld [vmem:[%s242 + $0x3] sm:$0xff]
        %v2988 = vld [vmem:[%s242 + $0xb] sm:$0xff]
        %s2989 = scalar_lea.vmem %s1, 1280
        %v2990 = vld [vmem:[%s2989] sm:$0xff]
        %v2991 = vld [vmem:[%s2989 + $0x8] sm:$0xff]
        %v2992 = vld [vmem:[%s2989 + $0x10] sm:$0xff]
        %v2993 = vld [vmem:[%s2989 + $0x18] sm:$0xff]
        %v2994 = vld [vmem:[%s2989 + $0x20] sm:$0xff]
        %v2995 = vld [vmem:[%s2989 + $0x28] sm:$0xff]
        %v2996 = vld [vmem:[%s2989 + $0x30] sm:$0xff]
        %v2997 = vld [vmem:[%s2989 + $0x38] sm:$0xff]
        %v2998 = vld [vmem:[%s2989 + $0x40] sm:$0xff]
        %v2999 = vld [vmem:[%s2989 + $0x48] sm:$0xff]
        %v3000 = vld [vmem:[%s2989 + $0x50] sm:$0xff]
        %v3001 = vld [vmem:[%s2989 + $0x58] sm:$0xff]
        %v3002 = vld [vmem:[%s2989 + $0x60] sm:$0xff]
        %v3003 = vld [vmem:[%s2989 + $0x68] sm:$0xff]
        %v3004 = vld [vmem:[%s2989 + $0x70] sm:$0xff]
        %v3005 = vld [vmem:[%s2989 + $0x78] sm:$0xff]
        %v3006 = vand.u32 %v3005, 4294901760
        %3007 = vmatpush.msra.mxu0 %v3006
        %v3008 = vand.u32 %v3004, 4294901760
        %3009 = vmatpush.msra.mxu0 %v3008
        %v3010 = vand.u32 %v3003, 4294901760
        %3011 = vmatpush.msra.mxu0 %v3010
        %v3012 = vand.u32 %v3002, 4294901760
        %3013 = vmatpush.msra.mxu0 %v3012
        %v3014 = vand.u32 %v3001, 4294901760
        %3015 = vmatpush.msra.mxu0 %v3014
        %v3016 = vand.u32 %v3000, 4294901760
        %3017 = vmatpush.msra.mxu0 %v3016
        %v3018 = vand.u32 %v2999, 4294901760
        %3019 = vmatpush.msra.mxu0 %v3018
        %v3020 = vand.u32 %v2998, 4294901760
        %3021 = vmatpush.msra.mxu0 %v3020
        %v3022 = vand.u32 %v2997, 4294901760
        %3023 = vmatpush.msra.mxu0 %v3022
        %v3024 = vand.u32 %v2996, 4294901760
        %3025 = vmatpush.msra.mxu0 %v3024
        %v3026 = vand.u32 %v2995, 4294901760
        %3027 = vmatpush.msra.mxu0 %v3026
        %v3028 = vand.u32 %v2994, 4294901760
        %3029 = vmatpush.msra.mxu0 %v3028
        %v3030 = vand.u32 %v2993, 4294901760
        %3031 = vmatpush.msra.mxu0 %v3030
        %v3032 = vand.u32 %v2992, 4294901760
        %3033 = vmatpush.msra.mxu0 %v3032
        %v3034 = vand.u32 %v2991, 4294901760
        %3035 = vmatpush.msra.mxu0 %v3034
        %v3036 = vand.u32 %v2990, 4294901760
        %3037 = vmatpush.msra.mxu0 %v3036
        %v3038 = vand.u32 %v2987, 4294901760
        %v3039 = vsub.f32 %v2987, %v3038
        %v3040 = vand.u32 %v3039, 4294901760
        %v3041 = vsub.f32 %v3039, %v3040
        %v3042 = vand.u32 %v3041, 4294901760
        %3043 = vmatmul.f32.gmra.mxu0 %v3042
        %v3044 = vpop.f32.mrf.mxu0
        %v3045 = vadd.f32 0.0, %v3044
        %v3046 = vand.u32 %v2988, 4294901760
        %v3047 = vsub.f32 %v2988, %v3046
        %v3048 = vand.u32 %v3047, 4294901760
        %v3049 = vsub.f32 %v3047, %v3048
        %v3050 = vand.u32 %v3049, 4294901760
        %3051 = vmatmul.f32.gmra.mxu0 %v3050
        %v3052 = vpop.f32.mrf.mxu0
        %v3053 = vadd.f32 0.0, %v3052
        %3054 = vdwg.mxu0
        %v3055 = vand.u32 %v3005, 4294901760
        %v3056 = vsub.f32 %v3005, %v3055
        %v3057 = vand.u32 %v3056, 4294901760
        %v3058 = vsub.f32 %v3056, %v3057
        %v3059 = vand.u32 %v3058, 4294901760
        %3060 = vmatpush.msra.mxu0 %v3059
        %v3061 = vand.u32 %v3004, 4294901760
        %v3062 = vsub.f32 %v3004, %v3061
        %v3063 = vand.u32 %v3062, 4294901760
        %v3064 = vsub.f32 %v3062, %v3063
        %v3065 = vand.u32 %v3064, 4294901760
        %3066 = vmatpush.msra.mxu0 %v3065
        %v3067 = vand.u32 %v3003, 4294901760
        %v3068 = vsub.f32 %v3003, %v3067
        %v3069 = vand.u32 %v3068, 4294901760
        %v3070 = vsub.f32 %v3068, %v3069
        %v3071 = vand.u32 %v3070, 4294901760
        %3072 = vmatpush.msra.mxu0 %v3071
        %v3073 = vand.u32 %v3002, 4294901760
        %v3074 = vsub.f32 %v3002, %v3073
        %v3075 = vand.u32 %v3074, 4294901760
        %v3076 = vsub.f32 %v3074, %v3075
        %v3077 = vand.u32 %v3076, 4294901760
        %3078 = vmatpush.msra.mxu0 %v3077
        %v3079 = vand.u32 %v3001, 4294901760
        %v3080 = vsub.f32 %v3001, %v3079
        %v3081 = vand.u32 %v3080, 4294901760
        %v3082 = vsub.f32 %v3080, %v3081
        %v3083 = vand.u32 %v3082, 4294901760
        %3084 = vmatpush.msra.mxu0 %v3083
        %v3085 = vand.u32 %v3000, 4294901760
        %v3086 = vsub.f32 %v3000, %v3085
        %v3087 = vand.u32 %v3086, 4294901760
        %v3088 = vsub.f32 %v3086, %v3087
        %v3089 = vand.u32 %v3088, 4294901760
        %3090 = vmatpush.msra.mxu0 %v3089
        %v3091 = vand.u32 %v2999, 4294901760
        %v3092 = vsub.f32 %v2999, %v3091
        %v3093 = vand.u32 %v3092, 4294901760
        %v3094 = vsub.f32 %v3092, %v3093
        %v3095 = vand.u32 %v3094, 4294901760
        %3096 = vmatpush.msra.mxu0 %v3095
        %v3097 = vand.u32 %v2998, 4294901760
        %v3098 = vsub.f32 %v2998, %v3097
        %v3099 = vand.u32 %v3098, 4294901760
        %v3100 = vsub.f32 %v3098, %v3099
        %v3101 = vand.u32 %v3100, 4294901760
        %3102 = vmatpush.msra.mxu0 %v3101
        %v3103 = vand.u32 %v2997, 4294901760
        %v3104 = vsub.f32 %v2997, %v3103
        %v3105 = vand.u32 %v3104, 4294901760
        %v3106 = vsub.f32 %v3104, %v3105
        %v3107 = vand.u32 %v3106, 4294901760
        %3108 = vmatpush.msra.mxu0 %v3107
        %v3109 = vand.u32 %v2996, 4294901760
        %v3110 = vsub.f32 %v2996, %v3109
        %v3111 = vand.u32 %v3110, 4294901760
        %v3112 = vsub.f32 %v3110, %v3111
        %v3113 = vand.u32 %v3112, 4294901760
        %3114 = vmatpush.msra.mxu0 %v3113
        %v3115 = vand.u32 %v2995, 4294901760
        %v3116 = vsub.f32 %v2995, %v3115
        %v3117 = vand.u32 %v3116, 4294901760
        %v3118 = vsub.f32 %v3116, %v3117
        %v3119 = vand.u32 %v3118, 4294901760
        %3120 = vmatpush.msra.mxu0 %v3119
        %v3121 = vand.u32 %v2994, 4294901760
        %v3122 = vsub.f32 %v2994, %v3121
        %v3123 = vand.u32 %v3122, 4294901760
        %v3124 = vsub.f32 %v3122, %v3123
        %v3125 = vand.u32 %v3124, 4294901760
        %3126 = vmatpush.msra.mxu0 %v3125
        %v3127 = vand.u32 %v2993, 4294901760
        %v3128 = vsub.f32 %v2993, %v3127
        %v3129 = vand.u32 %v3128, 4294901760
        %v3130 = vsub.f32 %v3128, %v3129
        %v3131 = vand.u32 %v3130, 4294901760
        %3132 = vmatpush.msra.mxu0 %v3131
        %v3133 = vand.u32 %v2992, 4294901760
        %v3134 = vsub.f32 %v2992, %v3133
        %v3135 = vand.u32 %v3134, 4294901760
        %v3136 = vsub.f32 %v3134, %v3135
        %v3137 = vand.u32 %v3136, 4294901760
        %3138 = vmatpush.msra.mxu0 %v3137
        %v3139 = vand.u32 %v2991, 4294901760
        %v3140 = vsub.f32 %v2991, %v3139
        %v3141 = vand.u32 %v3140, 4294901760
        %v3142 = vsub.f32 %v3140, %v3141
        %v3143 = vand.u32 %v3142, 4294901760
        %3144 = vmatpush.msra.mxu0 %v3143
        %v3145 = vand.u32 %v2990, 4294901760
        %v3146 = vsub.f32 %v2990, %v3145
        %v3147 = vand.u32 %v3146, 4294901760
        %v3148 = vsub.f32 %v3146, %v3147
        %v3149 = vand.u32 %v3148, 4294901760
        %3150 = vmatpush.msra.mxu0 %v3149
        %v3151 = vand.u32 %v2987, 4294901760
        %3152 = vmatmul.f32.gmra.mxu0 %v3151
        %v3153 = vpop.f32.mrf.mxu0
        %v3154 = vadd.f32 %v3045, %v3153
        %v3155 = vand.u32 %v2988, 4294901760
        %3156 = vmatmul.f32.gmra.mxu0 %v3155
        %v3157 = vpop.f32.mrf.mxu0
        %v3158 = vadd.f32 %v3053, %v3157
        %3159 = vdwg.mxu0
        %v3160 = vand.u32 %v3005, 4294901760
        %v3161 = vsub.f32 %v3005, %v3160
        %3162 = vmatpush.msra.mxu0 %v3161
        %v3163 = vand.u32 %v3004, 4294901760
        %v3164 = vsub.f32 %v3004, %v3163
        %3165 = vmatpush.msra.mxu0 %v3164
        %v3166 = vand.u32 %v3003, 4294901760
        %v3167 = vsub.f32 %v3003, %v3166
        %3168 = vmatpush.msra.mxu0 %v3167
        %v3169 = vand.u32 %v3002, 4294901760
        %v3170 = vsub.f32 %v3002, %v3169
        %3171 = vmatpush.msra.mxu0 %v3170
        %v3172 = vand.u32 %v3001, 4294901760
        %v3173 = vsub.f32 %v3001, %v3172
        %3174 = vmatpush.msra.mxu0 %v3173
        %v3175 = vand.u32 %v3000, 4294901760
        %v3176 = vsub.f32 %v3000, %v3175
        %3177 = vmatpush.msra.mxu0 %v3176
        %v3178 = vand.u32 %v2999, 4294901760
        %v3179 = vsub.f32 %v2999, %v3178
        %3180 = vmatpush.msra.mxu0 %v3179
        %v3181 = vand.u32 %v2998, 4294901760
        %v3182 = vsub.f32 %v2998, %v3181
        %3183 = vmatpush.msra.mxu0 %v3182
        %v3184 = vand.u32 %v2997, 4294901760
        %v3185 = vsub.f32 %v2997, %v3184
        %3186 = vmatpush.msra.mxu0 %v3185
        %v3187 = vand.u32 %v2996, 4294901760
        %v3188 = vsub.f32 %v2996, %v3187
        %3189 = vmatpush.msra.mxu0 %v3188
        %v3190 = vand.u32 %v2995, 4294901760
        %v3191 = vsub.f32 %v2995, %v3190
        %3192 = vmatpush.msra.mxu0 %v3191
        %v3193 = vand.u32 %v2994, 4294901760
        %v3194 = vsub.f32 %v2994, %v3193
        %3195 = vmatpush.msra.mxu0 %v3194
        %v3196 = vand.u32 %v2993, 4294901760
        %v3197 = vsub.f32 %v2993, %v3196
        %3198 = vmatpush.msra.mxu0 %v3197
        %v3199 = vand.u32 %v2992, 4294901760
        %v3200 = vsub.f32 %v2992, %v3199
        %3201 = vmatpush.msra.mxu0 %v3200
        %v3202 = vand.u32 %v2991, 4294901760
        %v3203 = vsub.f32 %v2991, %v3202
        %3204 = vmatpush.msra.mxu0 %v3203
        %v3205 = vand.u32 %v2990, 4294901760
        %v3206 = vsub.f32 %v2990, %v3205
        %3207 = vmatpush.msra.mxu0 %v3206
        %v3208 = vand.u32 %v2987, 4294901760
        %v3209 = vsub.f32 %v2987, %v3208
        %3210 = vmatmul.f32.gmra.mxu0 %v3209
        %v3211 = vpop.f32.mrf.mxu0
        %v3212 = vadd.f32 %v3154, %v3211
        %v3213 = vand.u32 %v2988, 4294901760
        %v3214 = vsub.f32 %v2988, %v3213
        %3215 = vmatmul.f32.gmra.mxu0 %v3214
        %v3216 = vpop.f32.mrf.mxu0
        %v3217 = vadd.f32 %v3158, %v3216
        %3218 = vdwg.mxu0
        %v3219 = vand.u32 %v3005, 4294901760
        %3220 = vmatpush.msra.mxu0 %v3219
        %v3221 = vand.u32 %v3004, 4294901760
        %3222 = vmatpush.msra.mxu0 %v3221
        %v3223 = vand.u32 %v3003, 4294901760
        %3224 = vmatpush.msra.mxu0 %v3223
        %v3225 = vand.u32 %v3002, 4294901760
        %3226 = vmatpush.msra.mxu0 %v3225
        %v3227 = vand.u32 %v3001, 4294901760
        %3228 = vmatpush.msra.mxu0 %v3227
        %v3229 = vand.u32 %v3000, 4294901760
        %3230 = vmatpush.msra.mxu0 %v3229
        %v3231 = vand.u32 %v2999, 4294901760
        %3232 = vmatpush.msra.mxu0 %v3231
        %v3233 = vand.u32 %v2998, 4294901760
        %3234 = vmatpush.msra.mxu0 %v3233
        %v3235 = vand.u32 %v2997, 4294901760
        %3236 = vmatpush.msra.mxu0 %v3235
        %v3237 = vand.u32 %v2996, 4294901760
        %3238 = vmatpush.msra.mxu0 %v3237
        %v3239 = vand.u32 %v2995, 4294901760
        %3240 = vmatpush.msra.mxu0 %v3239
        %v3241 = vand.u32 %v2994, 4294901760
        %3242 = vmatpush.msra.mxu0 %v3241
        %v3243 = vand.u32 %v2993, 4294901760
        %3244 = vmatpush.msra.mxu0 %v3243
        %v3245 = vand.u32 %v2992, 4294901760
        %3246 = vmatpush.msra.mxu0 %v3245
        %v3247 = vand.u32 %v2991, 4294901760
        %3248 = vmatpush.msra.mxu0 %v3247
        %v3249 = vand.u32 %v2990, 4294901760
        %3250 = vmatpush.msra.mxu0 %v3249
        %v3251 = vand.u32 %v2987, 4294901760
        %v3252 = vsub.f32 %v2987, %v3251
        %v3253 = vand.u32 %v3252, 4294901760
        %3254 = vmatmul.f32.gmra.mxu0 %v3253
        %v3255 = vpop.f32.mrf.mxu0
        %v3256 = vadd.f32 %v3212, %v3255
        %v3257 = vand.u32 %v2988, 4294901760
        %v3258 = vsub.f32 %v2988, %v3257
        %v3259 = vand.u32 %v3258, 4294901760
        %3260 = vmatmul.f32.gmra.mxu0 %v3259
        %v3261 = vpop.f32.mrf.mxu0
        %v3262 = vadd.f32 %v3217, %v3261
        %3263 = vdwg.mxu0
        %v3264 = vand.u32 %v3005, 4294901760
        %v3265 = vsub.f32 %v3005, %v3264
        %v3266 = vand.u32 %v3265, 4294901760
        %3267 = vmatpush.msra.mxu0 %v3266
        %v3268 = vand.u32 %v3004, 4294901760
        %v3269 = vsub.f32 %v3004, %v3268
        %v3270 = vand.u32 %v3269, 4294901760
        %3271 = vmatpush.msra.mxu0 %v3270
        %v3272 = vand.u32 %v3003, 4294901760
        %v3273 = vsub.f32 %v3003, %v3272
        %v3274 = vand.u32 %v3273, 4294901760
        %3275 = vmatpush.msra.mxu0 %v3274
        %v3276 = vand.u32 %v3002, 4294901760
        %v3277 = vsub.f32 %v3002, %v3276
        %v3278 = vand.u32 %v3277, 4294901760
        %3279 = vmatpush.msra.mxu0 %v3278
        %v3280 = vand.u32 %v3001, 4294901760
        %v3281 = vsub.f32 %v3001, %v3280
        %v3282 = vand.u32 %v3281, 4294901760
        %3283 = vmatpush.msra.mxu0 %v3282
        %v3284 = vand.u32 %v3000, 4294901760
        %v3285 = vsub.f32 %v3000, %v3284
        %v3286 = vand.u32 %v3285, 4294901760
        %3287 = vmatpush.msra.mxu0 %v3286
        %v3288 = vand.u32 %v2999, 4294901760
        %v3289 = vsub.f32 %v2999, %v3288
        %v3290 = vand.u32 %v3289, 4294901760
        %3291 = vmatpush.msra.mxu0 %v3290
        %v3292 = vand.u32 %v2998, 4294901760
        %v3293 = vsub.f32 %v2998, %v3292
        %v3294 = vand.u32 %v3293, 4294901760
        %3295 = vmatpush.msra.mxu0 %v3294
        %v3296 = vand.u32 %v2997, 4294901760
        %v3297 = vsub.f32 %v2997, %v3296
        %v3298 = vand.u32 %v3297, 4294901760
        %3299 = vmatpush.msra.mxu0 %v3298
        %v3300 = vand.u32 %v2996, 4294901760
        %v3301 = vsub.f32 %v2996, %v3300
        %v3302 = vand.u32 %v3301, 4294901760
        %3303 = vmatpush.msra.mxu0 %v3302
        %v3304 = vand.u32 %v2995, 4294901760
        %v3305 = vsub.f32 %v2995, %v3304
        %v3306 = vand.u32 %v3305, 4294901760
        %3307 = vmatpush.msra.mxu0 %v3306
        %v3308 = vand.u32 %v2994, 4294901760
        %v3309 = vsub.f32 %v2994, %v3308
        %v3310 = vand.u32 %v3309, 4294901760
        %3311 = vmatpush.msra.mxu0 %v3310
        %v3312 = vand.u32 %v2993, 4294901760
        %v3313 = vsub.f32 %v2993, %v3312
        %v3314 = vand.u32 %v3313, 4294901760
        %3315 = vmatpush.msra.mxu0 %v3314
        %v3316 = vand.u32 %v2992, 4294901760
        %v3317 = vsub.f32 %v2992, %v3316
        %v3318 = vand.u32 %v3317, 4294901760
        %3319 = vmatpush.msra.mxu0 %v3318
        %v3320 = vand.u32 %v2991, 4294901760
        %v3321 = vsub.f32 %v2991, %v3320
        %v3322 = vand.u32 %v3321, 4294901760
        %3323 = vmatpush.msra.mxu0 %v3322
        %v3324 = vand.u32 %v2990, 4294901760
        %v3325 = vsub.f32 %v2990, %v3324
        %v3326 = vand.u32 %v3325, 4294901760
        %3327 = vmatpush.msra.mxu0 %v3326
        %v3328 = vand.u32 %v2987, 4294901760
        %3329 = vmatmul.f32.gmra.mxu0 %v3328
        %v3330 = vpop.f32.mrf.mxu0
        %v3331 = vadd.f32 %v3256, %v3330
        %v3332 = vand.u32 %v2988, 4294901760
        %3333 = vmatmul.f32.gmra.mxu0 %v3332
        %v3334 = vpop.f32.mrf.mxu0
        %v3335 = vadd.f32 %v3262, %v3334
        %3336 = vdwg.mxu0
        %v3337 = vand.u32 %v3005, 4294901760
        %3338 = vmatpush.msra.mxu0 %v3337
        %v3339 = vand.u32 %v3004, 4294901760
        %3340 = vmatpush.msra.mxu0 %v3339
        %v3341 = vand.u32 %v3003, 4294901760
        %3342 = vmatpush.msra.mxu0 %v3341
        %v3343 = vand.u32 %v3002, 4294901760
        %3344 = vmatpush.msra.mxu0 %v3343
        %v3345 = vand.u32 %v3001, 4294901760
        %3346 = vmatpush.msra.mxu0 %v3345
        %v3347 = vand.u32 %v3000, 4294901760
        %3348 = vmatpush.msra.mxu0 %v3347
        %v3349 = vand.u32 %v2999, 4294901760
        %3350 = vmatpush.msra.mxu0 %v3349
        %v3351 = vand.u32 %v2998, 4294901760
        %3352 = vmatpush.msra.mxu0 %v3351
        %v3353 = vand.u32 %v2997, 4294901760
        %3354 = vmatpush.msra.mxu0 %v3353
        %v3355 = vand.u32 %v2996, 4294901760
        %3356 = vmatpush.msra.mxu0 %v3355
        %v3357 = vand.u32 %v2995, 4294901760
        %3358 = vmatpush.msra.mxu0 %v3357
        %v3359 = vand.u32 %v2994, 4294901760
        %3360 = vmatpush.msra.mxu0 %v3359
        %v3361 = vand.u32 %v2993, 4294901760
        %3362 = vmatpush.msra.mxu0 %v3361
        %v3363 = vand.u32 %v2992, 4294901760
        %3364 = vmatpush.msra.mxu0 %v3363
        %v3365 = vand.u32 %v2991, 4294901760
        %3366 = vmatpush.msra.mxu0 %v3365
        %v3367 = vand.u32 %v2990, 4294901760
        %3368 = vmatpush.msra.mxu0 %v3367
        %v3369 = vand.u32 %v2987, 4294901760
        %3370 = vmatmul.f32.gmra.mxu0 %v3369
        %v3371 = vpop.f32.mrf.mxu0
        %v3372 = vadd.f32 %v3331, %v3371
        %v3373 = vand.u32 %v2988, 4294901760
        %3374 = vmatmul.f32.gmra.mxu0 %v3373
        %v3375 = vpop.f32.mrf.mxu0
        %v3376 = vadd.f32 %v3335, %v3375
        %3377 = vdwg.mxu0
        %v3378 = vadd.f32 %v2592, %v3372
        %v3379 = vadd.f32 %v2593, %v3376
        %v3380 = vld [vmem:[#allocation4 + $0x4] sm:$0xff]
        %v3381 = vld [vmem:[#allocation4 + $0xc] sm:$0xff]
        %s3382 = scalar_lea.vmem %s1, 512
        %v3383 = vld [vmem:[%s3382] sm:$0xff]
        %v3384 = vld [vmem:[%s3382 + $0x8] sm:$0xff]
        %v3385 = vld [vmem:[%s3382 + $0x10] sm:$0xff]
        %v3386 = vld [vmem:[%s3382 + $0x18] sm:$0xff]
        %v3387 = vld [vmem:[%s3382 + $0x20] sm:$0xff]
        %v3388 = vld [vmem:[%s3382 + $0x28] sm:$0xff]
        %v3389 = vld [vmem:[%s3382 + $0x30] sm:$0xff]
        %v3390 = vld [vmem:[%s3382 + $0x38] sm:$0xff]
        %v3391 = vld [vmem:[%s3382 + $0x40] sm:$0xff]
        %v3392 = vld [vmem:[%s3382 + $0x48] sm:$0xff]
        %v3393 = vld [vmem:[%s3382 + $0x50] sm:$0xff]
        %v3394 = vld [vmem:[%s3382 + $0x58] sm:$0xff]
        %v3395 = vld [vmem:[%s3382 + $0x60] sm:$0xff]
        %v3396 = vld [vmem:[%s3382 + $0x68] sm:$0xff]
        %v3397 = vld [vmem:[%s3382 + $0x70] sm:$0xff]
        %v3398 = vld [vmem:[%s3382 + $0x78] sm:$0xff]
        %v3399 = vand.u32 %v3398, 4294901760
        %3400 = vmatpush.msra.mxu0 %v3399
        %v3401 = vand.u32 %v3397, 4294901760
        %3402 = vmatpush.msra.mxu0 %v3401
        %v3403 = vand.u32 %v3396, 4294901760
        %3404 = vmatpush.msra.mxu0 %v3403
        %v3405 = vand.u32 %v3395, 4294901760
        %3406 = vmatpush.msra.mxu0 %v3405
        %v3407 = vand.u32 %v3394, 4294901760
        %3408 = vmatpush.msra.mxu0 %v3407
        %v3409 = vand.u32 %v3393, 4294901760
        %3410 = vmatpush.msra.mxu0 %v3409
        %v3411 = vand.u32 %v3392, 4294901760
        %3412 = vmatpush.msra.mxu0 %v3411
        %v3413 = vand.u32 %v3391, 4294901760
        %3414 = vmatpush.msra.mxu0 %v3413
        %v3415 = vand.u32 %v3390, 4294901760
        %3416 = vmatpush.msra.mxu0 %v3415
        %v3417 = vand.u32 %v3389, 4294901760
        %3418 = vmatpush.msra.mxu0 %v3417
        %v3419 = vand.u32 %v3388, 4294901760
        %3420 = vmatpush.msra.mxu0 %v3419
        %v3421 = vand.u32 %v3387, 4294901760
        %3422 = vmatpush.msra.mxu0 %v3421
        %v3423 = vand.u32 %v3386, 4294901760
        %3424 = vmatpush.msra.mxu0 %v3423
        %v3425 = vand.u32 %v3385, 4294901760
        %3426 = vmatpush.msra.mxu0 %v3425
        %v3427 = vand.u32 %v3384, 4294901760
        %3428 = vmatpush.msra.mxu0 %v3427
        %v3429 = vand.u32 %v3383, 4294901760
        %3430 = vmatpush.msra.mxu0 %v3429
        %v3431 = vand.u32 %v3380, 4294901760
        %v3432 = vsub.f32 %v3380, %v3431
        %v3433 = vand.u32 %v3432, 4294901760
        %v3434 = vsub.f32 %v3432, %v3433
        %v3435 = vand.u32 %v3434, 4294901760
        %3436 = vmatmul.f32.gmra.mxu0 %v3435
        %v3437 = vpop.f32.mrf.mxu0
        %v3438 = vadd.f32 0.0, %v3437
        %v3439 = vand.u32 %v3381, 4294901760
        %v3440 = vsub.f32 %v3381, %v3439
        %v3441 = vand.u32 %v3440, 4294901760
        %v3442 = vsub.f32 %v3440, %v3441
        %v3443 = vand.u32 %v3442, 4294901760
        %3444 = vmatmul.f32.gmra.mxu0 %v3443
        %v3445 = vpop.f32.mrf.mxu0
        %v3446 = vadd.f32 0.0, %v3445
        %3447 = vdwg.mxu0
        %v3448 = vand.u32 %v3398, 4294901760
        %v3449 = vsub.f32 %v3398, %v3448
        %v3450 = vand.u32 %v3449, 4294901760
        %v3451 = vsub.f32 %v3449, %v3450
        %v3452 = vand.u32 %v3451, 4294901760
        %3453 = vmatpush.msra.mxu0 %v3452
        %v3454 = vand.u32 %v3397, 4294901760
        %v3455 = vsub.f32 %v3397, %v3454
        %v3456 = vand.u32 %v3455, 4294901760
        %v3457 = vsub.f32 %v3455, %v3456
        %v3458 = vand.u32 %v3457, 4294901760
        %3459 = vmatpush.msra.mxu0 %v3458
        %v3460 = vand.u32 %v3396, 4294901760
        %v3461 = vsub.f32 %v3396, %v3460
        %v3462 = vand.u32 %v3461, 4294901760
        %v3463 = vsub.f32 %v3461, %v3462
        %v3464 = vand.u32 %v3463, 4294901760
        %3465 = vmatpush.msra.mxu0 %v3464
        %v3466 = vand.u32 %v3395, 4294901760
        %v3467 = vsub.f32 %v3395, %v3466
        %v3468 = vand.u32 %v3467, 4294901760
        %v3469 = vsub.f32 %v3467, %v3468
        %v3470 = vand.u32 %v3469, 4294901760
        %3471 = vmatpush.msra.mxu0 %v3470
        %v3472 = vand.u32 %v3394, 4294901760
        %v3473 = vsub.f32 %v3394, %v3472
        %v3474 = vand.u32 %v3473, 4294901760
        %v3475 = vsub.f32 %v3473, %v3474
        %v3476 = vand.u32 %v3475, 4294901760
        %3477 = vmatpush.msra.mxu0 %v3476
        %v3478 = vand.u32 %v3393, 4294901760
        %v3479 = vsub.f32 %v3393, %v3478
        %v3480 = vand.u32 %v3479, 4294901760
        %v3481 = vsub.f32 %v3479, %v3480
        %v3482 = vand.u32 %v3481, 4294901760
        %3483 = vmatpush.msra.mxu0 %v3482
        %v3484 = vand.u32 %v3392, 4294901760
        %v3485 = vsub.f32 %v3392, %v3484
        %v3486 = vand.u32 %v3485, 4294901760
        %v3487 = vsub.f32 %v3485, %v3486
        %v3488 = vand.u32 %v3487, 4294901760
        %3489 = vmatpush.msra.mxu0 %v3488
        %v3490 = vand.u32 %v3391, 4294901760
        %v3491 = vsub.f32 %v3391, %v3490
        %v3492 = vand.u32 %v3491, 4294901760
        %v3493 = vsub.f32 %v3491, %v3492
        %v3494 = vand.u32 %v3493, 4294901760
        %3495 = vmatpush.msra.mxu0 %v3494
        %v3496 = vand.u32 %v3390, 4294901760
        %v3497 = vsub.f32 %v3390, %v3496
        %v3498 = vand.u32 %v3497, 4294901760
        %v3499 = vsub.f32 %v3497, %v3498
        %v3500 = vand.u32 %v3499, 4294901760
        %3501 = vmatpush.msra.mxu0 %v3500
        %v3502 = vand.u32 %v3389, 4294901760
        %v3503 = vsub.f32 %v3389, %v3502
        %v3504 = vand.u32 %v3503, 4294901760
        %v3505 = vsub.f32 %v3503, %v3504
        %v3506 = vand.u32 %v3505, 4294901760
        %3507 = vmatpush.msra.mxu0 %v3506
        %v3508 = vand.u32 %v3388, 4294901760
        %v3509 = vsub.f32 %v3388, %v3508
        %v3510 = vand.u32 %v3509, 4294901760
        %v3511 = vsub.f32 %v3509, %v3510
        %v3512 = vand.u32 %v3511, 4294901760
        %3513 = vmatpush.msra.mxu0 %v3512
        %v3514 = vand.u32 %v3387, 4294901760
        %v3515 = vsub.f32 %v3387, %v3514
        %v3516 = vand.u32 %v3515, 4294901760
        %v3517 = vsub.f32 %v3515, %v3516
        %v3518 = vand.u32 %v3517, 4294901760
        %3519 = vmatpush.msra.mxu0 %v3518
        %v3520 = vand.u32 %v3386, 4294901760
        %v3521 = vsub.f32 %v3386, %v3520
        %v3522 = vand.u32 %v3521, 4294901760
        %v3523 = vsub.f32 %v3521, %v3522
        %v3524 = vand.u32 %v3523, 4294901760
        %3525 = vmatpush.msra.mxu0 %v3524
        %v3526 = vand.u32 %v3385, 4294901760
        %v3527 = vsub.f32 %v3385, %v3526
        %v3528 = vand.u32 %v3527, 4294901760
        %v3529 = vsub.f32 %v3527, %v3528
        %v3530 = vand.u32 %v3529, 4294901760
        %3531 = vmatpush.msra.mxu0 %v3530
        %v3532 = vand.u32 %v3384, 4294901760
        %v3533 = vsub.f32 %v3384, %v3532
        %v3534 = vand.u32 %v3533, 4294901760
        %v3535 = vsub.f32 %v3533, %v3534
        %v3536 = vand.u32 %v3535, 4294901760
        %3537 = vmatpush.msra.mxu0 %v3536
        %v3538 = vand.u32 %v3383, 4294901760
        %v3539 = vsub.f32 %v3383, %v3538
        %v3540 = vand.u32 %v3539, 4294901760
        %v3541 = vsub.f32 %v3539, %v3540
        %v3542 = vand.u32 %v3541, 4294901760
        %3543 = vmatpush.msra.mxu0 %v3542
        %v3544 = vand.u32 %v3380, 4294901760
        %3545 = vmatmul.f32.gmra.mxu0 %v3544
        %v3546 = vpop.f32.mrf.mxu0
        %v3547 = vadd.f32 %v3438, %v3546
        %v3548 = vand.u32 %v3381, 4294901760
        %3549 = vmatmul.f32.gmra.mxu0 %v3548
        %v3550 = vpop.f32.mrf.mxu0
        %v3551 = vadd.f32 %v3446, %v3550
        %3552 = vdwg.mxu0
        %v3553 = vand.u32 %v3398, 4294901760
        %v3554 = vsub.f32 %v3398, %v3553
        %3555 = vmatpush.msra.mxu0 %v3554
        %v3556 = vand.u32 %v3397, 4294901760
        %v3557 = vsub.f32 %v3397, %v3556
        %3558 = vmatpush.msra.mxu0 %v3557
        %v3559 = vand.u32 %v3396, 4294901760
        %v3560 = vsub.f32 %v3396, %v3559
        %3561 = vmatpush.msra.mxu0 %v3560
        %v3562 = vand.u32 %v3395, 4294901760
        %v3563 = vsub.f32 %v3395, %v3562
        %3564 = vmatpush.msra.mxu0 %v3563
        %v3565 = vand.u32 %v3394, 4294901760
        %v3566 = vsub.f32 %v3394, %v3565
        %3567 = vmatpush.msra.mxu0 %v3566
        %v3568 = vand.u32 %v3393, 4294901760
        %v3569 = vsub.f32 %v3393, %v3568
        %3570 = vmatpush.msra.mxu0 %v3569
        %v3571 = vand.u32 %v3392, 4294901760
        %v3572 = vsub.f32 %v3392, %v3571
        %3573 = vmatpush.msra.mxu0 %v3572
        %v3574 = vand.u32 %v3391, 4294901760
        %v3575 = vsub.f32 %v3391, %v3574
        %3576 = vmatpush.msra.mxu0 %v3575
        %v3577 = vand.u32 %v3390, 4294901760
        %v3578 = vsub.f32 %v3390, %v3577
        %3579 = vmatpush.msra.mxu0 %v3578
        %v3580 = vand.u32 %v3389, 4294901760
        %v3581 = vsub.f32 %v3389, %v3580
        %3582 = vmatpush.msra.mxu0 %v3581
        %v3583 = vand.u32 %v3388, 4294901760
        %v3584 = vsub.f32 %v3388, %v3583
        %3585 = vmatpush.msra.mxu0 %v3584
        %v3586 = vand.u32 %v3387, 4294901760
        %v3587 = vsub.f32 %v3387, %v3586
        %3588 = vmatpush.msra.mxu0 %v3587
        %v3589 = vand.u32 %v3386, 4294901760
        %v3590 = vsub.f32 %v3386, %v3589
        %3591 = vmatpush.msra.mxu0 %v3590
        %v3592 = vand.u32 %v3385, 4294901760
        %v3593 = vsub.f32 %v3385, %v3592
        %3594 = vmatpush.msra.mxu0 %v3593
        %v3595 = vand.u32 %v3384, 4294901760
        %v3596 = vsub.f32 %v3384, %v3595
        %3597 = vmatpush.msra.mxu0 %v3596
        %v3598 = vand.u32 %v3383, 4294901760
        %v3599 = vsub.f32 %v3383, %v3598
        %3600 = vmatpush.msra.mxu0 %v3599
        %v3601 = vand.u32 %v3380, 4294901760
        %v3602 = vsub.f32 %v3380, %v3601
        %3603 = vmatmul.f32.gmra.mxu0 %v3602
        %v3604 = vpop.f32.mrf.mxu0
        %v3605 = vadd.f32 %v3547, %v3604
        %v3606 = vand.u32 %v3381, 4294901760
        %v3607 = vsub.f32 %v3381, %v3606
        %3608 = vmatmul.f32.gmra.mxu0 %v3607
        %v3609 = vpop.f32.mrf.mxu0
        %v3610 = vadd.f32 %v3551, %v3609
        %3611 = vdwg.mxu0
        %v3612 = vand.u32 %v3398, 4294901760
        %3613 = vmatpush.msra.mxu0 %v3612
        %v3614 = vand.u32 %v3397, 4294901760
        %3615 = vmatpush.msra.mxu0 %v3614
        %v3616 = vand.u32 %v3396, 4294901760
        %3617 = vmatpush.msra.mxu0 %v3616
        %v3618 = vand.u32 %v3395, 4294901760
        %3619 = vmatpush.msra.mxu0 %v3618
        %v3620 = vand.u32 %v3394, 4294901760
        %3621 = vmatpush.msra.mxu0 %v3620
        %v3622 = vand.u32 %v3393, 4294901760
        %3623 = vmatpush.msra.mxu0 %v3622
        %v3624 = vand.u32 %v3392, 4294901760
        %3625 = vmatpush.msra.mxu0 %v3624
        %v3626 = vand.u32 %v3391, 4294901760
        %3627 = vmatpush.msra.mxu0 %v3626
        %v3628 = vand.u32 %v3390, 4294901760
        %3629 = vmatpush.msra.mxu0 %v3628
        %v3630 = vand.u32 %v3389, 4294901760
        %3631 = vmatpush.msra.mxu0 %v3630
        %v3632 = vand.u32 %v3388, 4294901760
        %3633 = vmatpush.msra.mxu0 %v3632
        %v3634 = vand.u32 %v3387, 4294901760
        %3635 = vmatpush.msra.mxu0 %v3634
        %v3636 = vand.u32 %v3386, 4294901760
        %3637 = vmatpush.msra.mxu0 %v3636
        %v3638 = vand.u32 %v3385, 4294901760
        %3639 = vmatpush.msra.mxu0 %v3638
        %v3640 = vand.u32 %v3384, 4294901760
        %3641 = vmatpush.msra.mxu0 %v3640
        %v3642 = vand.u32 %v3383, 4294901760
        %3643 = vmatpush.msra.mxu0 %v3642
        %v3644 = vand.u32 %v3380, 4294901760
        %v3645 = vsub.f32 %v3380, %v3644
        %v3646 = vand.u32 %v3645, 4294901760
        %3647 = vmatmul.f32.gmra.mxu0 %v3646
        %v3648 = vpop.f32.mrf.mxu0
        %v3649 = vadd.f32 %v3605, %v3648
        %v3650 = vand.u32 %v3381, 4294901760
        %v3651 = vsub.f32 %v3381, %v3650
        %v3652 = vand.u32 %v3651, 4294901760
        %3653 = vmatmul.f32.gmra.mxu0 %v3652
        %v3654 = vpop.f32.mrf.mxu0
        %v3655 = vadd.f32 %v3610, %v3654
        %3656 = vdwg.mxu0
        %v3657 = vand.u32 %v3398, 4294901760
        %v3658 = vsub.f32 %v3398, %v3657
        %v3659 = vand.u32 %v3658, 4294901760
        %3660 = vmatpush.msra.mxu0 %v3659
        %v3661 = vand.u32 %v3397, 4294901760
        %v3662 = vsub.f32 %v3397, %v3661
        %v3663 = vand.u32 %v3662, 4294901760
        %3664 = vmatpush.msra.mxu0 %v3663
        %v3665 = vand.u32 %v3396, 4294901760
        %v3666 = vsub.f32 %v3396, %v3665
        %v3667 = vand.u32 %v3666, 4294901760
        %3668 = vmatpush.msra.mxu0 %v3667
        %v3669 = vand.u32 %v3395, 4294901760
        %v3670 = vsub.f32 %v3395, %v3669
        %v3671 = vand.u32 %v3670, 4294901760
        %3672 = vmatpush.msra.mxu0 %v3671
        %v3673 = vand.u32 %v3394, 4294901760
        %v3674 = vsub.f32 %v3394, %v3673
        %v3675 = vand.u32 %v3674, 4294901760
        %3676 = vmatpush.msra.mxu0 %v3675
        %v3677 = vand.u32 %v3393, 4294901760
        %v3678 = vsub.f32 %v3393, %v3677
        %v3679 = vand.u32 %v3678, 4294901760
        %3680 = vmatpush.msra.mxu0 %v3679
        %v3681 = vand.u32 %v3392, 4294901760
        %v3682 = vsub.f32 %v3392, %v3681
        %v3683 = vand.u32 %v3682, 4294901760
        %3684 = vmatpush.msra.mxu0 %v3683
        %v3685 = vand.u32 %v3391, 4294901760
        %v3686 = vsub.f32 %v3391, %v3685
        %v3687 = vand.u32 %v3686, 4294901760
        %3688 = vmatpush.msra.mxu0 %v3687
        %v3689 = vand.u32 %v3390, 4294901760
        %v3690 = vsub.f32 %v3390, %v3689
        %v3691 = vand.u32 %v3690, 4294901760
        %3692 = vmatpush.msra.mxu0 %v3691
        %v3693 = vand.u32 %v3389, 4294901760
        %v3694 = vsub.f32 %v3389, %v3693
        %v3695 = vand.u32 %v3694, 4294901760
        %3696 = vmatpush.msra.mxu0 %v3695
        %v3697 = vand.u32 %v3388, 4294901760
        %v3698 = vsub.f32 %v3388, %v3697
        %v3699 = vand.u32 %v3698, 4294901760
        %3700 = vmatpush.msra.mxu0 %v3699
        %v3701 = vand.u32 %v3387, 4294901760
        %v3702 = vsub.f32 %v3387, %v3701
        %v3703 = vand.u32 %v3702, 4294901760
        %3704 = vmatpush.msra.mxu0 %v3703
        %v3705 = vand.u32 %v3386, 4294901760
        %v3706 = vsub.f32 %v3386, %v3705
        %v3707 = vand.u32 %v3706, 4294901760
        %3708 = vmatpush.msra.mxu0 %v3707
        %v3709 = vand.u32 %v3385, 4294901760
        %v3710 = vsub.f32 %v3385, %v3709
        %v3711 = vand.u32 %v3710, 4294901760
        %3712 = vmatpush.msra.mxu0 %v3711
        %v3713 = vand.u32 %v3384, 4294901760
        %v3714 = vsub.f32 %v3384, %v3713
        %v3715 = vand.u32 %v3714, 4294901760
        %3716 = vmatpush.msra.mxu0 %v3715
        %v3717 = vand.u32 %v3383, 4294901760
        %v3718 = vsub.f32 %v3383, %v3717
        %v3719 = vand.u32 %v3718, 4294901760
        %3720 = vmatpush.msra.mxu0 %v3719
        %v3721 = vand.u32 %v3380, 4294901760
        %3722 = vmatmul.f32.gmra.mxu0 %v3721
        %v3723 = vpop.f32.mrf.mxu0
        %v3724 = vadd.f32 %v3649, %v3723
        %v3725 = vand.u32 %v3381, 4294901760
        %3726 = vmatmul.f32.gmra.mxu0 %v3725
        %v3727 = vpop.f32.mrf.mxu0
        %v3728 = vadd.f32 %v3655, %v3727
        %3729 = vdwg.mxu0
        %v3730 = vand.u32 %v3398, 4294901760
        %3731 = vmatpush.msra.mxu0 %v3730
        %v3732 = vand.u32 %v3397, 4294901760
        %3733 = vmatpush.msra.mxu0 %v3732
        %v3734 = vand.u32 %v3396, 4294901760
        %3735 = vmatpush.msra.mxu0 %v3734
        %v3736 = vand.u32 %v3395, 4294901760
        %3737 = vmatpush.msra.mxu0 %v3736
        %v3738 = vand.u32 %v3394, 4294901760
        %3739 = vmatpush.msra.mxu0 %v3738
        %v3740 = vand.u32 %v3393, 4294901760
        %3741 = vmatpush.msra.mxu0 %v3740
        %v3742 = vand.u32 %v3392, 4294901760
        %3743 = vmatpush.msra.mxu0 %v3742
        %v3744 = vand.u32 %v3391, 4294901760
        %3745 = vmatpush.msra.mxu0 %v3744
        %v3746 = vand.u32 %v3390, 4294901760
        %3747 = vmatpush.msra.mxu0 %v3746
        %v3748 = vand.u32 %v3389, 4294901760
        %3749 = vmatpush.msra.mxu0 %v3748
        %v3750 = vand.u32 %v3388, 4294901760
        %3751 = vmatpush.msra.mxu0 %v3750
        %v3752 = vand.u32 %v3387, 4294901760
        %3753 = vmatpush.msra.mxu0 %v3752
        %v3754 = vand.u32 %v3386, 4294901760
        %3755 = vmatpush.msra.mxu0 %v3754
        %v3756 = vand.u32 %v3385, 4294901760
        %3757 = vmatpush.msra.mxu0 %v3756
        %v3758 = vand.u32 %v3384, 4294901760
        %3759 = vmatpush.msra.mxu0 %v3758
        %v3760 = vand.u32 %v3383, 4294901760
        %3761 = vmatpush.msra.mxu0 %v3760
        %v3762 = vand.u32 %v3380, 4294901760
        %3763 = vmatmul.f32.gmra.mxu0 %v3762
        %v3764 = vpop.f32.mrf.mxu0
        %v3765 = vadd.f32 %v3724, %v3764
        %v3766 = vand.u32 %v3381, 4294901760
        %3767 = vmatmul.f32.gmra.mxu0 %v3766
        %v3768 = vpop.f32.mrf.mxu0
        %v3769 = vadd.f32 %v3728, %v3768
        %3770 = vdwg.mxu0
        %v3771 = vadd.f32 %v2985, %v3765
        %v3772 = vadd.f32 %v2986, %v3769
        %v3773 = vld [vmem:[%s242 + $0x4] sm:$0xff]
        %v3774 = vld [vmem:[%s242 + $0xc] sm:$0xff]
        %s3775 = scalar_lea.vmem %s1, 1408
        %v3776 = vld [vmem:[%s3775] sm:$0xff]
        %v3777 = vld [vmem:[%s3775 + $0x8] sm:$0xff]
        %v3778 = vld [vmem:[%s3775 + $0x10] sm:$0xff]
        %v3779 = vld [vmem:[%s3775 + $0x18] sm:$0xff]
        %v3780 = vld [vmem:[%s3775 + $0x20] sm:$0xff]
        %v3781 = vld [vmem:[%s3775 + $0x28] sm:$0xff]
        %v3782 = vld [vmem:[%s3775 + $0x30] sm:$0xff]
        %v3783 = vld [vmem:[%s3775 + $0x38] sm:$0xff]
        %v3784 = vld [vmem:[%s3775 + $0x40] sm:$0xff]
        %v3785 = vld [vmem:[%s3775 + $0x48] sm:$0xff]
        %v3786 = vld [vmem:[%s3775 + $0x50] sm:$0xff]
        %v3787 = vld [vmem:[%s3775 + $0x58] sm:$0xff]
        %v3788 = vld [vmem:[%s3775 + $0x60] sm:$0xff]
        %v3789 = vld [vmem:[%s3775 + $0x68] sm:$0xff]
        %v3790 = vld [vmem:[%s3775 + $0x70] sm:$0xff]
        %v3791 = vld [vmem:[%s3775 + $0x78] sm:$0xff]
        %v3792 = vand.u32 %v3791, 4294901760
        %3793 = vmatpush.msra.mxu0 %v3792
        %v3794 = vand.u32 %v3790, 4294901760
        %3795 = vmatpush.msra.mxu0 %v3794
        %v3796 = vand.u32 %v3789, 4294901760
        %3797 = vmatpush.msra.mxu0 %v3796
        %v3798 = vand.u32 %v3788, 4294901760
        %3799 = vmatpush.msra.mxu0 %v3798
        %v3800 = vand.u32 %v3787, 4294901760
        %3801 = vmatpush.msra.mxu0 %v3800
        %v3802 = vand.u32 %v3786, 4294901760
        %3803 = vmatpush.msra.mxu0 %v3802
        %v3804 = vand.u32 %v3785, 4294901760
        %3805 = vmatpush.msra.mxu0 %v3804
        %v3806 = vand.u32 %v3784, 4294901760
        %3807 = vmatpush.msra.mxu0 %v3806
        %v3808 = vand.u32 %v3783, 4294901760
        %3809 = vmatpush.msra.mxu0 %v3808
        %v3810 = vand.u32 %v3782, 4294901760
        %3811 = vmatpush.msra.mxu0 %v3810
        %v3812 = vand.u32 %v3781, 4294901760
        %3813 = vmatpush.msra.mxu0 %v3812
        %v3814 = vand.u32 %v3780, 4294901760
        %3815 = vmatpush.msra.mxu0 %v3814
        %v3816 = vand.u32 %v3779, 4294901760
        %3817 = vmatpush.msra.mxu0 %v3816
        %v3818 = vand.u32 %v3778, 4294901760
        %3819 = vmatpush.msra.mxu0 %v3818
        %v3820 = vand.u32 %v3777, 4294901760
        %3821 = vmatpush.msra.mxu0 %v3820
        %v3822 = vand.u32 %v3776, 4294901760
        %3823 = vmatpush.msra.mxu0 %v3822
        %v3824 = vand.u32 %v3773, 4294901760
        %v3825 = vsub.f32 %v3773, %v3824
        %v3826 = vand.u32 %v3825, 4294901760
        %v3827 = vsub.f32 %v3825, %v3826
        %v3828 = vand.u32 %v3827, 4294901760
        %3829 = vmatmul.f32.gmra.mxu0 %v3828
        %v3830 = vpop.f32.mrf.mxu0
        %v3831 = vadd.f32 0.0, %v3830
        %v3832 = vand.u32 %v3774, 4294901760
        %v3833 = vsub.f32 %v3774, %v3832
        %v3834 = vand.u32 %v3833, 4294901760
        %v3835 = vsub.f32 %v3833, %v3834
        %v3836 = vand.u32 %v3835, 4294901760
        %3837 = vmatmul.f32.gmra.mxu0 %v3836
        %v3838 = vpop.f32.mrf.mxu0
        %v3839 = vadd.f32 0.0, %v3838
        %3840 = vdwg.mxu0
        %v3841 = vand.u32 %v3791, 4294901760
        %v3842 = vsub.f32 %v3791, %v3841
        %v3843 = vand.u32 %v3842, 4294901760
        %v3844 = vsub.f32 %v3842, %v3843
        %v3845 = vand.u32 %v3844, 4294901760
        %3846 = vmatpush.msra.mxu0 %v3845
        %v3847 = vand.u32 %v3790, 4294901760
        %v3848 = vsub.f32 %v3790, %v3847
        %v3849 = vand.u32 %v3848, 4294901760
        %v3850 = vsub.f32 %v3848, %v3849
        %v3851 = vand.u32 %v3850, 4294901760
        %3852 = vmatpush.msra.mxu0 %v3851
        %v3853 = vand.u32 %v3789, 4294901760
        %v3854 = vsub.f32 %v3789, %v3853
        %v3855 = vand.u32 %v3854, 4294901760
        %v3856 = vsub.f32 %v3854, %v3855
        %v3857 = vand.u32 %v3856, 4294901760
        %3858 = vmatpush.msra.mxu0 %v3857
        %v3859 = vand.u32 %v3788, 4294901760
        %v3860 = vsub.f32 %v3788, %v3859
        %v3861 = vand.u32 %v3860, 4294901760
        %v3862 = vsub.f32 %v3860, %v3861
        %v3863 = vand.u32 %v3862, 4294901760
        %3864 = vmatpush.msra.mxu0 %v3863
        %v3865 = vand.u32 %v3787, 4294901760
        %v3866 = vsub.f32 %v3787, %v3865
        %v3867 = vand.u32 %v3866, 4294901760
        %v3868 = vsub.f32 %v3866, %v3867
        %v3869 = vand.u32 %v3868, 4294901760
        %3870 = vmatpush.msra.mxu0 %v3869
        %v3871 = vand.u32 %v3786, 4294901760
        %v3872 = vsub.f32 %v3786, %v3871
        %v3873 = vand.u32 %v3872, 4294901760
        %v3874 = vsub.f32 %v3872, %v3873
        %v3875 = vand.u32 %v3874, 4294901760
        %3876 = vmatpush.msra.mxu0 %v3875
        %v3877 = vand.u32 %v3785, 4294901760
        %v3878 = vsub.f32 %v3785, %v3877
        %v3879 = vand.u32 %v3878, 4294901760
        %v3880 = vsub.f32 %v3878, %v3879
        %v3881 = vand.u32 %v3880, 4294901760
        %3882 = vmatpush.msra.mxu0 %v3881
        %v3883 = vand.u32 %v3784, 4294901760
        %v3884 = vsub.f32 %v3784, %v3883
        %v3885 = vand.u32 %v3884, 4294901760
        %v3886 = vsub.f32 %v3884, %v3885
        %v3887 = vand.u32 %v3886, 4294901760
        %3888 = vmatpush.msra.mxu0 %v3887
        %v3889 = vand.u32 %v3783, 4294901760
        %v3890 = vsub.f32 %v3783, %v3889
        %v3891 = vand.u32 %v3890, 4294901760
        %v3892 = vsub.f32 %v3890, %v3891
        %v3893 = vand.u32 %v3892, 4294901760
        %3894 = vmatpush.msra.mxu0 %v3893
        %v3895 = vand.u32 %v3782, 4294901760
        %v3896 = vsub.f32 %v3782, %v3895
        %v3897 = vand.u32 %v3896, 4294901760
        %v3898 = vsub.f32 %v3896, %v3897
        %v3899 = vand.u32 %v3898, 4294901760
        %3900 = vmatpush.msra.mxu0 %v3899
        %v3901 = vand.u32 %v3781, 4294901760
        %v3902 = vsub.f32 %v3781, %v3901
        %v3903 = vand.u32 %v3902, 4294901760
        %v3904 = vsub.f32 %v3902, %v3903
        %v3905 = vand.u32 %v3904, 4294901760
        %3906 = vmatpush.msra.mxu0 %v3905
        %v3907 = vand.u32 %v3780, 4294901760
        %v3908 = vsub.f32 %v3780, %v3907
        %v3909 = vand.u32 %v3908, 4294901760
        %v3910 = vsub.f32 %v3908, %v3909
        %v3911 = vand.u32 %v3910, 4294901760
        %3912 = vmatpush.msra.mxu0 %v3911
        %v3913 = vand.u32 %v3779, 4294901760
        %v3914 = vsub.f32 %v3779, %v3913
        %v3915 = vand.u32 %v3914, 4294901760
        %v3916 = vsub.f32 %v3914, %v3915
        %v3917 = vand.u32 %v3916, 4294901760
        %3918 = vmatpush.msra.mxu0 %v3917
        %v3919 = vand.u32 %v3778, 4294901760
        %v3920 = vsub.f32 %v3778, %v3919
        %v3921 = vand.u32 %v3920, 4294901760
        %v3922 = vsub.f32 %v3920, %v3921
        %v3923 = vand.u32 %v3922, 4294901760
        %3924 = vmatpush.msra.mxu0 %v3923
        %v3925 = vand.u32 %v3777, 4294901760
        %v3926 = vsub.f32 %v3777, %v3925
        %v3927 = vand.u32 %v3926, 4294901760
        %v3928 = vsub.f32 %v3926, %v3927
        %v3929 = vand.u32 %v3928, 4294901760
        %3930 = vmatpush.msra.mxu0 %v3929
        %v3931 = vand.u32 %v3776, 4294901760
        %v3932 = vsub.f32 %v3776, %v3931
        %v3933 = vand.u32 %v3932, 4294901760
        %v3934 = vsub.f32 %v3932, %v3933
        %v3935 = vand.u32 %v3934, 4294901760
        %3936 = vmatpush.msra.mxu0 %v3935
        %v3937 = vand.u32 %v3773, 4294901760
        %3938 = vmatmul.f32.gmra.mxu0 %v3937
        %v3939 = vpop.f32.mrf.mxu0
        %v3940 = vadd.f32 %v3831, %v3939
        %v3941 = vand.u32 %v3774, 4294901760
        %3942 = vmatmul.f32.gmra.mxu0 %v3941
        %v3943 = vpop.f32.mrf.mxu0
        %v3944 = vadd.f32 %v3839, %v3943
        %3945 = vdwg.mxu0
        %v3946 = vand.u32 %v3791, 4294901760
        %v3947 = vsub.f32 %v3791, %v3946
        %3948 = vmatpush.msra.mxu0 %v3947
        %v3949 = vand.u32 %v3790, 4294901760
        %v3950 = vsub.f32 %v3790, %v3949
        %3951 = vmatpush.msra.mxu0 %v3950
        %v3952 = vand.u32 %v3789, 4294901760
        %v3953 = vsub.f32 %v3789, %v3952
        %3954 = vmatpush.msra.mxu0 %v3953
        %v3955 = vand.u32 %v3788, 4294901760
        %v3956 = vsub.f32 %v3788, %v3955
        %3957 = vmatpush.msra.mxu0 %v3956
        %v3958 = vand.u32 %v3787, 4294901760
        %v3959 = vsub.f32 %v3787, %v3958
        %3960 = vmatpush.msra.mxu0 %v3959
        %v3961 = vand.u32 %v3786, 4294901760
        %v3962 = vsub.f32 %v3786, %v3961
        %3963 = vmatpush.msra.mxu0 %v3962
        %v3964 = vand.u32 %v3785, 4294901760
        %v3965 = vsub.f32 %v3785, %v3964
        %3966 = vmatpush.msra.mxu0 %v3965
        %v3967 = vand.u32 %v3784, 4294901760
        %v3968 = vsub.f32 %v3784, %v3967
        %3969 = vmatpush.msra.mxu0 %v3968
        %v3970 = vand.u32 %v3783, 4294901760
        %v3971 = vsub.f32 %v3783, %v3970
        %3972 = vmatpush.msra.mxu0 %v3971
        %v3973 = vand.u32 %v3782, 4294901760
        %v3974 = vsub.f32 %v3782, %v3973
        %3975 = vmatpush.msra.mxu0 %v3974
        %v3976 = vand.u32 %v3781, 4294901760
        %v3977 = vsub.f32 %v3781, %v3976
        %3978 = vmatpush.msra.mxu0 %v3977
        %v3979 = vand.u32 %v3780, 4294901760
        %v3980 = vsub.f32 %v3780, %v3979
        %3981 = vmatpush.msra.mxu0 %v3980
        %v3982 = vand.u32 %v3779, 4294901760
        %v3983 = vsub.f32 %v3779, %v3982
        %3984 = vmatpush.msra.mxu0 %v3983
        %v3985 = vand.u32 %v3778, 4294901760
        %v3986 = vsub.f32 %v3778, %v3985
        %3987 = vmatpush.msra.mxu0 %v3986
        %v3988 = vand.u32 %v3777, 4294901760
        %v3989 = vsub.f32 %v3777, %v3988
        %3990 = vmatpush.msra.mxu0 %v3989
        %v3991 = vand.u32 %v3776, 4294901760
        %v3992 = vsub.f32 %v3776, %v3991
        %3993 = vmatpush.msra.mxu0 %v3992
        %v3994 = vand.u32 %v3773, 4294901760
        %v3995 = vsub.f32 %v3773, %v3994
        %3996 = vmatmul.f32.gmra.mxu0 %v3995
        %v3997 = vpop.f32.mrf.mxu0
        %v3998 = vadd.f32 %v3940, %v3997
        %v3999 = vand.u32 %v3774, 4294901760
        %v4000 = vsub.f32 %v3774, %v3999
        %4001 = vmatmul.f32.gmra.mxu0 %v4000
        %v4002 = vpop.f32.mrf.mxu0
        %v4003 = vadd.f32 %v3944, %v4002
        %4004 = vdwg.mxu0
        %v4005 = vand.u32 %v3791, 4294901760
        %4006 = vmatpush.msra.mxu0 %v4005
        %v4007 = vand.u32 %v3790, 4294901760
        %4008 = vmatpush.msra.mxu0 %v4007
        %v4009 = vand.u32 %v3789, 4294901760
        %4010 = vmatpush.msra.mxu0 %v4009
        %v4011 = vand.u32 %v3788, 4294901760
        %4012 = vmatpush.msra.mxu0 %v4011
        %v4013 = vand.u32 %v3787, 4294901760
        %4014 = vmatpush.msra.mxu0 %v4013
        %v4015 = vand.u32 %v3786, 4294901760
        %4016 = vmatpush.msra.mxu0 %v4015
        %v4017 = vand.u32 %v3785, 4294901760
        %4018 = vmatpush.msra.mxu0 %v4017
        %v4019 = vand.u32 %v3784, 4294901760
        %4020 = vmatpush.msra.mxu0 %v4019
        %v4021 = vand.u32 %v3783, 4294901760
        %4022 = vmatpush.msra.mxu0 %v4021
        %v4023 = vand.u32 %v3782, 4294901760
        %4024 = vmatpush.msra.mxu0 %v4023
        %v4025 = vand.u32 %v3781, 4294901760
        %4026 = vmatpush.msra.mxu0 %v4025
        %v4027 = vand.u32 %v3780, 4294901760
        %4028 = vmatpush.msra.mxu0 %v4027
        %v4029 = vand.u32 %v3779, 4294901760
        %4030 = vmatpush.msra.mxu0 %v4029
        %v4031 = vand.u32 %v3778, 4294901760
        %4032 = vmatpush.msra.mxu0 %v4031
        %v4033 = vand.u32 %v3777, 4294901760
        %4034 = vmatpush.msra.mxu0 %v4033
        %v4035 = vand.u32 %v3776, 4294901760
        %4036 = vmatpush.msra.mxu0 %v4035
        %v4037 = vand.u32 %v3773, 4294901760
        %v4038 = vsub.f32 %v3773, %v4037
        %v4039 = vand.u32 %v4038, 4294901760
        %4040 = vmatmul.f32.gmra.mxu0 %v4039
        %v4041 = vpop.f32.mrf.mxu0
        %v4042 = vadd.f32 %v3998, %v4041
        %v4043 = vand.u32 %v3774, 4294901760
        %v4044 = vsub.f32 %v3774, %v4043
        %v4045 = vand.u32 %v4044, 4294901760
        %4046 = vmatmul.f32.gmra.mxu0 %v4045
        %v4047 = vpop.f32.mrf.mxu0
        %v4048 = vadd.f32 %v4003, %v4047
        %4049 = vdwg.mxu0
        %v4050 = vand.u32 %v3791, 4294901760
        %v4051 = vsub.f32 %v3791, %v4050
        %v4052 = vand.u32 %v4051, 4294901760
        %4053 = vmatpush.msra.mxu0 %v4052
        %v4054 = vand.u32 %v3790, 4294901760
        %v4055 = vsub.f32 %v3790, %v4054
        %v4056 = vand.u32 %v4055, 4294901760
        %4057 = vmatpush.msra.mxu0 %v4056
        %v4058 = vand.u32 %v3789, 4294901760
        %v4059 = vsub.f32 %v3789, %v4058
        %v4060 = vand.u32 %v4059, 4294901760
        %4061 = vmatpush.msra.mxu0 %v4060
        %v4062 = vand.u32 %v3788, 4294901760
        %v4063 = vsub.f32 %v3788, %v4062
        %v4064 = vand.u32 %v4063, 4294901760
        %4065 = vmatpush.msra.mxu0 %v4064
        %v4066 = vand.u32 %v3787, 4294901760
        %v4067 = vsub.f32 %v3787, %v4066
        %v4068 = vand.u32 %v4067, 4294901760
        %4069 = vmatpush.msra.mxu0 %v4068
        %v4070 = vand.u32 %v3786, 4294901760
        %v4071 = vsub.f32 %v3786, %v4070
        %v4072 = vand.u32 %v4071, 4294901760
        %4073 = vmatpush.msra.mxu0 %v4072
        %v4074 = vand.u32 %v3785, 4294901760
        %v4075 = vsub.f32 %v3785, %v4074
        %v4076 = vand.u32 %v4075, 4294901760
        %4077 = vmatpush.msra.mxu0 %v4076
        %v4078 = vand.u32 %v3784, 4294901760
        %v4079 = vsub.f32 %v3784, %v4078
        %v4080 = vand.u32 %v4079, 4294901760
        %4081 = vmatpush.msra.mxu0 %v4080
        %v4082 = vand.u32 %v3783, 4294901760
        %v4083 = vsub.f32 %v3783, %v4082
        %v4084 = vand.u32 %v4083, 4294901760
        %4085 = vmatpush.msra.mxu0 %v4084
        %v4086 = vand.u32 %v3782, 4294901760
        %v4087 = vsub.f32 %v3782, %v4086
        %v4088 = vand.u32 %v4087, 4294901760
        %4089 = vmatpush.msra.mxu0 %v4088
        %v4090 = vand.u32 %v3781, 4294901760
        %v4091 = vsub.f32 %v3781, %v4090
        %v4092 = vand.u32 %v4091, 4294901760
        %4093 = vmatpush.msra.mxu0 %v4092
        %v4094 = vand.u32 %v3780, 4294901760
        %v4095 = vsub.f32 %v3780, %v4094
        %v4096 = vand.u32 %v4095, 4294901760
        %4097 = vmatpush.msra.mxu0 %v4096
        %v4098 = vand.u32 %v3779, 4294901760
        %v4099 = vsub.f32 %v3779, %v4098
        %v4100 = vand.u32 %v4099, 4294901760
        %4101 = vmatpush.msra.mxu0 %v4100
        %v4102 = vand.u32 %v3778, 4294901760
        %v4103 = vsub.f32 %v3778, %v4102
        %v4104 = vand.u32 %v4103, 4294901760
        %4105 = vmatpush.msra.mxu0 %v4104
        %v4106 = vand.u32 %v3777, 4294901760
        %v4107 = vsub.f32 %v3777, %v4106
        %v4108 = vand.u32 %v4107, 4294901760
        %4109 = vmatpush.msra.mxu0 %v4108
        %v4110 = vand.u32 %v3776, 4294901760
        %v4111 = vsub.f32 %v3776, %v4110
        %v4112 = vand.u32 %v4111, 4294901760
        %4113 = vmatpush.msra.mxu0 %v4112
        %v4114 = vand.u32 %v3773, 4294901760
        %4115 = vmatmul.f32.gmra.mxu0 %v4114
        %v4116 = vpop.f32.mrf.mxu0
        %v4117 = vadd.f32 %v4042, %v4116
        %v4118 = vand.u32 %v3774, 4294901760
        %4119 = vmatmul.f32.gmra.mxu0 %v4118
        %v4120 = vpop.f32.mrf.mxu0
        %v4121 = vadd.f32 %v4048, %v4120
        %4122 = vdwg.mxu0
        %v4123 = vand.u32 %v3791, 4294901760
        %4124 = vmatpush.msra.mxu0 %v4123
        %v4125 = vand.u32 %v3790, 4294901760
        %4126 = vmatpush.msra.mxu0 %v4125
        %v4127 = vand.u32 %v3789, 4294901760
        %4128 = vmatpush.msra.mxu0 %v4127
        %v4129 = vand.u32 %v3788, 4294901760
        %4130 = vmatpush.msra.mxu0 %v4129
        %v4131 = vand.u32 %v3787, 4294901760
        %4132 = vmatpush.msra.mxu0 %v4131
        %v4133 = vand.u32 %v3786, 4294901760
        %4134 = vmatpush.msra.mxu0 %v4133
        %v4135 = vand.u32 %v3785, 4294901760
        %4136 = vmatpush.msra.mxu0 %v4135
        %v4137 = vand.u32 %v3784, 4294901760
        %4138 = vmatpush.msra.mxu0 %v4137
        %v4139 = vand.u32 %v3783, 4294901760
        %4140 = vmatpush.msra.mxu0 %v4139
        %v4141 = vand.u32 %v3782, 4294901760
        %4142 = vmatpush.msra.mxu0 %v4141
        %v4143 = vand.u32 %v3781, 4294901760
        %4144 = vmatpush.msra.mxu0 %v4143
        %v4145 = vand.u32 %v3780, 4294901760
        %4146 = vmatpush.msra.mxu0 %v4145
        %v4147 = vand.u32 %v3779, 4294901760
        %4148 = vmatpush.msra.mxu0 %v4147
        %v4149 = vand.u32 %v3778, 4294901760
        %4150 = vmatpush.msra.mxu0 %v4149
        %v4151 = vand.u32 %v3777, 4294901760
        %4152 = vmatpush.msra.mxu0 %v4151
        %v4153 = vand.u32 %v3776, 4294901760
        %4154 = vmatpush.msra.mxu0 %v4153
        %v4155 = vand.u32 %v3773, 4294901760
        %4156 = vmatmul.f32.gmra.mxu0 %v4155
        %v4157 = vpop.f32.mrf.mxu0
        %v4158 = vadd.f32 %v4117, %v4157
        %v4159 = vand.u32 %v3774, 4294901760
        %4160 = vmatmul.f32.gmra.mxu0 %v4159
        %v4161 = vpop.f32.mrf.mxu0
        %v4162 = vadd.f32 %v4121, %v4161
        %4163 = vdwg.mxu0
        %v4164 = vadd.f32 %v3378, %v4158
        %v4165 = vadd.f32 %v3379, %v4162
        %v4166 = vld [vmem:[#allocation4 + $0x5] sm:$0xff]
        %v4167 = vld [vmem:[#allocation4 + $0xd] sm:$0xff]
        %s4168 = scalar_lea.vmem %s1, 640
        %v4169 = vld [vmem:[%s4168] sm:$0xff]
        %v4170 = vld [vmem:[%s4168 + $0x8] sm:$0xff]
        %v4171 = vld [vmem:[%s4168 + $0x10] sm:$0xff]
        %v4172 = vld [vmem:[%s4168 + $0x18] sm:$0xff]
        %v4173 = vld [vmem:[%s4168 + $0x20] sm:$0xff]
        %v4174 = vld [vmem:[%s4168 + $0x28] sm:$0xff]
        %v4175 = vld [vmem:[%s4168 + $0x30] sm:$0xff]
        %v4176 = vld [vmem:[%s4168 + $0x38] sm:$0xff]
        %v4177 = vld [vmem:[%s4168 + $0x40] sm:$0xff]
        %v4178 = vld [vmem:[%s4168 + $0x48] sm:$0xff]
        %v4179 = vld [vmem:[%s4168 + $0x50] sm:$0xff]
        %v4180 = vld [vmem:[%s4168 + $0x58] sm:$0xff]
        %v4181 = vld [vmem:[%s4168 + $0x60] sm:$0xff]
        %v4182 = vld [vmem:[%s4168 + $0x68] sm:$0xff]
        %v4183 = vld [vmem:[%s4168 + $0x70] sm:$0xff]
        %v4184 = vld [vmem:[%s4168 + $0x78] sm:$0xff]
        %v4185 = vand.u32 %v4184, 4294901760
        %4186 = vmatpush.msra.mxu0 %v4185
        %v4187 = vand.u32 %v4183, 4294901760
        %4188 = vmatpush.msra.mxu0 %v4187
        %v4189 = vand.u32 %v4182, 4294901760
        %4190 = vmatpush.msra.mxu0 %v4189
        %v4191 = vand.u32 %v4181, 4294901760
        %4192 = vmatpush.msra.mxu0 %v4191
        %v4193 = vand.u32 %v4180, 4294901760
        %4194 = vmatpush.msra.mxu0 %v4193
        %v4195 = vand.u32 %v4179, 4294901760
        %4196 = vmatpush.msra.mxu0 %v4195
        %v4197 = vand.u32 %v4178, 4294901760
        %4198 = vmatpush.msra.mxu0 %v4197
        %v4199 = vand.u32 %v4177, 4294901760
        %4200 = vmatpush.msra.mxu0 %v4199
        %v4201 = vand.u32 %v4176, 4294901760
        %4202 = vmatpush.msra.mxu0 %v4201
        %v4203 = vand.u32 %v4175, 4294901760
        %4204 = vmatpush.msra.mxu0 %v4203
        %v4205 = vand.u32 %v4174, 4294901760
        %4206 = vmatpush.msra.mxu0 %v4205
        %v4207 = vand.u32 %v4173, 4294901760
        %4208 = vmatpush.msra.mxu0 %v4207
        %v4209 = vand.u32 %v4172, 4294901760
        %4210 = vmatpush.msra.mxu0 %v4209
        %v4211 = vand.u32 %v4171, 4294901760
        %4212 = vmatpush.msra.mxu0 %v4211
        %v4213 = vand.u32 %v4170, 4294901760
        %4214 = vmatpush.msra.mxu0 %v4213
        %v4215 = vand.u32 %v4169, 4294901760
        %4216 = vmatpush.msra.mxu0 %v4215
        %v4217 = vand.u32 %v4166, 4294901760
        %v4218 = vsub.f32 %v4166, %v4217
        %v4219 = vand.u32 %v4218, 4294901760
        %v4220 = vsub.f32 %v4218, %v4219
        %v4221 = vand.u32 %v4220, 4294901760
        %4222 = vmatmul.f32.gmra.mxu0 %v4221
        %v4223 = vpop.f32.mrf.mxu0
        %v4224 = vadd.f32 0.0, %v4223
        %v4225 = vand.u32 %v4167, 4294901760
        %v4226 = vsub.f32 %v4167, %v4225
        %v4227 = vand.u32 %v4226, 4294901760
        %v4228 = vsub.f32 %v4226, %v4227
        %v4229 = vand.u32 %v4228, 4294901760
        %4230 = vmatmul.f32.gmra.mxu0 %v4229
        %v4231 = vpop.f32.mrf.mxu0
        %v4232 = vadd.f32 0.0, %v4231
        %4233 = vdwg.mxu0
        %v4234 = vand.u32 %v4184, 4294901760
        %v4235 = vsub.f32 %v4184, %v4234
        %v4236 = vand.u32 %v4235, 4294901760
        %v4237 = vsub.f32 %v4235, %v4236
        %v4238 = vand.u32 %v4237, 4294901760
        %4239 = vmatpush.msra.mxu0 %v4238
        %v4240 = vand.u32 %v4183, 4294901760
        %v4241 = vsub.f32 %v4183, %v4240
        %v4242 = vand.u32 %v4241, 4294901760
        %v4243 = vsub.f32 %v4241, %v4242
        %v4244 = vand.u32 %v4243, 4294901760
        %4245 = vmatpush.msra.mxu0 %v4244
        %v4246 = vand.u32 %v4182, 4294901760
        %v4247 = vsub.f32 %v4182, %v4246
        %v4248 = vand.u32 %v4247, 4294901760
        %v4249 = vsub.f32 %v4247, %v4248
        %v4250 = vand.u32 %v4249, 4294901760
        %4251 = vmatpush.msra.mxu0 %v4250
        %v4252 = vand.u32 %v4181, 4294901760
        %v4253 = vsub.f32 %v4181, %v4252
        %v4254 = vand.u32 %v4253, 4294901760
        %v4255 = vsub.f32 %v4253, %v4254
        %v4256 = vand.u32 %v4255, 4294901760
        %4257 = vmatpush.msra.mxu0 %v4256
        %v4258 = vand.u32 %v4180, 4294901760
        %v4259 = vsub.f32 %v4180, %v4258
        %v4260 = vand.u32 %v4259, 4294901760
        %v4261 = vsub.f32 %v4259, %v4260
        %v4262 = vand.u32 %v4261, 4294901760
        %4263 = vmatpush.msra.mxu0 %v4262
        %v4264 = vand.u32 %v4179, 4294901760
        %v4265 = vsub.f32 %v4179, %v4264
        %v4266 = vand.u32 %v4265, 4294901760
        %v4267 = vsub.f32 %v4265, %v4266
        %v4268 = vand.u32 %v4267, 4294901760
        %4269 = vmatpush.msra.mxu0 %v4268
        %v4270 = vand.u32 %v4178, 4294901760
        %v4271 = vsub.f32 %v4178, %v4270
        %v4272 = vand.u32 %v4271, 4294901760
        %v4273 = vsub.f32 %v4271, %v4272
        %v4274 = vand.u32 %v4273, 4294901760
        %4275 = vmatpush.msra.mxu0 %v4274
        %v4276 = vand.u32 %v4177, 4294901760
        %v4277 = vsub.f32 %v4177, %v4276
        %v4278 = vand.u32 %v4277, 4294901760
        %v4279 = vsub.f32 %v4277, %v4278
        %v4280 = vand.u32 %v4279, 4294901760
        %4281 = vmatpush.msra.mxu0 %v4280
        %v4282 = vand.u32 %v4176, 4294901760
        %v4283 = vsub.f32 %v4176, %v4282
        %v4284 = vand.u32 %v4283, 4294901760
        %v4285 = vsub.f32 %v4283, %v4284
        %v4286 = vand.u32 %v4285, 4294901760
        %4287 = vmatpush.msra.mxu0 %v4286
        %v4288 = vand.u32 %v4175, 4294901760
        %v4289 = vsub.f32 %v4175, %v4288
        %v4290 = vand.u32 %v4289, 4294901760
        %v4291 = vsub.f32 %v4289, %v4290
        %v4292 = vand.u32 %v4291, 4294901760
        %4293 = vmatpush.msra.mxu0 %v4292
        %v4294 = vand.u32 %v4174, 4294901760
        %v4295 = vsub.f32 %v4174, %v4294
        %v4296 = vand.u32 %v4295, 4294901760
        %v4297 = vsub.f32 %v4295, %v4296
        %v4298 = vand.u32 %v4297, 4294901760
        %4299 = vmatpush.msra.mxu0 %v4298
        %v4300 = vand.u32 %v4173, 4294901760
        %v4301 = vsub.f32 %v4173, %v4300
        %v4302 = vand.u32 %v4301, 4294901760
        %v4303 = vsub.f32 %v4301, %v4302
        %v4304 = vand.u32 %v4303, 4294901760
        %4305 = vmatpush.msra.mxu0 %v4304
        %v4306 = vand.u32 %v4172, 4294901760
        %v4307 = vsub.f32 %v4172, %v4306
        %v4308 = vand.u32 %v4307, 4294901760
        %v4309 = vsub.f32 %v4307, %v4308
        %v4310 = vand.u32 %v4309, 4294901760
        %4311 = vmatpush.msra.mxu0 %v4310
        %v4312 = vand.u32 %v4171, 4294901760
        %v4313 = vsub.f32 %v4171, %v4312
        %v4314 = vand.u32 %v4313, 4294901760
        %v4315 = vsub.f32 %v4313, %v4314
        %v4316 = vand.u32 %v4315, 4294901760
        %4317 = vmatpush.msra.mxu0 %v4316
        %v4318 = vand.u32 %v4170, 4294901760
        %v4319 = vsub.f32 %v4170, %v4318
        %v4320 = vand.u32 %v4319, 4294901760
        %v4321 = vsub.f32 %v4319, %v4320
        %v4322 = vand.u32 %v4321, 4294901760
        %4323 = vmatpush.msra.mxu0 %v4322
        %v4324 = vand.u32 %v4169, 4294901760
        %v4325 = vsub.f32 %v4169, %v4324
        %v4326 = vand.u32 %v4325, 4294901760
        %v4327 = vsub.f32 %v4325, %v4326
        %v4328 = vand.u32 %v4327, 4294901760
        %4329 = vmatpush.msra.mxu0 %v4328
        %v4330 = vand.u32 %v4166, 4294901760
        %4331 = vmatmul.f32.gmra.mxu0 %v4330
        %v4332 = vpop.f32.mrf.mxu0
        %v4333 = vadd.f32 %v4224, %v4332
        %v4334 = vand.u32 %v4167, 4294901760
        %4335 = vmatmul.f32.gmra.mxu0 %v4334
        %v4336 = vpop.f32.mrf.mxu0
        %v4337 = vadd.f32 %v4232, %v4336
        %4338 = vdwg.mxu0
        %v4339 = vand.u32 %v4184, 4294901760
        %v4340 = vsub.f32 %v4184, %v4339
        %4341 = vmatpush.msra.mxu0 %v4340
        %v4342 = vand.u32 %v4183, 4294901760
        %v4343 = vsub.f32 %v4183, %v4342
        %4344 = vmatpush.msra.mxu0 %v4343
        %v4345 = vand.u32 %v4182, 4294901760
        %v4346 = vsub.f32 %v4182, %v4345
        %4347 = vmatpush.msra.mxu0 %v4346
        %v4348 = vand.u32 %v4181, 4294901760
        %v4349 = vsub.f32 %v4181, %v4348
        %4350 = vmatpush.msra.mxu0 %v4349
        %v4351 = vand.u32 %v4180, 4294901760
        %v4352 = vsub.f32 %v4180, %v4351
        %4353 = vmatpush.msra.mxu0 %v4352
        %v4354 = vand.u32 %v4179, 4294901760
        %v4355 = vsub.f32 %v4179, %v4354
        %4356 = vmatpush.msra.mxu0 %v4355
        %v4357 = vand.u32 %v4178, 4294901760
        %v4358 = vsub.f32 %v4178, %v4357
        %4359 = vmatpush.msra.mxu0 %v4358
        %v4360 = vand.u32 %v4177, 4294901760
        %v4361 = vsub.f32 %v4177, %v4360
        %4362 = vmatpush.msra.mxu0 %v4361
        %v4363 = vand.u32 %v4176, 4294901760
        %v4364 = vsub.f32 %v4176, %v4363
        %4365 = vmatpush.msra.mxu0 %v4364
        %v4366 = vand.u32 %v4175, 4294901760
        %v4367 = vsub.f32 %v4175, %v4366
        %4368 = vmatpush.msra.mxu0 %v4367
        %v4369 = vand.u32 %v4174, 4294901760
        %v4370 = vsub.f32 %v4174, %v4369
        %4371 = vmatpush.msra.mxu0 %v4370
        %v4372 = vand.u32 %v4173, 4294901760
        %v4373 = vsub.f32 %v4173, %v4372
        %4374 = vmatpush.msra.mxu0 %v4373
        %v4375 = vand.u32 %v4172, 4294901760
        %v4376 = vsub.f32 %v4172, %v4375
        %4377 = vmatpush.msra.mxu0 %v4376
        %v4378 = vand.u32 %v4171, 4294901760
        %v4379 = vsub.f32 %v4171, %v4378
        %4380 = vmatpush.msra.mxu0 %v4379
        %v4381 = vand.u32 %v4170, 4294901760
        %v4382 = vsub.f32 %v4170, %v4381
        %4383 = vmatpush.msra.mxu0 %v4382
        %v4384 = vand.u32 %v4169, 4294901760
        %v4385 = vsub.f32 %v4169, %v4384
        %4386 = vmatpush.msra.mxu0 %v4385
        %v4387 = vand.u32 %v4166, 4294901760
        %v4388 = vsub.f32 %v4166, %v4387
        %4389 = vmatmul.f32.gmra.mxu0 %v4388
        %v4390 = vpop.f32.mrf.mxu0
        %v4391 = vadd.f32 %v4333, %v4390
        %v4392 = vand.u32 %v4167, 4294901760
        %v4393 = vsub.f32 %v4167, %v4392
        %4394 = vmatmul.f32.gmra.mxu0 %v4393
        %v4395 = vpop.f32.mrf.mxu0
        %v4396 = vadd.f32 %v4337, %v4395
        %4397 = vdwg.mxu0
        %v4398 = vand.u32 %v4184, 4294901760
        %4399 = vmatpush.msra.mxu0 %v4398
        %v4400 = vand.u32 %v4183, 4294901760
        %4401 = vmatpush.msra.mxu0 %v4400
        %v4402 = vand.u32 %v4182, 4294901760
        %4403 = vmatpush.msra.mxu0 %v4402
        %v4404 = vand.u32 %v4181, 4294901760
        %4405 = vmatpush.msra.mxu0 %v4404
        %v4406 = vand.u32 %v4180, 4294901760
        %4407 = vmatpush.msra.mxu0 %v4406
        %v4408 = vand.u32 %v4179, 4294901760
        %4409 = vmatpush.msra.mxu0 %v4408
        %v4410 = vand.u32 %v4178, 4294901760
        %4411 = vmatpush.msra.mxu0 %v4410
        %v4412 = vand.u32 %v4177, 4294901760
        %4413 = vmatpush.msra.mxu0 %v4412
        %v4414 = vand.u32 %v4176, 4294901760
        %4415 = vmatpush.msra.mxu0 %v4414
        %v4416 = vand.u32 %v4175, 4294901760
        %4417 = vmatpush.msra.mxu0 %v4416
        %v4418 = vand.u32 %v4174, 4294901760
        %4419 = vmatpush.msra.mxu0 %v4418
        %v4420 = vand.u32 %v4173, 4294901760
        %4421 = vmatpush.msra.mxu0 %v4420
        %v4422 = vand.u32 %v4172, 4294901760
        %4423 = vmatpush.msra.mxu0 %v4422
        %v4424 = vand.u32 %v4171, 4294901760
        %4425 = vmatpush.msra.mxu0 %v4424
        %v4426 = vand.u32 %v4170, 4294901760
        %4427 = vmatpush.msra.mxu0 %v4426
        %v4428 = vand.u32 %v4169, 4294901760
        %4429 = vmatpush.msra.mxu0 %v4428
        %v4430 = vand.u32 %v4166, 4294901760
        %v4431 = vsub.f32 %v4166, %v4430
        %v4432 = vand.u32 %v4431, 4294901760
        %4433 = vmatmul.f32.gmra.mxu0 %v4432
        %v4434 = vpop.f32.mrf.mxu0
        %v4435 = vadd.f32 %v4391, %v4434
        %v4436 = vand.u32 %v4167, 4294901760
        %v4437 = vsub.f32 %v4167, %v4436
        %v4438 = vand.u32 %v4437, 4294901760
        %4439 = vmatmul.f32.gmra.mxu0 %v4438
        %v4440 = vpop.f32.mrf.mxu0
        %v4441 = vadd.f32 %v4396, %v4440
        %4442 = vdwg.mxu0
        %v4443 = vand.u32 %v4184, 4294901760
        %v4444 = vsub.f32 %v4184, %v4443
        %v4445 = vand.u32 %v4444, 4294901760
        %4446 = vmatpush.msra.mxu0 %v4445
        %v4447 = vand.u32 %v4183, 4294901760
        %v4448 = vsub.f32 %v4183, %v4447
        %v4449 = vand.u32 %v4448, 4294901760
        %4450 = vmatpush.msra.mxu0 %v4449
        %v4451 = vand.u32 %v4182, 4294901760
        %v4452 = vsub.f32 %v4182, %v4451
        %v4453 = vand.u32 %v4452, 4294901760
        %4454 = vmatpush.msra.mxu0 %v4453
        %v4455 = vand.u32 %v4181, 4294901760
        %v4456 = vsub.f32 %v4181, %v4455
        %v4457 = vand.u32 %v4456, 4294901760
        %4458 = vmatpush.msra.mxu0 %v4457
        %v4459 = vand.u32 %v4180, 4294901760
        %v4460 = vsub.f32 %v4180, %v4459
        %v4461 = vand.u32 %v4460, 4294901760
        %4462 = vmatpush.msra.mxu0 %v4461
        %v4463 = vand.u32 %v4179, 4294901760
        %v4464 = vsub.f32 %v4179, %v4463
        %v4465 = vand.u32 %v4464, 4294901760
        %4466 = vmatpush.msra.mxu0 %v4465
        %v4467 = vand.u32 %v4178, 4294901760
        %v4468 = vsub.f32 %v4178, %v4467
        %v4469 = vand.u32 %v4468, 4294901760
        %4470 = vmatpush.msra.mxu0 %v4469
        %v4471 = vand.u32 %v4177, 4294901760
        %v4472 = vsub.f32 %v4177, %v4471
        %v4473 = vand.u32 %v4472, 4294901760
        %4474 = vmatpush.msra.mxu0 %v4473
        %v4475 = vand.u32 %v4176, 4294901760
        %v4476 = vsub.f32 %v4176, %v4475
        %v4477 = vand.u32 %v4476, 4294901760
        %4478 = vmatpush.msra.mxu0 %v4477
        %v4479 = vand.u32 %v4175, 4294901760
        %v4480 = vsub.f32 %v4175, %v4479
        %v4481 = vand.u32 %v4480, 4294901760
        %4482 = vmatpush.msra.mxu0 %v4481
        %v4483 = vand.u32 %v4174, 4294901760
        %v4484 = vsub.f32 %v4174, %v4483
        %v4485 = vand.u32 %v4484, 4294901760
        %4486 = vmatpush.msra.mxu0 %v4485
        %v4487 = vand.u32 %v4173, 4294901760
        %v4488 = vsub.f32 %v4173, %v4487
        %v4489 = vand.u32 %v4488, 4294901760
        %4490 = vmatpush.msra.mxu0 %v4489
        %v4491 = vand.u32 %v4172, 4294901760
        %v4492 = vsub.f32 %v4172, %v4491
        %v4493 = vand.u32 %v4492, 4294901760
        %4494 = vmatpush.msra.mxu0 %v4493
        %v4495 = vand.u32 %v4171, 4294901760
        %v4496 = vsub.f32 %v4171, %v4495
        %v4497 = vand.u32 %v4496, 4294901760
        %4498 = vmatpush.msra.mxu0 %v4497
        %v4499 = vand.u32 %v4170, 4294901760
        %v4500 = vsub.f32 %v4170, %v4499
        %v4501 = vand.u32 %v4500, 4294901760
        %4502 = vmatpush.msra.mxu0 %v4501
        %v4503 = vand.u32 %v4169, 4294901760
        %v4504 = vsub.f32 %v4169, %v4503
        %v4505 = vand.u32 %v4504, 4294901760
        %4506 = vmatpush.msra.mxu0 %v4505
        %v4507 = vand.u32 %v4166, 4294901760
        %4508 = vmatmul.f32.gmra.mxu0 %v4507
        %v4509 = vpop.f32.mrf.mxu0
        %v4510 = vadd.f32 %v4435, %v4509
        %v4511 = vand.u32 %v4167, 4294901760
        %4512 = vmatmul.f32.gmra.mxu0 %v4511
        %v4513 = vpop.f32.mrf.mxu0
        %v4514 = vadd.f32 %v4441, %v4513
        %4515 = vdwg.mxu0
        %v4516 = vand.u32 %v4184, 4294901760
        %4517 = vmatpush.msra.mxu0 %v4516
        %v4518 = vand.u32 %v4183, 4294901760
        %4519 = vmatpush.msra.mxu0 %v4518
        %v4520 = vand.u32 %v4182, 4294901760
        %4521 = vmatpush.msra.mxu0 %v4520
        %v4522 = vand.u32 %v4181, 4294901760
        %4523 = vmatpush.msra.mxu0 %v4522
        %v4524 = vand.u32 %v4180, 4294901760
        %4525 = vmatpush.msra.mxu0 %v4524
        %v4526 = vand.u32 %v4179, 4294901760
        %4527 = vmatpush.msra.mxu0 %v4526
        %v4528 = vand.u32 %v4178, 4294901760
        %4529 = vmatpush.msra.mxu0 %v4528
        %v4530 = vand.u32 %v4177, 4294901760
        %4531 = vmatpush.msra.mxu0 %v4530
        %v4532 = vand.u32 %v4176, 4294901760
        %4533 = vmatpush.msra.mxu0 %v4532
        %v4534 = vand.u32 %v4175, 4294901760
        %4535 = vmatpush.msra.mxu0 %v4534
        %v4536 = vand.u32 %v4174, 4294901760
        %4537 = vmatpush.msra.mxu0 %v4536
        %v4538 = vand.u32 %v4173, 4294901760
        %4539 = vmatpush.msra.mxu0 %v4538
        %v4540 = vand.u32 %v4172, 4294901760
        %4541 = vmatpush.msra.mxu0 %v4540
        %v4542 = vand.u32 %v4171, 4294901760
        %4543 = vmatpush.msra.mxu0 %v4542
        %v4544 = vand.u32 %v4170, 4294901760
        %4545 = vmatpush.msra.mxu0 %v4544
        %v4546 = vand.u32 %v4169, 4294901760
        %4547 = vmatpush.msra.mxu0 %v4546
        %v4548 = vand.u32 %v4166, 4294901760
        %4549 = vmatmul.f32.gmra.mxu0 %v4548
        %v4550 = vpop.f32.mrf.mxu0
        %v4551 = vadd.f32 %v4510, %v4550
        %v4552 = vand.u32 %v4167, 4294901760
        %4553 = vmatmul.f32.gmra.mxu0 %v4552
        %v4554 = vpop.f32.mrf.mxu0
        %v4555 = vadd.f32 %v4514, %v4554
        %4556 = vdwg.mxu0
        %v4557 = vadd.f32 %v3771, %v4551
        %v4558 = vadd.f32 %v3772, %v4555
        %v4559 = vld [vmem:[%s242 + $0x5] sm:$0xff]
        %v4560 = vld [vmem:[%s242 + $0xd] sm:$0xff]
        %s4561 = scalar_lea.vmem %s1, 1536
        %v4562 = vld [vmem:[%s4561] sm:$0xff]
        %v4563 = vld [vmem:[%s4561 + $0x8] sm:$0xff]
        %v4564 = vld [vmem:[%s4561 + $0x10] sm:$0xff]
        %v4565 = vld [vmem:[%s4561 + $0x18] sm:$0xff]
        %v4566 = vld [vmem:[%s4561 + $0x20] sm:$0xff]
        %v4567 = vld [vmem:[%s4561 + $0x28] sm:$0xff]
        %v4568 = vld [vmem:[%s4561 + $0x30] sm:$0xff]
        %v4569 = vld [vmem:[%s4561 + $0x38] sm:$0xff]
        %v4570 = vld [vmem:[%s4561 + $0x40] sm:$0xff]
        %v4571 = vld [vmem:[%s4561 + $0x48] sm:$0xff]
        %v4572 = vld [vmem:[%s4561 + $0x50] sm:$0xff]
        %v4573 = vld [vmem:[%s4561 + $0x58] sm:$0xff]
        %v4574 = vld [vmem:[%s4561 + $0x60] sm:$0xff]
        %v4575 = vld [vmem:[%s4561 + $0x68] sm:$0xff]
        %v4576 = vld [vmem:[%s4561 + $0x70] sm:$0xff]
        %v4577 = vld [vmem:[%s4561 + $0x78] sm:$0xff]
        %v4578 = vand.u32 %v4577, 4294901760
        %4579 = vmatpush.msra.mxu0 %v4578
        %v4580 = vand.u32 %v4576, 4294901760
        %4581 = vmatpush.msra.mxu0 %v4580
        %v4582 = vand.u32 %v4575, 4294901760
        %4583 = vmatpush.msra.mxu0 %v4582
        %v4584 = vand.u32 %v4574, 4294901760
        %4585 = vmatpush.msra.mxu0 %v4584
        %v4586 = vand.u32 %v4573, 4294901760
        %4587 = vmatpush.msra.mxu0 %v4586
        %v4588 = vand.u32 %v4572, 4294901760
        %4589 = vmatpush.msra.mxu0 %v4588
        %v4590 = vand.u32 %v4571, 4294901760
        %4591 = vmatpush.msra.mxu0 %v4590
        %v4592 = vand.u32 %v4570, 4294901760
        %4593 = vmatpush.msra.mxu0 %v4592
        %v4594 = vand.u32 %v4569, 4294901760
        %4595 = vmatpush.msra.mxu0 %v4594
        %v4596 = vand.u32 %v4568, 4294901760
        %4597 = vmatpush.msra.mxu0 %v4596
        %v4598 = vand.u32 %v4567, 4294901760
        %4599 = vmatpush.msra.mxu0 %v4598
        %v4600 = vand.u32 %v4566, 4294901760
        %4601 = vmatpush.msra.mxu0 %v4600
        %v4602 = vand.u32 %v4565, 4294901760
        %4603 = vmatpush.msra.mxu0 %v4602
        %v4604 = vand.u32 %v4564, 4294901760
        %4605 = vmatpush.msra.mxu0 %v4604
        %v4606 = vand.u32 %v4563, 4294901760
        %4607 = vmatpush.msra.mxu0 %v4606
        %v4608 = vand.u32 %v4562, 4294901760
        %4609 = vmatpush.msra.mxu0 %v4608
        %v4610 = vand.u32 %v4559, 4294901760
        %v4611 = vsub.f32 %v4559, %v4610
        %v4612 = vand.u32 %v4611, 4294901760
        %v4613 = vsub.f32 %v4611, %v4612
        %v4614 = vand.u32 %v4613, 4294901760
        %4615 = vmatmul.f32.gmra.mxu0 %v4614
        %v4616 = vpop.f32.mrf.mxu0
        %v4617 = vadd.f32 0.0, %v4616
        %v4618 = vand.u32 %v4560, 4294901760
        %v4619 = vsub.f32 %v4560, %v4618
        %v4620 = vand.u32 %v4619, 4294901760
        %v4621 = vsub.f32 %v4619, %v4620
        %v4622 = vand.u32 %v4621, 4294901760
        %4623 = vmatmul.f32.gmra.mxu0 %v4622
        %v4624 = vpop.f32.mrf.mxu0
        %v4625 = vadd.f32 0.0, %v4624
        %4626 = vdwg.mxu0
        %v4627 = vand.u32 %v4577, 4294901760
        %v4628 = vsub.f32 %v4577, %v4627
        %v4629 = vand.u32 %v4628, 4294901760
        %v4630 = vsub.f32 %v4628, %v4629
        %v4631 = vand.u32 %v4630, 4294901760
        %4632 = vmatpush.msra.mxu0 %v4631
        %v4633 = vand.u32 %v4576, 4294901760
        %v4634 = vsub.f32 %v4576, %v4633
        %v4635 = vand.u32 %v4634, 4294901760
        %v4636 = vsub.f32 %v4634, %v4635
        %v4637 = vand.u32 %v4636, 4294901760
        %4638 = vmatpush.msra.mxu0 %v4637
        %v4639 = vand.u32 %v4575, 4294901760
        %v4640 = vsub.f32 %v4575, %v4639
        %v4641 = vand.u32 %v4640, 4294901760
        %v4642 = vsub.f32 %v4640, %v4641
        %v4643 = vand.u32 %v4642, 4294901760
        %4644 = vmatpush.msra.mxu0 %v4643
        %v4645 = vand.u32 %v4574, 4294901760
        %v4646 = vsub.f32 %v4574, %v4645
        %v4647 = vand.u32 %v4646, 4294901760
        %v4648 = vsub.f32 %v4646, %v4647
        %v4649 = vand.u32 %v4648, 4294901760
        %4650 = vmatpush.msra.mxu0 %v4649
        %v4651 = vand.u32 %v4573, 4294901760
        %v4652 = vsub.f32 %v4573, %v4651
        %v4653 = vand.u32 %v4652, 4294901760
        %v4654 = vsub.f32 %v4652, %v4653
        %v4655 = vand.u32 %v4654, 4294901760
        %4656 = vmatpush.msra.mxu0 %v4655
        %v4657 = vand.u32 %v4572, 4294901760
        %v4658 = vsub.f32 %v4572, %v4657
        %v4659 = vand.u32 %v4658, 4294901760
        %v4660 = vsub.f32 %v4658, %v4659
        %v4661 = vand.u32 %v4660, 4294901760
        %4662 = vmatpush.msra.mxu0 %v4661
        %v4663 = vand.u32 %v4571, 4294901760
        %v4664 = vsub.f32 %v4571, %v4663
        %v4665 = vand.u32 %v4664, 4294901760
        %v4666 = vsub.f32 %v4664, %v4665
        %v4667 = vand.u32 %v4666, 4294901760
        %4668 = vmatpush.msra.mxu0 %v4667
        %v4669 = vand.u32 %v4570, 4294901760
        %v4670 = vsub.f32 %v4570, %v4669
        %v4671 = vand.u32 %v4670, 4294901760
        %v4672 = vsub.f32 %v4670, %v4671
        %v4673 = vand.u32 %v4672, 4294901760
        %4674 = vmatpush.msra.mxu0 %v4673
        %v4675 = vand.u32 %v4569, 4294901760
        %v4676 = vsub.f32 %v4569, %v4675
        %v4677 = vand.u32 %v4676, 4294901760
        %v4678 = vsub.f32 %v4676, %v4677
        %v4679 = vand.u32 %v4678, 4294901760
        %4680 = vmatpush.msra.mxu0 %v4679
        %v4681 = vand.u32 %v4568, 4294901760
        %v4682 = vsub.f32 %v4568, %v4681
        %v4683 = vand.u32 %v4682, 4294901760
        %v4684 = vsub.f32 %v4682, %v4683
        %v4685 = vand.u32 %v4684, 4294901760
        %4686 = vmatpush.msra.mxu0 %v4685
        %v4687 = vand.u32 %v4567, 4294901760
        %v4688 = vsub.f32 %v4567, %v4687
        %v4689 = vand.u32 %v4688, 4294901760
        %v4690 = vsub.f32 %v4688, %v4689
        %v4691 = vand.u32 %v4690, 4294901760
        %4692 = vmatpush.msra.mxu0 %v4691
        %v4693 = vand.u32 %v4566, 4294901760
        %v4694 = vsub.f32 %v4566, %v4693
        %v4695 = vand.u32 %v4694, 4294901760
        %v4696 = vsub.f32 %v4694, %v4695
        %v4697 = vand.u32 %v4696, 4294901760
        %4698 = vmatpush.msra.mxu0 %v4697
        %v4699 = vand.u32 %v4565, 4294901760
        %v4700 = vsub.f32 %v4565, %v4699
        %v4701 = vand.u32 %v4700, 4294901760
        %v4702 = vsub.f32 %v4700, %v4701
        %v4703 = vand.u32 %v4702, 4294901760
        %4704 = vmatpush.msra.mxu0 %v4703
        %v4705 = vand.u32 %v4564, 4294901760
        %v4706 = vsub.f32 %v4564, %v4705
        %v4707 = vand.u32 %v4706, 4294901760
        %v4708 = vsub.f32 %v4706, %v4707
        %v4709 = vand.u32 %v4708, 4294901760
        %4710 = vmatpush.msra.mxu0 %v4709
        %v4711 = vand.u32 %v4563, 4294901760
        %v4712 = vsub.f32 %v4563, %v4711
        %v4713 = vand.u32 %v4712, 4294901760
        %v4714 = vsub.f32 %v4712, %v4713
        %v4715 = vand.u32 %v4714, 4294901760
        %4716 = vmatpush.msra.mxu0 %v4715
        %v4717 = vand.u32 %v4562, 4294901760
        %v4718 = vsub.f32 %v4562, %v4717
        %v4719 = vand.u32 %v4718, 4294901760
        %v4720 = vsub.f32 %v4718, %v4719
        %v4721 = vand.u32 %v4720, 4294901760
        %4722 = vmatpush.msra.mxu0 %v4721
        %v4723 = vand.u32 %v4559, 4294901760
        %4724 = vmatmul.f32.gmra.mxu0 %v4723
        %v4725 = vpop.f32.mrf.mxu0
        %v4726 = vadd.f32 %v4617, %v4725
        %v4727 = vand.u32 %v4560, 4294901760
        %4728 = vmatmul.f32.gmra.mxu0 %v4727
        %v4729 = vpop.f32.mrf.mxu0
        %v4730 = vadd.f32 %v4625, %v4729
        %4731 = vdwg.mxu0
        %v4732 = vand.u32 %v4577, 4294901760
        %v4733 = vsub.f32 %v4577, %v4732
        %4734 = vmatpush.msra.mxu0 %v4733
        %v4735 = vand.u32 %v4576, 4294901760
        %v4736 = vsub.f32 %v4576, %v4735
        %4737 = vmatpush.msra.mxu0 %v4736
        %v4738 = vand.u32 %v4575, 4294901760
        %v4739 = vsub.f32 %v4575, %v4738
        %4740 = vmatpush.msra.mxu0 %v4739
        %v4741 = vand.u32 %v4574, 4294901760
        %v4742 = vsub.f32 %v4574, %v4741
        %4743 = vmatpush.msra.mxu0 %v4742
        %v4744 = vand.u32 %v4573, 4294901760
        %v4745 = vsub.f32 %v4573, %v4744
        %4746 = vmatpush.msra.mxu0 %v4745
        %v4747 = vand.u32 %v4572, 4294901760
        %v4748 = vsub.f32 %v4572, %v4747
        %4749 = vmatpush.msra.mxu0 %v4748
        %v4750 = vand.u32 %v4571, 4294901760
        %v4751 = vsub.f32 %v4571, %v4750
        %4752 = vmatpush.msra.mxu0 %v4751
        %v4753 = vand.u32 %v4570, 4294901760
        %v4754 = vsub.f32 %v4570, %v4753
        %4755 = vmatpush.msra.mxu0 %v4754
        %v4756 = vand.u32 %v4569, 4294901760
        %v4757 = vsub.f32 %v4569, %v4756
        %4758 = vmatpush.msra.mxu0 %v4757
        %v4759 = vand.u32 %v4568, 4294901760
        %v4760 = vsub.f32 %v4568, %v4759
        %4761 = vmatpush.msra.mxu0 %v4760
        %v4762 = vand.u32 %v4567, 4294901760
        %v4763 = vsub.f32 %v4567, %v4762
        %4764 = vmatpush.msra.mxu0 %v4763
        %v4765 = vand.u32 %v4566, 4294901760
        %v4766 = vsub.f32 %v4566, %v4765
        %4767 = vmatpush.msra.mxu0 %v4766
        %v4768 = vand.u32 %v4565, 4294901760
        %v4769 = vsub.f32 %v4565, %v4768
        %4770 = vmatpush.msra.mxu0 %v4769
        %v4771 = vand.u32 %v4564, 4294901760
        %v4772 = vsub.f32 %v4564, %v4771
        %4773 = vmatpush.msra.mxu0 %v4772
        %v4774 = vand.u32 %v4563, 4294901760
        %v4775 = vsub.f32 %v4563, %v4774
        %4776 = vmatpush.msra.mxu0 %v4775
        %v4777 = vand.u32 %v4562, 4294901760
        %v4778 = vsub.f32 %v4562, %v4777
        %4779 = vmatpush.msra.mxu0 %v4778
        %v4780 = vand.u32 %v4559, 4294901760
        %v4781 = vsub.f32 %v4559, %v4780
        %4782 = vmatmul.f32.gmra.mxu0 %v4781
        %v4783 = vpop.f32.mrf.mxu0
        %v4784 = vadd.f32 %v4726, %v4783
        %v4785 = vand.u32 %v4560, 4294901760
        %v4786 = vsub.f32 %v4560, %v4785
        %4787 = vmatmul.f32.gmra.mxu0 %v4786
        %v4788 = vpop.f32.mrf.mxu0
        %v4789 = vadd.f32 %v4730, %v4788
        %4790 = vdwg.mxu0
        %v4791 = vand.u32 %v4577, 4294901760
        %4792 = vmatpush.msra.mxu0 %v4791
        %v4793 = vand.u32 %v4576, 4294901760
        %4794 = vmatpush.msra.mxu0 %v4793
        %v4795 = vand.u32 %v4575, 4294901760
        %4796 = vmatpush.msra.mxu0 %v4795
        %v4797 = vand.u32 %v4574, 4294901760
        %4798 = vmatpush.msra.mxu0 %v4797
        %v4799 = vand.u32 %v4573, 4294901760
        %4800 = vmatpush.msra.mxu0 %v4799
        %v4801 = vand.u32 %v4572, 4294901760
        %4802 = vmatpush.msra.mxu0 %v4801
        %v4803 = vand.u32 %v4571, 4294901760
        %4804 = vmatpush.msra.mxu0 %v4803
        %v4805 = vand.u32 %v4570, 4294901760
        %4806 = vmatpush.msra.mxu0 %v4805
        %v4807 = vand.u32 %v4569, 4294901760
        %4808 = vmatpush.msra.mxu0 %v4807
        %v4809 = vand.u32 %v4568, 4294901760
        %4810 = vmatpush.msra.mxu0 %v4809
        %v4811 = vand.u32 %v4567, 4294901760
        %4812 = vmatpush.msra.mxu0 %v4811
        %v4813 = vand.u32 %v4566, 4294901760
        %4814 = vmatpush.msra.mxu0 %v4813
        %v4815 = vand.u32 %v4565, 4294901760
        %4816 = vmatpush.msra.mxu0 %v4815
        %v4817 = vand.u32 %v4564, 4294901760
        %4818 = vmatpush.msra.mxu0 %v4817
        %v4819 = vand.u32 %v4563, 4294901760
        %4820 = vmatpush.msra.mxu0 %v4819
        %v4821 = vand.u32 %v4562, 4294901760
        %4822 = vmatpush.msra.mxu0 %v4821
        %v4823 = vand.u32 %v4559, 4294901760
        %v4824 = vsub.f32 %v4559, %v4823
        %v4825 = vand.u32 %v4824, 4294901760
        %4826 = vmatmul.f32.gmra.mxu0 %v4825
        %v4827 = vpop.f32.mrf.mxu0
        %v4828 = vadd.f32 %v4784, %v4827
        %v4829 = vand.u32 %v4560, 4294901760
        %v4830 = vsub.f32 %v4560, %v4829
        %v4831 = vand.u32 %v4830, 4294901760
        %4832 = vmatmul.f32.gmra.mxu0 %v4831
        %v4833 = vpop.f32.mrf.mxu0
        %v4834 = vadd.f32 %v4789, %v4833
        %4835 = vdwg.mxu0
        %v4836 = vand.u32 %v4577, 4294901760
        %v4837 = vsub.f32 %v4577, %v4836
        %v4838 = vand.u32 %v4837, 4294901760
        %4839 = vmatpush.msra.mxu0 %v4838
        %v4840 = vand.u32 %v4576, 4294901760
        %v4841 = vsub.f32 %v4576, %v4840
        %v4842 = vand.u32 %v4841, 4294901760
        %4843 = vmatpush.msra.mxu0 %v4842
        %v4844 = vand.u32 %v4575, 4294901760
        %v4845 = vsub.f32 %v4575, %v4844
        %v4846 = vand.u32 %v4845, 4294901760
        %4847 = vmatpush.msra.mxu0 %v4846
        %v4848 = vand.u32 %v4574, 4294901760
        %v4849 = vsub.f32 %v4574, %v4848
        %v4850 = vand.u32 %v4849, 4294901760
        %4851 = vmatpush.msra.mxu0 %v4850
        %v4852 = vand.u32 %v4573, 4294901760
        %v4853 = vsub.f32 %v4573, %v4852
        %v4854 = vand.u32 %v4853, 4294901760
        %4855 = vmatpush.msra.mxu0 %v4854
        %v4856 = vand.u32 %v4572, 4294901760
        %v4857 = vsub.f32 %v4572, %v4856
        %v4858 = vand.u32 %v4857, 4294901760
        %4859 = vmatpush.msra.mxu0 %v4858
        %v4860 = vand.u32 %v4571, 4294901760
        %v4861 = vsub.f32 %v4571, %v4860
        %v4862 = vand.u32 %v4861, 4294901760
        %4863 = vmatpush.msra.mxu0 %v4862
        %v4864 = vand.u32 %v4570, 4294901760
        %v4865 = vsub.f32 %v4570, %v4864
        %v4866 = vand.u32 %v4865, 4294901760
        %4867 = vmatpush.msra.mxu0 %v4866
        %v4868 = vand.u32 %v4569, 4294901760
        %v4869 = vsub.f32 %v4569, %v4868
        %v4870 = vand.u32 %v4869, 4294901760
        %4871 = vmatpush.msra.mxu0 %v4870
        %v4872 = vand.u32 %v4568, 4294901760
        %v4873 = vsub.f32 %v4568, %v4872
        %v4874 = vand.u32 %v4873, 4294901760
        %4875 = vmatpush.msra.mxu0 %v4874
        %v4876 = vand.u32 %v4567, 4294901760
        %v4877 = vsub.f32 %v4567, %v4876
        %v4878 = vand.u32 %v4877, 4294901760
        %4879 = vmatpush.msra.mxu0 %v4878
        %v4880 = vand.u32 %v4566, 4294901760
        %v4881 = vsub.f32 %v4566, %v4880
        %v4882 = vand.u32 %v4881, 4294901760
        %4883 = vmatpush.msra.mxu0 %v4882
        %v4884 = vand.u32 %v4565, 4294901760
        %v4885 = vsub.f32 %v4565, %v4884
        %v4886 = vand.u32 %v4885, 4294901760
        %4887 = vmatpush.msra.mxu0 %v4886
        %v4888 = vand.u32 %v4564, 4294901760
        %v4889 = vsub.f32 %v4564, %v4888
        %v4890 = vand.u32 %v4889, 4294901760
        %4891 = vmatpush.msra.mxu0 %v4890
        %v4892 = vand.u32 %v4563, 4294901760
        %v4893 = vsub.f32 %v4563, %v4892
        %v4894 = vand.u32 %v4893, 4294901760
        %4895 = vmatpush.msra.mxu0 %v4894
        %v4896 = vand.u32 %v4562, 4294901760
        %v4897 = vsub.f32 %v4562, %v4896
        %v4898 = vand.u32 %v4897, 4294901760
        %4899 = vmatpush.msra.mxu0 %v4898
        %v4900 = vand.u32 %v4559, 4294901760
        %4901 = vmatmul.f32.gmra.mxu0 %v4900
        %v4902 = vpop.f32.mrf.mxu0
        %v4903 = vadd.f32 %v4828, %v4902
        %v4904 = vand.u32 %v4560, 4294901760
        %4905 = vmatmul.f32.gmra.mxu0 %v4904
        %v4906 = vpop.f32.mrf.mxu0
        %v4907 = vadd.f32 %v4834, %v4906
        %4908 = vdwg.mxu0
        %v4909 = vand.u32 %v4577, 4294901760
        %4910 = vmatpush.msra.mxu0 %v4909
        %v4911 = vand.u32 %v4576, 4294901760
        %4912 = vmatpush.msra.mxu0 %v4911
        %v4913 = vand.u32 %v4575, 4294901760
        %4914 = vmatpush.msra.mxu0 %v4913
        %v4915 = vand.u32 %v4574, 4294901760
        %4916 = vmatpush.msra.mxu0 %v4915
        %v4917 = vand.u32 %v4573, 4294901760
        %4918 = vmatpush.msra.mxu0 %v4917
        %v4919 = vand.u32 %v4572, 4294901760
        %4920 = vmatpush.msra.mxu0 %v4919
        %v4921 = vand.u32 %v4571, 4294901760
        %4922 = vmatpush.msra.mxu0 %v4921
        %v4923 = vand.u32 %v4570, 4294901760
        %4924 = vmatpush.msra.mxu0 %v4923
        %v4925 = vand.u32 %v4569, 4294901760
        %4926 = vmatpush.msra.mxu0 %v4925
        %v4927 = vand.u32 %v4568, 4294901760
        %4928 = vmatpush.msra.mxu0 %v4927
        %v4929 = vand.u32 %v4567, 4294901760
        %4930 = vmatpush.msra.mxu0 %v4929
        %v4931 = vand.u32 %v4566, 4294901760
        %4932 = vmatpush.msra.mxu0 %v4931
        %v4933 = vand.u32 %v4565, 4294901760
        %4934 = vmatpush.msra.mxu0 %v4933
        %v4935 = vand.u32 %v4564, 4294901760
        %4936 = vmatpush.msra.mxu0 %v4935
        %v4937 = vand.u32 %v4563, 4294901760
        %4938 = vmatpush.msra.mxu0 %v4937
        %v4939 = vand.u32 %v4562, 4294901760
        %4940 = vmatpush.msra.mxu0 %v4939
        %v4941 = vand.u32 %v4559, 4294901760
        %4942 = vmatmul.f32.gmra.mxu0 %v4941
        %v4943 = vpop.f32.mrf.mxu0
        %v4944 = vadd.f32 %v4903, %v4943
        %v4945 = vand.u32 %v4560, 4294901760
        %4946 = vmatmul.f32.gmra.mxu0 %v4945
        %v4947 = vpop.f32.mrf.mxu0
        %v4948 = vadd.f32 %v4907, %v4947
        %4949 = vdwg.mxu0
        %v4950 = vadd.f32 %v4164, %v4944
        %v4951 = vadd.f32 %v4165, %v4948
        %v4952 = vld [vmem:[#allocation4 + $0x6] sm:$0xff]
        %v4953 = vld [vmem:[#allocation4 + $0xe] sm:$0xff]
        %s4954 = scalar_lea.vmem %s1, 768
        %v4955 = vld [vmem:[%s4954] sm:$0xff]
        %v4956 = vld [vmem:[%s4954 + $0x8] sm:$0xff]
        %v4957 = vld [vmem:[%s4954 + $0x10] sm:$0xff]
        %v4958 = vld [vmem:[%s4954 + $0x18] sm:$0xff]
        %v4959 = vld [vmem:[%s4954 + $0x20] sm:$0xff]
        %v4960 = vld [vmem:[%s4954 + $0x28] sm:$0xff]
        %v4961 = vld [vmem:[%s4954 + $0x30] sm:$0xff]
        %v4962 = vld [vmem:[%s4954 + $0x38] sm:$0xff]
        %v4963 = vld [vmem:[%s4954 + $0x40] sm:$0xff]
        %v4964 = vld [vmem:[%s4954 + $0x48] sm:$0xff]
        %v4965 = vld [vmem:[%s4954 + $0x50] sm:$0xff]
        %v4966 = vld [vmem:[%s4954 + $0x58] sm:$0xff]
        %v4967 = vld [vmem:[%s4954 + $0x60] sm:$0xff]
        %v4968 = vld [vmem:[%s4954 + $0x68] sm:$0xff]
        %v4969 = vld [vmem:[%s4954 + $0x70] sm:$0xff]
        %v4970 = vld [vmem:[%s4954 + $0x78] sm:$0xff]
        %v4971 = vand.u32 %v4970, 4294901760
        %4972 = vmatpush.msra.mxu0 %v4971
        %v4973 = vand.u32 %v4969, 4294901760
        %4974 = vmatpush.msra.mxu0 %v4973
        %v4975 = vand.u32 %v4968, 4294901760
        %4976 = vmatpush.msra.mxu0 %v4975
        %v4977 = vand.u32 %v4967, 4294901760
        %4978 = vmatpush.msra.mxu0 %v4977
        %v4979 = vand.u32 %v4966, 4294901760
        %4980 = vmatpush.msra.mxu0 %v4979
        %v4981 = vand.u32 %v4965, 4294901760
        %4982 = vmatpush.msra.mxu0 %v4981
        %v4983 = vand.u32 %v4964, 4294901760
        %4984 = vmatpush.msra.mxu0 %v4983
        %v4985 = vand.u32 %v4963, 4294901760
        %4986 = vmatpush.msra.mxu0 %v4985
        %v4987 = vand.u32 %v4962, 4294901760
        %4988 = vmatpush.msra.mxu0 %v4987
        %v4989 = vand.u32 %v4961, 4294901760
        %4990 = vmatpush.msra.mxu0 %v4989
        %v4991 = vand.u32 %v4960, 4294901760
        %4992 = vmatpush.msra.mxu0 %v4991
        %v4993 = vand.u32 %v4959, 4294901760
        %4994 = vmatpush.msra.mxu0 %v4993
        %v4995 = vand.u32 %v4958, 4294901760
        %4996 = vmatpush.msra.mxu0 %v4995
        %v4997 = vand.u32 %v4957, 4294901760
        %4998 = vmatpush.msra.mxu0 %v4997
        %v4999 = vand.u32 %v4956, 4294901760
        %5000 = vmatpush.msra.mxu0 %v4999
        %v5001 = vand.u32 %v4955, 4294901760
        %5002 = vmatpush.msra.mxu0 %v5001
        %v5003 = vand.u32 %v4952, 4294901760
        %v5004 = vsub.f32 %v4952, %v5003
        %v5005 = vand.u32 %v5004, 4294901760
        %v5006 = vsub.f32 %v5004, %v5005
        %v5007 = vand.u32 %v5006, 4294901760
        %5008 = vmatmul.f32.gmra.mxu0 %v5007
        %v5009 = vpop.f32.mrf.mxu0
        %v5010 = vadd.f32 0.0, %v5009
        %v5011 = vand.u32 %v4953, 4294901760
        %v5012 = vsub.f32 %v4953, %v5011
        %v5013 = vand.u32 %v5012, 4294901760
        %v5014 = vsub.f32 %v5012, %v5013
        %v5015 = vand.u32 %v5014, 4294901760
        %5016 = vmatmul.f32.gmra.mxu0 %v5015
        %v5017 = vpop.f32.mrf.mxu0
        %v5018 = vadd.f32 0.0, %v5017
        %5019 = vdwg.mxu0
        %v5020 = vand.u32 %v4970, 4294901760
        %v5021 = vsub.f32 %v4970, %v5020
        %v5022 = vand.u32 %v5021, 4294901760
        %v5023 = vsub.f32 %v5021, %v5022
        %v5024 = vand.u32 %v5023, 4294901760
        %5025 = vmatpush.msra.mxu0 %v5024
        %v5026 = vand.u32 %v4969, 4294901760
        %v5027 = vsub.f32 %v4969, %v5026
        %v5028 = vand.u32 %v5027, 4294901760
        %v5029 = vsub.f32 %v5027, %v5028
        %v5030 = vand.u32 %v5029, 4294901760
        %5031 = vmatpush.msra.mxu0 %v5030
        %v5032 = vand.u32 %v4968, 4294901760
        %v5033 = vsub.f32 %v4968, %v5032
        %v5034 = vand.u32 %v5033, 4294901760
        %v5035 = vsub.f32 %v5033, %v5034
        %v5036 = vand.u32 %v5035, 4294901760
        %5037 = vmatpush.msra.mxu0 %v5036
        %v5038 = vand.u32 %v4967, 4294901760
        %v5039 = vsub.f32 %v4967, %v5038
        %v5040 = vand.u32 %v5039, 4294901760
        %v5041 = vsub.f32 %v5039, %v5040
        %v5042 = vand.u32 %v5041, 4294901760
        %5043 = vmatpush.msra.mxu0 %v5042
        %v5044 = vand.u32 %v4966, 4294901760
        %v5045 = vsub.f32 %v4966, %v5044
        %v5046 = vand.u32 %v5045, 4294901760
        %v5047 = vsub.f32 %v5045, %v5046
        %v5048 = vand.u32 %v5047, 4294901760
        %5049 = vmatpush.msra.mxu0 %v5048
        %v5050 = vand.u32 %v4965, 4294901760
        %v5051 = vsub.f32 %v4965, %v5050
        %v5052 = vand.u32 %v5051, 4294901760
        %v5053 = vsub.f32 %v5051, %v5052
        %v5054 = vand.u32 %v5053, 4294901760
        %5055 = vmatpush.msra.mxu0 %v5054
        %v5056 = vand.u32 %v4964, 4294901760
        %v5057 = vsub.f32 %v4964, %v5056
        %v5058 = vand.u32 %v5057, 4294901760
        %v5059 = vsub.f32 %v5057, %v5058
        %v5060 = vand.u32 %v5059, 4294901760
        %5061 = vmatpush.msra.mxu0 %v5060
        %v5062 = vand.u32 %v4963, 4294901760
        %v5063 = vsub.f32 %v4963, %v5062
        %v5064 = vand.u32 %v5063, 4294901760
        %v5065 = vsub.f32 %v5063, %v5064
        %v5066 = vand.u32 %v5065, 4294901760
        %5067 = vmatpush.msra.mxu0 %v5066
        %v5068 = vand.u32 %v4962, 4294901760
        %v5069 = vsub.f32 %v4962, %v5068
        %v5070 = vand.u32 %v5069, 4294901760
        %v5071 = vsub.f32 %v5069, %v5070
        %v5072 = vand.u32 %v5071, 4294901760
        %5073 = vmatpush.msra.mxu0 %v5072
        %v5074 = vand.u32 %v4961, 4294901760
        %v5075 = vsub.f32 %v4961, %v5074
        %v5076 = vand.u32 %v5075, 4294901760
        %v5077 = vsub.f32 %v5075, %v5076
        %v5078 = vand.u32 %v5077, 4294901760
        %5079 = vmatpush.msra.mxu0 %v5078
        %v5080 = vand.u32 %v4960, 4294901760
        %v5081 = vsub.f32 %v4960, %v5080
        %v5082 = vand.u32 %v5081, 4294901760
        %v5083 = vsub.f32 %v5081, %v5082
        %v5084 = vand.u32 %v5083, 4294901760
        %5085 = vmatpush.msra.mxu0 %v5084
        %v5086 = vand.u32 %v4959, 4294901760
        %v5087 = vsub.f32 %v4959, %v5086
        %v5088 = vand.u32 %v5087, 4294901760
        %v5089 = vsub.f32 %v5087, %v5088
        %v5090 = vand.u32 %v5089, 4294901760
        %5091 = vmatpush.msra.mxu0 %v5090
        %v5092 = vand.u32 %v4958, 4294901760
        %v5093 = vsub.f32 %v4958, %v5092
        %v5094 = vand.u32 %v5093, 4294901760
        %v5095 = vsub.f32 %v5093, %v5094
        %v5096 = vand.u32 %v5095, 4294901760
        %5097 = vmatpush.msra.mxu0 %v5096
        %v5098 = vand.u32 %v4957, 4294901760
        %v5099 = vsub.f32 %v4957, %v5098
        %v5100 = vand.u32 %v5099, 4294901760
        %v5101 = vsub.f32 %v5099, %v5100
        %v5102 = vand.u32 %v5101, 4294901760
        %5103 = vmatpush.msra.mxu0 %v5102
        %v5104 = vand.u32 %v4956, 4294901760
        %v5105 = vsub.f32 %v4956, %v5104
        %v5106 = vand.u32 %v5105, 4294901760
        %v5107 = vsub.f32 %v5105, %v5106
        %v5108 = vand.u32 %v5107, 4294901760
        %5109 = vmatpush.msra.mxu0 %v5108
        %v5110 = vand.u32 %v4955, 4294901760
        %v5111 = vsub.f32 %v4955, %v5110
        %v5112 = vand.u32 %v5111, 4294901760
        %v5113 = vsub.f32 %v5111, %v5112
        %v5114 = vand.u32 %v5113, 4294901760
        %5115 = vmatpush.msra.mxu0 %v5114
        %v5116 = vand.u32 %v4952, 4294901760
        %5117 = vmatmul.f32.gmra.mxu0 %v5116
        %v5118 = vpop.f32.mrf.mxu0
        %v5119 = vadd.f32 %v5010, %v5118
        %v5120 = vand.u32 %v4953, 4294901760
        %5121 = vmatmul.f32.gmra.mxu0 %v5120
        %v5122 = vpop.f32.mrf.mxu0
        %v5123 = vadd.f32 %v5018, %v5122
        %5124 = vdwg.mxu0
        %v5125 = vand.u32 %v4970, 4294901760
        %v5126 = vsub.f32 %v4970, %v5125
        %5127 = vmatpush.msra.mxu0 %v5126
        %v5128 = vand.u32 %v4969, 4294901760
        %v5129 = vsub.f32 %v4969, %v5128
        %5130 = vmatpush.msra.mxu0 %v5129
        %v5131 = vand.u32 %v4968, 4294901760
        %v5132 = vsub.f32 %v4968, %v5131
        %5133 = vmatpush.msra.mxu0 %v5132
        %v5134 = vand.u32 %v4967, 4294901760
        %v5135 = vsub.f32 %v4967, %v5134
        %5136 = vmatpush.msra.mxu0 %v5135
        %v5137 = vand.u32 %v4966, 4294901760
        %v5138 = vsub.f32 %v4966, %v5137
        %5139 = vmatpush.msra.mxu0 %v5138
        %v5140 = vand.u32 %v4965, 4294901760
        %v5141 = vsub.f32 %v4965, %v5140
        %5142 = vmatpush.msra.mxu0 %v5141
        %v5143 = vand.u32 %v4964, 4294901760
        %v5144 = vsub.f32 %v4964, %v5143
        %5145 = vmatpush.msra.mxu0 %v5144
        %v5146 = vand.u32 %v4963, 4294901760
        %v5147 = vsub.f32 %v4963, %v5146
        %5148 = vmatpush.msra.mxu0 %v5147
        %v5149 = vand.u32 %v4962, 4294901760
        %v5150 = vsub.f32 %v4962, %v5149
        %5151 = vmatpush.msra.mxu0 %v5150
        %v5152 = vand.u32 %v4961, 4294901760
        %v5153 = vsub.f32 %v4961, %v5152
        %5154 = vmatpush.msra.mxu0 %v5153
        %v5155 = vand.u32 %v4960, 4294901760
        %v5156 = vsub.f32 %v4960, %v5155
        %5157 = vmatpush.msra.mxu0 %v5156
        %v5158 = vand.u32 %v4959, 4294901760
        %v5159 = vsub.f32 %v4959, %v5158
        %5160 = vmatpush.msra.mxu0 %v5159
        %v5161 = vand.u32 %v4958, 4294901760
        %v5162 = vsub.f32 %v4958, %v5161
        %5163 = vmatpush.msra.mxu0 %v5162
        %v5164 = vand.u32 %v4957, 4294901760
        %v5165 = vsub.f32 %v4957, %v5164
        %5166 = vmatpush.msra.mxu0 %v5165
        %v5167 = vand.u32 %v4956, 4294901760
        %v5168 = vsub.f32 %v4956, %v5167
        %5169 = vmatpush.msra.mxu0 %v5168
        %v5170 = vand.u32 %v4955, 4294901760
        %v5171 = vsub.f32 %v4955, %v5170
        %5172 = vmatpush.msra.mxu0 %v5171
        %v5173 = vand.u32 %v4952, 4294901760
        %v5174 = vsub.f32 %v4952, %v5173
        %5175 = vmatmul.f32.gmra.mxu0 %v5174
        %v5176 = vpop.f32.mrf.mxu0
        %v5177 = vadd.f32 %v5119, %v5176
        %v5178 = vand.u32 %v4953, 4294901760
        %v5179 = vsub.f32 %v4953, %v5178
        %5180 = vmatmul.f32.gmra.mxu0 %v5179
        %v5181 = vpop.f32.mrf.mxu0
        %v5182 = vadd.f32 %v5123, %v5181
        %5183 = vdwg.mxu0
        %v5184 = vand.u32 %v4970, 4294901760
        %5185 = vmatpush.msra.mxu0 %v5184
        %v5186 = vand.u32 %v4969, 4294901760
        %5187 = vmatpush.msra.mxu0 %v5186
        %v5188 = vand.u32 %v4968, 4294901760
        %5189 = vmatpush.msra.mxu0 %v5188
        %v5190 = vand.u32 %v4967, 4294901760
        %5191 = vmatpush.msra.mxu0 %v5190
        %v5192 = vand.u32 %v4966, 4294901760
        %5193 = vmatpush.msra.mxu0 %v5192
        %v5194 = vand.u32 %v4965, 4294901760
        %5195 = vmatpush.msra.mxu0 %v5194
        %v5196 = vand.u32 %v4964, 4294901760
        %5197 = vmatpush.msra.mxu0 %v5196
        %v5198 = vand.u32 %v4963, 4294901760
        %5199 = vmatpush.msra.mxu0 %v5198
        %v5200 = vand.u32 %v4962, 4294901760
        %5201 = vmatpush.msra.mxu0 %v5200
        %v5202 = vand.u32 %v4961, 4294901760
        %5203 = vmatpush.msra.mxu0 %v5202
        %v5204 = vand.u32 %v4960, 4294901760
        %5205 = vmatpush.msra.mxu0 %v5204
        %v5206 = vand.u32 %v4959, 4294901760
        %5207 = vmatpush.msra.mxu0 %v5206
        %v5208 = vand.u32 %v4958, 4294901760
        %5209 = vmatpush.msra.mxu0 %v5208
        %v5210 = vand.u32 %v4957, 4294901760
        %5211 = vmatpush.msra.mxu0 %v5210
        %v5212 = vand.u32 %v4956, 4294901760
        %5213 = vmatpush.msra.mxu0 %v5212
        %v5214 = vand.u32 %v4955, 4294901760
        %5215 = vmatpush.msra.mxu0 %v5214
        %v5216 = vand.u32 %v4952, 4294901760
        %v5217 = vsub.f32 %v4952, %v5216
        %v5218 = vand.u32 %v5217, 4294901760
        %5219 = vmatmul.f32.gmra.mxu0 %v5218
        %v5220 = vpop.f32.mrf.mxu0
        %v5221 = vadd.f32 %v5177, %v5220
        %v5222 = vand.u32 %v4953, 4294901760
        %v5223 = vsub.f32 %v4953, %v5222
        %v5224 = vand.u32 %v5223, 4294901760
        %5225 = vmatmul.f32.gmra.mxu0 %v5224
        %v5226 = vpop.f32.mrf.mxu0
        %v5227 = vadd.f32 %v5182, %v5226
        %5228 = vdwg.mxu0
        %v5229 = vand.u32 %v4970, 4294901760
        %v5230 = vsub.f32 %v4970, %v5229
        %v5231 = vand.u32 %v5230, 4294901760
        %5232 = vmatpush.msra.mxu0 %v5231
        %v5233 = vand.u32 %v4969, 4294901760
        %v5234 = vsub.f32 %v4969, %v5233
        %v5235 = vand.u32 %v5234, 4294901760
        %5236 = vmatpush.msra.mxu0 %v5235
        %v5237 = vand.u32 %v4968, 4294901760
        %v5238 = vsub.f32 %v4968, %v5237
        %v5239 = vand.u32 %v5238, 4294901760
        %5240 = vmatpush.msra.mxu0 %v5239
        %v5241 = vand.u32 %v4967, 4294901760
        %v5242 = vsub.f32 %v4967, %v5241
        %v5243 = vand.u32 %v5242, 4294901760
        %5244 = vmatpush.msra.mxu0 %v5243
        %v5245 = vand.u32 %v4966, 4294901760
        %v5246 = vsub.f32 %v4966, %v5245
        %v5247 = vand.u32 %v5246, 4294901760
        %5248 = vmatpush.msra.mxu0 %v5247
        %v5249 = vand.u32 %v4965, 4294901760
        %v5250 = vsub.f32 %v4965, %v5249
        %v5251 = vand.u32 %v5250, 4294901760
        %5252 = vmatpush.msra.mxu0 %v5251
        %v5253 = vand.u32 %v4964, 4294901760
        %v5254 = vsub.f32 %v4964, %v5253
        %v5255 = vand.u32 %v5254, 4294901760
        %5256 = vmatpush.msra.mxu0 %v5255
        %v5257 = vand.u32 %v4963, 4294901760
        %v5258 = vsub.f32 %v4963, %v5257
        %v5259 = vand.u32 %v5258, 4294901760
        %5260 = vmatpush.msra.mxu0 %v5259
        %v5261 = vand.u32 %v4962, 4294901760
        %v5262 = vsub.f32 %v4962, %v5261
        %v5263 = vand.u32 %v5262, 4294901760
        %5264 = vmatpush.msra.mxu0 %v5263
        %v5265 = vand.u32 %v4961, 4294901760
        %v5266 = vsub.f32 %v4961, %v5265
        %v5267 = vand.u32 %v5266, 4294901760
        %5268 = vmatpush.msra.mxu0 %v5267
        %v5269 = vand.u32 %v4960, 4294901760
        %v5270 = vsub.f32 %v4960, %v5269
        %v5271 = vand.u32 %v5270, 4294901760
        %5272 = vmatpush.msra.mxu0 %v5271
        %v5273 = vand.u32 %v4959, 4294901760
        %v5274 = vsub.f32 %v4959, %v5273
        %v5275 = vand.u32 %v5274, 4294901760
        %5276 = vmatpush.msra.mxu0 %v5275
        %v5277 = vand.u32 %v4958, 4294901760
        %v5278 = vsub.f32 %v4958, %v5277
        %v5279 = vand.u32 %v5278, 4294901760
        %5280 = vmatpush.msra.mxu0 %v5279
        %v5281 = vand.u32 %v4957, 4294901760
        %v5282 = vsub.f32 %v4957, %v5281
        %v5283 = vand.u32 %v5282, 4294901760
        %5284 = vmatpush.msra.mxu0 %v5283
        %v5285 = vand.u32 %v4956, 4294901760
        %v5286 = vsub.f32 %v4956, %v5285
        %v5287 = vand.u32 %v5286, 4294901760
        %5288 = vmatpush.msra.mxu0 %v5287
        %v5289 = vand.u32 %v4955, 4294901760
        %v5290 = vsub.f32 %v4955, %v5289
        %v5291 = vand.u32 %v5290, 4294901760
        %5292 = vmatpush.msra.mxu0 %v5291
        %v5293 = vand.u32 %v4952, 4294901760
        %5294 = vmatmul.f32.gmra.mxu0 %v5293
        %v5295 = vpop.f32.mrf.mxu0
        %v5296 = vadd.f32 %v5221, %v5295
        %v5297 = vand.u32 %v4953, 4294901760
        %5298 = vmatmul.f32.gmra.mxu0 %v5297
        %v5299 = vpop.f32.mrf.mxu0
        %v5300 = vadd.f32 %v5227, %v5299
        %5301 = vdwg.mxu0
        %v5302 = vand.u32 %v4970, 4294901760
        %5303 = vmatpush.msra.mxu0 %v5302
        %v5304 = vand.u32 %v4969, 4294901760
        %5305 = vmatpush.msra.mxu0 %v5304
        %v5306 = vand.u32 %v4968, 4294901760
        %5307 = vmatpush.msra.mxu0 %v5306
        %v5308 = vand.u32 %v4967, 4294901760
        %5309 = vmatpush.msra.mxu0 %v5308
        %v5310 = vand.u32 %v4966, 4294901760
        %5311 = vmatpush.msra.mxu0 %v5310
        %v5312 = vand.u32 %v4965, 4294901760
        %5313 = vmatpush.msra.mxu0 %v5312
        %v5314 = vand.u32 %v4964, 4294901760
        %5315 = vmatpush.msra.mxu0 %v5314
        %v5316 = vand.u32 %v4963, 4294901760
        %5317 = vmatpush.msra.mxu0 %v5316
        %v5318 = vand.u32 %v4962, 4294901760
        %5319 = vmatpush.msra.mxu0 %v5318
        %v5320 = vand.u32 %v4961, 4294901760
        %5321 = vmatpush.msra.mxu0 %v5320
        %v5322 = vand.u32 %v4960, 4294901760
        %5323 = vmatpush.msra.mxu0 %v5322
        %v5324 = vand.u32 %v4959, 4294901760
        %5325 = vmatpush.msra.mxu0 %v5324
        %v5326 = vand.u32 %v4958, 4294901760
        %5327 = vmatpush.msra.mxu0 %v5326
        %v5328 = vand.u32 %v4957, 4294901760
        %5329 = vmatpush.msra.mxu0 %v5328
        %v5330 = vand.u32 %v4956, 4294901760
        %5331 = vmatpush.msra.mxu0 %v5330
        %v5332 = vand.u32 %v4955, 4294901760
        %5333 = vmatpush.msra.mxu0 %v5332
        %v5334 = vand.u32 %v4952, 4294901760
        %5335 = vmatmul.f32.gmra.mxu0 %v5334
        %v5336 = vpop.f32.mrf.mxu0
        %v5337 = vadd.f32 %v5296, %v5336
        %v5338 = vand.u32 %v4953, 4294901760
        %5339 = vmatmul.f32.gmra.mxu0 %v5338
        %v5340 = vpop.f32.mrf.mxu0
        %v5341 = vadd.f32 %v5300, %v5340
        %5342 = vdwg.mxu0
        %v5343 = vadd.f32 %v4557, %v5337
        %v5344 = vadd.f32 %v4558, %v5341
        %v5345 = vld [vmem:[%s242 + $0x6] sm:$0xff]
        %v5346 = vld [vmem:[%s242 + $0xe] sm:$0xff]
        %s5347 = scalar_lea.vmem %s1, 1664
        %v5348 = vld [vmem:[%s5347] sm:$0xff]
        %v5349 = vld [vmem:[%s5347 + $0x8] sm:$0xff]
        %v5350 = vld [vmem:[%s5347 + $0x10] sm:$0xff]
        %v5351 = vld [vmem:[%s5347 + $0x18] sm:$0xff]
        %v5352 = vld [vmem:[%s5347 + $0x20] sm:$0xff]
        %v5353 = vld [vmem:[%s5347 + $0x28] sm:$0xff]
        %v5354 = vld [vmem:[%s5347 + $0x30] sm:$0xff]
        %v5355 = vld [vmem:[%s5347 + $0x38] sm:$0xff]
        %v5356 = vld [vmem:[%s5347 + $0x40] sm:$0xff]
        %v5357 = vld [vmem:[%s5347 + $0x48] sm:$0xff]
        %v5358 = vld [vmem:[%s5347 + $0x50] sm:$0xff]
        %v5359 = vld [vmem:[%s5347 + $0x58] sm:$0xff]
        %v5360 = vld [vmem:[%s5347 + $0x60] sm:$0xff]
        %v5361 = vld [vmem:[%s5347 + $0x68] sm:$0xff]
        %v5362 = vld [vmem:[%s5347 + $0x70] sm:$0xff]
        %v5363 = vld [vmem:[%s5347 + $0x78] sm:$0xff]
        %v5364 = vand.u32 %v5363, 4294901760
        %5365 = vmatpush.msra.mxu0 %v5364
        %v5366 = vand.u32 %v5362, 4294901760
        %5367 = vmatpush.msra.mxu0 %v5366
        %v5368 = vand.u32 %v5361, 4294901760
        %5369 = vmatpush.msra.mxu0 %v5368
        %v5370 = vand.u32 %v5360, 4294901760
        %5371 = vmatpush.msra.mxu0 %v5370
        %v5372 = vand.u32 %v5359, 4294901760
        %5373 = vmatpush.msra.mxu0 %v5372
        %v5374 = vand.u32 %v5358, 4294901760
        %5375 = vmatpush.msra.mxu0 %v5374
        %v5376 = vand.u32 %v5357, 4294901760
        %5377 = vmatpush.msra.mxu0 %v5376
        %v5378 = vand.u32 %v5356, 4294901760
        %5379 = vmatpush.msra.mxu0 %v5378
        %v5380 = vand.u32 %v5355, 4294901760
        %5381 = vmatpush.msra.mxu0 %v5380
        %v5382 = vand.u32 %v5354, 4294901760
        %5383 = vmatpush.msra.mxu0 %v5382
        %v5384 = vand.u32 %v5353, 4294901760
        %5385 = vmatpush.msra.mxu0 %v5384
        %v5386 = vand.u32 %v5352, 4294901760
        %5387 = vmatpush.msra.mxu0 %v5386
        %v5388 = vand.u32 %v5351, 4294901760
        %5389 = vmatpush.msra.mxu0 %v5388
        %v5390 = vand.u32 %v5350, 4294901760
        %5391 = vmatpush.msra.mxu0 %v5390
        %v5392 = vand.u32 %v5349, 4294901760
        %5393 = vmatpush.msra.mxu0 %v5392
        %v5394 = vand.u32 %v5348, 4294901760
        %5395 = vmatpush.msra.mxu0 %v5394
        %v5396 = vand.u32 %v5345, 4294901760
        %v5397 = vsub.f32 %v5345, %v5396
        %v5398 = vand.u32 %v5397, 4294901760
        %v5399 = vsub.f32 %v5397, %v5398
        %v5400 = vand.u32 %v5399, 4294901760
        %5401 = vmatmul.f32.gmra.mxu0 %v5400
        %v5402 = vpop.f32.mrf.mxu0
        %v5403 = vadd.f32 0.0, %v5402
        %v5404 = vand.u32 %v5346, 4294901760
        %v5405 = vsub.f32 %v5346, %v5404
        %v5406 = vand.u32 %v5405, 4294901760
        %v5407 = vsub.f32 %v5405, %v5406
        %v5408 = vand.u32 %v5407, 4294901760
        %5409 = vmatmul.f32.gmra.mxu0 %v5408
        %v5410 = vpop.f32.mrf.mxu0
        %v5411 = vadd.f32 0.0, %v5410
        %5412 = vdwg.mxu0
        %v5413 = vand.u32 %v5363, 4294901760
        %v5414 = vsub.f32 %v5363, %v5413
        %v5415 = vand.u32 %v5414, 4294901760
        %v5416 = vsub.f32 %v5414, %v5415
        %v5417 = vand.u32 %v5416, 4294901760
        %5418 = vmatpush.msra.mxu0 %v5417
        %v5419 = vand.u32 %v5362, 4294901760
        %v5420 = vsub.f32 %v5362, %v5419
        %v5421 = vand.u32 %v5420, 4294901760
        %v5422 = vsub.f32 %v5420, %v5421
        %v5423 = vand.u32 %v5422, 4294901760
        %5424 = vmatpush.msra.mxu0 %v5423
        %v5425 = vand.u32 %v5361, 4294901760
        %v5426 = vsub.f32 %v5361, %v5425
        %v5427 = vand.u32 %v5426, 4294901760
        %v5428 = vsub.f32 %v5426, %v5427
        %v5429 = vand.u32 %v5428, 4294901760
        %5430 = vmatpush.msra.mxu0 %v5429
        %v5431 = vand.u32 %v5360, 4294901760
        %v5432 = vsub.f32 %v5360, %v5431
        %v5433 = vand.u32 %v5432, 4294901760
        %v5434 = vsub.f32 %v5432, %v5433
        %v5435 = vand.u32 %v5434, 4294901760
        %5436 = vmatpush.msra.mxu0 %v5435
        %v5437 = vand.u32 %v5359, 4294901760
        %v5438 = vsub.f32 %v5359, %v5437
        %v5439 = vand.u32 %v5438, 4294901760
        %v5440 = vsub.f32 %v5438, %v5439
        %v5441 = vand.u32 %v5440, 4294901760
        %5442 = vmatpush.msra.mxu0 %v5441
        %v5443 = vand.u32 %v5358, 4294901760
        %v5444 = vsub.f32 %v5358, %v5443
        %v5445 = vand.u32 %v5444, 4294901760
        %v5446 = vsub.f32 %v5444, %v5445
        %v5447 = vand.u32 %v5446, 4294901760
        %5448 = vmatpush.msra.mxu0 %v5447
        %v5449 = vand.u32 %v5357, 4294901760
        %v5450 = vsub.f32 %v5357, %v5449
        %v5451 = vand.u32 %v5450, 4294901760
        %v5452 = vsub.f32 %v5450, %v5451
        %v5453 = vand.u32 %v5452, 4294901760
        %5454 = vmatpush.msra.mxu0 %v5453
        %v5455 = vand.u32 %v5356, 4294901760
        %v5456 = vsub.f32 %v5356, %v5455
        %v5457 = vand.u32 %v5456, 4294901760
        %v5458 = vsub.f32 %v5456, %v5457
        %v5459 = vand.u32 %v5458, 4294901760
        %5460 = vmatpush.msra.mxu0 %v5459
        %v5461 = vand.u32 %v5355, 4294901760
        %v5462 = vsub.f32 %v5355, %v5461
        %v5463 = vand.u32 %v5462, 4294901760
        %v5464 = vsub.f32 %v5462, %v5463
        %v5465 = vand.u32 %v5464, 4294901760
        %5466 = vmatpush.msra.mxu0 %v5465
        %v5467 = vand.u32 %v5354, 4294901760
        %v5468 = vsub.f32 %v5354, %v5467
        %v5469 = vand.u32 %v5468, 4294901760
        %v5470 = vsub.f32 %v5468, %v5469
        %v5471 = vand.u32 %v5470, 4294901760
        %5472 = vmatpush.msra.mxu0 %v5471
        %v5473 = vand.u32 %v5353, 4294901760
        %v5474 = vsub.f32 %v5353, %v5473
        %v5475 = vand.u32 %v5474, 4294901760
        %v5476 = vsub.f32 %v5474, %v5475
        %v5477 = vand.u32 %v5476, 4294901760
        %5478 = vmatpush.msra.mxu0 %v5477
        %v5479 = vand.u32 %v5352, 4294901760
        %v5480 = vsub.f32 %v5352, %v5479
        %v5481 = vand.u32 %v5480, 4294901760
        %v5482 = vsub.f32 %v5480, %v5481
        %v5483 = vand.u32 %v5482, 4294901760
        %5484 = vmatpush.msra.mxu0 %v5483
        %v5485 = vand.u32 %v5351, 4294901760
        %v5486 = vsub.f32 %v5351, %v5485
        %v5487 = vand.u32 %v5486, 4294901760
        %v5488 = vsub.f32 %v5486, %v5487
        %v5489 = vand.u32 %v5488, 4294901760
        %5490 = vmatpush.msra.mxu0 %v5489
        %v5491 = vand.u32 %v5350, 4294901760
        %v5492 = vsub.f32 %v5350, %v5491
        %v5493 = vand.u32 %v5492, 4294901760
        %v5494 = vsub.f32 %v5492, %v5493
        %v5495 = vand.u32 %v5494, 4294901760
        %5496 = vmatpush.msra.mxu0 %v5495
        %v5497 = vand.u32 %v5349, 4294901760
        %v5498 = vsub.f32 %v5349, %v5497
        %v5499 = vand.u32 %v5498, 4294901760
        %v5500 = vsub.f32 %v5498, %v5499
        %v5501 = vand.u32 %v5500, 4294901760
        %5502 = vmatpush.msra.mxu0 %v5501
        %v5503 = vand.u32 %v5348, 4294901760
        %v5504 = vsub.f32 %v5348, %v5503
        %v5505 = vand.u32 %v5504, 4294901760
        %v5506 = vsub.f32 %v5504, %v5505
        %v5507 = vand.u32 %v5506, 4294901760
        %5508 = vmatpush.msra.mxu0 %v5507
        %v5509 = vand.u32 %v5345, 4294901760
        %5510 = vmatmul.f32.gmra.mxu0 %v5509
        %v5511 = vpop.f32.mrf.mxu0
        %v5512 = vadd.f32 %v5403, %v5511
        %v5513 = vand.u32 %v5346, 4294901760
        %5514 = vmatmul.f32.gmra.mxu0 %v5513
        %v5515 = vpop.f32.mrf.mxu0
        %v5516 = vadd.f32 %v5411, %v5515
        %5517 = vdwg.mxu0
        %v5518 = vand.u32 %v5363, 4294901760
        %v5519 = vsub.f32 %v5363, %v5518
        %5520 = vmatpush.msra.mxu0 %v5519
        %v5521 = vand.u32 %v5362, 4294901760
        %v5522 = vsub.f32 %v5362, %v5521
        %5523 = vmatpush.msra.mxu0 %v5522
        %v5524 = vand.u32 %v5361, 4294901760
        %v5525 = vsub.f32 %v5361, %v5524
        %5526 = vmatpush.msra.mxu0 %v5525
        %v5527 = vand.u32 %v5360, 4294901760
        %v5528 = vsub.f32 %v5360, %v5527
        %5529 = vmatpush.msra.mxu0 %v5528
        %v5530 = vand.u32 %v5359, 4294901760
        %v5531 = vsub.f32 %v5359, %v5530
        %5532 = vmatpush.msra.mxu0 %v5531
        %v5533 = vand.u32 %v5358, 4294901760
        %v5534 = vsub.f32 %v5358, %v5533
        %5535 = vmatpush.msra.mxu0 %v5534
        %v5536 = vand.u32 %v5357, 4294901760
        %v5537 = vsub.f32 %v5357, %v5536
        %5538 = vmatpush.msra.mxu0 %v5537
        %v5539 = vand.u32 %v5356, 4294901760
        %v5540 = vsub.f32 %v5356, %v5539
        %5541 = vmatpush.msra.mxu0 %v5540
        %v5542 = vand.u32 %v5355, 4294901760
        %v5543 = vsub.f32 %v5355, %v5542
        %5544 = vmatpush.msra.mxu0 %v5543
        %v5545 = vand.u32 %v5354, 4294901760
        %v5546 = vsub.f32 %v5354, %v5545
        %5547 = vmatpush.msra.mxu0 %v5546
        %v5548 = vand.u32 %v5353, 4294901760
        %v5549 = vsub.f32 %v5353, %v5548
        %5550 = vmatpush.msra.mxu0 %v5549
        %v5551 = vand.u32 %v5352, 4294901760
        %v5552 = vsub.f32 %v5352, %v5551
        %5553 = vmatpush.msra.mxu0 %v5552
        %v5554 = vand.u32 %v5351, 4294901760
        %v5555 = vsub.f32 %v5351, %v5554
        %5556 = vmatpush.msra.mxu0 %v5555
        %v5557 = vand.u32 %v5350, 4294901760
        %v5558 = vsub.f32 %v5350, %v5557
        %5559 = vmatpush.msra.mxu0 %v5558
        %v5560 = vand.u32 %v5349, 4294901760
        %v5561 = vsub.f32 %v5349, %v5560
        %5562 = vmatpush.msra.mxu0 %v5561
        %v5563 = vand.u32 %v5348, 4294901760
        %v5564 = vsub.f32 %v5348, %v5563
        %5565 = vmatpush.msra.mxu0 %v5564
        %v5566 = vand.u32 %v5345, 4294901760
        %v5567 = vsub.f32 %v5345, %v5566
        %5568 = vmatmul.f32.gmra.mxu0 %v5567
        %v5569 = vpop.f32.mrf.mxu0
        %v5570 = vadd.f32 %v5512, %v5569
        %v5571 = vand.u32 %v5346, 4294901760
        %v5572 = vsub.f32 %v5346, %v5571
        %5573 = vmatmul.f32.gmra.mxu0 %v5572
        %v5574 = vpop.f32.mrf.mxu0
        %v5575 = vadd.f32 %v5516, %v5574
        %5576 = vdwg.mxu0
        %v5577 = vand.u32 %v5363, 4294901760
        %5578 = vmatpush.msra.mxu0 %v5577
        %v5579 = vand.u32 %v5362, 4294901760
        %5580 = vmatpush.msra.mxu0 %v5579
        %v5581 = vand.u32 %v5361, 4294901760
        %5582 = vmatpush.msra.mxu0 %v5581
        %v5583 = vand.u32 %v5360, 4294901760
        %5584 = vmatpush.msra.mxu0 %v5583
        %v5585 = vand.u32 %v5359, 4294901760
        %5586 = vmatpush.msra.mxu0 %v5585
        %v5587 = vand.u32 %v5358, 4294901760
        %5588 = vmatpush.msra.mxu0 %v5587
        %v5589 = vand.u32 %v5357, 4294901760
        %5590 = vmatpush.msra.mxu0 %v5589
        %v5591 = vand.u32 %v5356, 4294901760
        %5592 = vmatpush.msra.mxu0 %v5591
        %v5593 = vand.u32 %v5355, 4294901760
        %5594 = vmatpush.msra.mxu0 %v5593
        %v5595 = vand.u32 %v5354, 4294901760
        %5596 = vmatpush.msra.mxu0 %v5595
        %v5597 = vand.u32 %v5353, 4294901760
        %5598 = vmatpush.msra.mxu0 %v5597
        %v5599 = vand.u32 %v5352, 4294901760
        %5600 = vmatpush.msra.mxu0 %v5599
        %v5601 = vand.u32 %v5351, 4294901760
        %5602 = vmatpush.msra.mxu0 %v5601
        %v5603 = vand.u32 %v5350, 4294901760
        %5604 = vmatpush.msra.mxu0 %v5603
        %v5605 = vand.u32 %v5349, 4294901760
        %5606 = vmatpush.msra.mxu0 %v5605
        %v5607 = vand.u32 %v5348, 4294901760
        %5608 = vmatpush.msra.mxu0 %v5607
        %v5609 = vand.u32 %v5345, 4294901760
        %v5610 = vsub.f32 %v5345, %v5609
        %v5611 = vand.u32 %v5610, 4294901760
        %5612 = vmatmul.f32.gmra.mxu0 %v5611
        %v5613 = vpop.f32.mrf.mxu0
        %v5614 = vadd.f32 %v5570, %v5613
        %v5615 = vand.u32 %v5346, 4294901760
        %v5616 = vsub.f32 %v5346, %v5615
        %v5617 = vand.u32 %v5616, 4294901760
        %5618 = vmatmul.f32.gmra.mxu0 %v5617
        %v5619 = vpop.f32.mrf.mxu0
        %v5620 = vadd.f32 %v5575, %v5619
        %5621 = vdwg.mxu0
        %v5622 = vand.u32 %v5363, 4294901760
        %v5623 = vsub.f32 %v5363, %v5622
        %v5624 = vand.u32 %v5623, 4294901760
        %5625 = vmatpush.msra.mxu0 %v5624
        %v5626 = vand.u32 %v5362, 4294901760
        %v5627 = vsub.f32 %v5362, %v5626
        %v5628 = vand.u32 %v5627, 4294901760
        %5629 = vmatpush.msra.mxu0 %v5628
        %v5630 = vand.u32 %v5361, 4294901760
        %v5631 = vsub.f32 %v5361, %v5630
        %v5632 = vand.u32 %v5631, 4294901760
        %5633 = vmatpush.msra.mxu0 %v5632
        %v5634 = vand.u32 %v5360, 4294901760
        %v5635 = vsub.f32 %v5360, %v5634
        %v5636 = vand.u32 %v5635, 4294901760
        %5637 = vmatpush.msra.mxu0 %v5636
        %v5638 = vand.u32 %v5359, 4294901760
        %v5639 = vsub.f32 %v5359, %v5638
        %v5640 = vand.u32 %v5639, 4294901760
        %5641 = vmatpush.msra.mxu0 %v5640
        %v5642 = vand.u32 %v5358, 4294901760
        %v5643 = vsub.f32 %v5358, %v5642
        %v5644 = vand.u32 %v5643, 4294901760
        %5645 = vmatpush.msra.mxu0 %v5644
        %v5646 = vand.u32 %v5357, 4294901760
        %v5647 = vsub.f32 %v5357, %v5646
        %v5648 = vand.u32 %v5647, 4294901760
        %5649 = vmatpush.msra.mxu0 %v5648
        %v5650 = vand.u32 %v5356, 4294901760
        %v5651 = vsub.f32 %v5356, %v5650
        %v5652 = vand.u32 %v5651, 4294901760
        %5653 = vmatpush.msra.mxu0 %v5652
        %v5654 = vand.u32 %v5355, 4294901760
        %v5655 = vsub.f32 %v5355, %v5654
        %v5656 = vand.u32 %v5655, 4294901760
        %5657 = vmatpush.msra.mxu0 %v5656
        %v5658 = vand.u32 %v5354, 4294901760
        %v5659 = vsub.f32 %v5354, %v5658
        %v5660 = vand.u32 %v5659, 4294901760
        %5661 = vmatpush.msra.mxu0 %v5660
        %v5662 = vand.u32 %v5353, 4294901760
        %v5663 = vsub.f32 %v5353, %v5662
        %v5664 = vand.u32 %v5663, 4294901760
        %5665 = vmatpush.msra.mxu0 %v5664
        %v5666 = vand.u32 %v5352, 4294901760
        %v5667 = vsub.f32 %v5352, %v5666
        %v5668 = vand.u32 %v5667, 4294901760
        %5669 = vmatpush.msra.mxu0 %v5668
        %v5670 = vand.u32 %v5351, 4294901760
        %v5671 = vsub.f32 %v5351, %v5670
        %v5672 = vand.u32 %v5671, 4294901760
        %5673 = vmatpush.msra.mxu0 %v5672
        %v5674 = vand.u32 %v5350, 4294901760
        %v5675 = vsub.f32 %v5350, %v5674
        %v5676 = vand.u32 %v5675, 4294901760
        %5677 = vmatpush.msra.mxu0 %v5676
        %v5678 = vand.u32 %v5349, 4294901760
        %v5679 = vsub.f32 %v5349, %v5678
        %v5680 = vand.u32 %v5679, 4294901760
        %5681 = vmatpush.msra.mxu0 %v5680
        %v5682 = vand.u32 %v5348, 4294901760
        %v5683 = vsub.f32 %v5348, %v5682
        %v5684 = vand.u32 %v5683, 4294901760
        %5685 = vmatpush.msra.mxu0 %v5684
        %v5686 = vand.u32 %v5345, 4294901760
        %5687 = vmatmul.f32.gmra.mxu0 %v5686
        %v5688 = vpop.f32.mrf.mxu0
        %v5689 = vadd.f32 %v5614, %v5688
        %v5690 = vand.u32 %v5346, 4294901760
        %5691 = vmatmul.f32.gmra.mxu0 %v5690
        %v5692 = vpop.f32.mrf.mxu0
        %v5693 = vadd.f32 %v5620, %v5692
        %5694 = vdwg.mxu0
        %v5695 = vand.u32 %v5363, 4294901760
        %5696 = vmatpush.msra.mxu0 %v5695
        %v5697 = vand.u32 %v5362, 4294901760
        %5698 = vmatpush.msra.mxu0 %v5697
        %v5699 = vand.u32 %v5361, 4294901760
        %5700 = vmatpush.msra.mxu0 %v5699
        %v5701 = vand.u32 %v5360, 4294901760
        %5702 = vmatpush.msra.mxu0 %v5701
        %v5703 = vand.u32 %v5359, 4294901760
        %5704 = vmatpush.msra.mxu0 %v5703
        %v5705 = vand.u32 %v5358, 4294901760
        %5706 = vmatpush.msra.mxu0 %v5705
        %v5707 = vand.u32 %v5357, 4294901760
        %5708 = vmatpush.msra.mxu0 %v5707
        %v5709 = vand.u32 %v5356, 4294901760
        %5710 = vmatpush.msra.mxu0 %v5709
        %v5711 = vand.u32 %v5355, 4294901760
        %5712 = vmatpush.msra.mxu0 %v5711
        %v5713 = vand.u32 %v5354, 4294901760
        %5714 = vmatpush.msra.mxu0 %v5713
        %v5715 = vand.u32 %v5353, 4294901760
        %5716 = vmatpush.msra.mxu0 %v5715
        %v5717 = vand.u32 %v5352, 4294901760
        %5718 = vmatpush.msra.mxu0 %v5717
        %v5719 = vand.u32 %v5351, 4294901760
        %5720 = vmatpush.msra.mxu0 %v5719
        %v5721 = vand.u32 %v5350, 4294901760
        %5722 = vmatpush.msra.mxu0 %v5721
        %v5723 = vand.u32 %v5349, 4294901760
        %5724 = vmatpush.msra.mxu0 %v5723
        %v5725 = vand.u32 %v5348, 4294901760
        %5726 = vmatpush.msra.mxu0 %v5725
        %v5727 = vand.u32 %v5345, 4294901760
        %5728 = vmatmul.f32.gmra.mxu0 %v5727
        %v5729 = vpop.f32.mrf.mxu0
        %v5730 = vadd.f32 %v5689, %v5729
        %v5731 = vand.u32 %v5346, 4294901760
        %5732 = vmatmul.f32.gmra.mxu0 %v5731
        %v5733 = vpop.f32.mrf.mxu0
        %v5734 = vadd.f32 %v5693, %v5733
        %5735 = vdwg.mxu0
        %v5736 = vadd.f32 %v4950, %v5730
        %v5737 = vadd.f32 %v4951, %v5734
        %v5738 = vadd.f32 %v5343, %v5736
        %v5739 = vadd.f32 %v5344, %v5737
        %v5740 = vxor.u32 %v5738, 2147483648
        %v5741 = vxor.u32 %v5739, 2147483648
        %v5742 = vmul.f32 %v5740, 1.442695
        %v5743 = vpow.pop %v5742
        %v5744 = vmul.f32 %v5741, 1.442695
        %v5745 = vpow.pop %v5744
        %v5746 = vadd.f32 %v5743, 1.0
        %v5747 = vadd.f32 %v5745, 1.0
        %v5748 = vrcp.pop %v5746
        %v5749 = vmul.f32 %v5746, %v5748
        %v5750 = vsub.f32 1.0, %v5749
        %v5751 = vmul.f32 %v5748, %v5750
        %v5752 = vadd.f32 %v5748, %v5751
        %vm5753 = vweird.f32 %v5746
        %vm5754 = vweird.f32 %v5748
        %vm5755 = vmor %vm5753, %vm5754
        %v5756 = vsel %vm5755, %v5748, %v5752
        %v5757 = vand.u32 2147483647, %v5746
        %vm5758 = vcmp.eq.f32.partialorder %v5757, 8.507059e+37
        %v5759 = vand.u32 %v5746, 2147483648
        %v5760 = vor.u32 1.1754944e-38, %v5759
        %v5761 = vsel %vm5758, %v5760, %v5756
        %v5762 = vmul.f32 1.0, %v5761
        %v5763 = vrcp.pop %v5747
        %v5764 = vmul.f32 %v5747, %v5763
        %v5765 = vsub.f32 1.0, %v5764
        %v5766 = vmul.f32 %v5763, %v5765
        %v5767 = vadd.f32 %v5763, %v5766
        %vm5768 = vweird.f32 %v5747
        %vm5769 = vweird.f32 %v5763
        %vm5770 = vmor %vm5768, %vm5769
        %v5771 = vsel %vm5770, %v5763, %v5767
        %v5772 = vand.u32 2147483647, %v5747
        %vm5773 = vcmp.eq.f32.partialorder %v5772, 8.507059e+37
        %v5774 = vand.u32 %v5747, 2147483648
        %v5775 = vor.u32 1.1754944e-38, %v5774
        %v5776 = vsel %vm5773, %v5775, %v5771
        %v5777 = vmul.f32 1.0, %v5776
        %5778 = vst [vmem:[%s174] sm:$0xff] %v5762
        %5779 = vst [vmem:[%s174 + $0x8] sm:$0xff] %v5777
      $region40: #{spatial_attention.1} parent=27 // pred_fallthru
        _
      %p5780 = scmp.lt.s32.totalorder %s17, 1
      %s5781 = scalar_select %p5780, %s17, 1
      %s5782 = smul.addr %s5781, 2
      %s5783 = smul.addr %s5782, 8
      %s5784 = scalar_lea.vmem %s2, %s5783
      // Predicated region
      $region41: #{spatial_attention.1} parent=27 // pred_check
        %p5785 = pneg %p92
      $region42: #{spatial_attention.1} parent=27 // pred_check_branch
        %5787 = sbr.rel (%p5785) target = $region44
      $region43: #{spatial_attention.1} parent=27 // pred_region
        _
      $region44: #{spatial_attention.1} parent=27 // pred_fallthru
        _
    $region28: #{spatial_attention.1} parent=5 // pred_fallthru
      _
    %p5788 = scmp.le.s32.totalorder 2, %s8
    // Predicated region
    $region45: #{spatial_attention.1} parent=5 // pred_check
      %p5789 = pneg %p5788
    $region46: #{spatial_attention.1} parent=5 // pred_check_branch
      %5791 = sbr.rel (%p5789) target = $region48
    $region47: #{spatial_attention.1} parent=5 // pred_region
      %s5792 = ssub.s32 %s8, 2
      // Predicated region
      $region49: #{spatial_attention.1} parent=47 // pred_check
        %p5793 = pneg %p98
      $region50: #{spatial_attention.1} parent=47 // pred_check_branch
        %5795 = sbr.rel (%p5793) target = $region52
      $region51: #{spatial_attention.1} parent=47 // pred_region
        %p5796 = scmp.lt.s32.totalorder %s19, 1
        %s5797 = scalar_select %p5796, %s19, 1
        %s5798 = smul.addr %s5797, 2
        %s5799 = smul.addr %s5798, 8
        %s5800 = scalar_lea.vmem %s2, %s5799
      $region52: #{spatial_attention.1} parent=47 // pred_fallthru
        _
    $region48: #{spatial_attention.1} parent=5 // pred_fallthru
      _
  $region6: #{spatial_attention.1} parent=0 // loop_footer
    %s12 = sadd.s32 1, %s8
  $region7: #{spatial_attention.1} parent=0 // loop_footer_branch
    %7 = sbr.rel target = $region3
  $region8: #{spatial_attention.1} parent=0 // loop_exit
    _

</llo_original>
